<compile_context>
chip_gen: v6e
topology: v6e:2x2x1
jax: 0.10.0
libtpu: 0.0.40
codegen_flags: <defaults>
</compile_context>

<pallas_src>
import jax
import jax.numpy as jnp
from jax.experimental import pallas as pl
from jax.experimental.pallas import tpu as pltpu

# ---- logical (PyTorch) dims ----
D_IN, H1, H2, H3, LAT, D_OUT = 784, 500, 500, 200, 10, 784
# ---- lane-padded dims (multiples of 128) ----
D_IN_P, H1_P, H2_P, H3_P, LAT_P, D_OUT_P = 896, 512, 512, 256, 128, 896
ML_P = 2 * LAT_P  # fused mu|logvar width: mu in cols [0:128), logvar in [128:256)

# packed-bias layout: name -> (lane offset, padded length); all offsets 128-aligned
_BIAS_SEGS = {
    "eb1": (0, H1_P),
    "eb2": (512, H2_P),
    "eb3": (1024, H3_P),
    "b_ml": (1280, ML_P),
    "db1": (1536, H3_P),
    "db2": (1792, H2_P),
    "db3": (2304, H1_P),
    "db4": (2816, D_OUT_P),
}
BIAS_TOTAL = 2816 + D_OUT_P  # 3712 lanes = 29 * 128

_TILE_B_MAX = 256  # cap keeps K/M MXU-friendly on all generations

# padded MAC count per batch row (also = bf16 weight element count)
_MACS_PER_ROW = (D_IN_P * H1_P + H1_P * H2_P + H2_P * H3_P + H3_P * ML_P
                 + LAT_P * H3_P + H3_P * H2_P + H2_P * H1_P + H1_P * D_OUT_P)
_WEIGHT_BYTES = 2 * _MACS_PER_ROW  # bf16


def _round_up(n, m):
    return ((n + m - 1) // m) * m


def _pad2(a, rows, cols):
    out = jnp.zeros((rows, cols), a.dtype)
    return out.at[: a.shape[0], : a.shape[1]].set(a)


# -----------------------------------------------------------------------------
# Kernel
# -----------------------------------------------------------------------------
def _vae_kernel(
    x_ref, eps_ref, bias_ref,
    # bf16 weights, stored [in_pad, out_pad]
    ew1, ew2, ew3, w_ml, dw1, dw2, dw3, dw4,
    # outputs
    recon_ref, ml_ref,
):
    f32, bf16 = jnp.float32, jnp.bfloat16

    def linear(h_bf16, w_ref, bias_name):
        off, n = _BIAS_SEGS[bias_name]
        b = bias_ref[:, off:off + n]                      # [1, n] f32, 128-aligned slice
        return jnp.dot(h_bf16, w_ref[...],
                       preferred_element_type=f32) + b    # f32 accumulation on the MXU

    def relu_bf16(v):
        # max/compare in f32 (v5e VPU has no bf16); single narrowing cast for the
        # next matmul + halved VMEM width for the [TB, 512] intermediates.
        return jnp.maximum(v, 0.0).astype(bf16)

    x = x_ref[...]                                        # [TB, 896] bf16 (zero-padded)

    # ---- encoder ----
    h = relu_bf16(linear(x, ew1, "eb1"))
    h = relu_bf16(linear(h, ew2, "eb2"))
    h = relu_bf16(linear(h, ew3, "eb3"))

    # ---- fused mu | logvar projection ----
    ml = linear(h, w_ml, "b_ml")                          # [TB, 256] f32
    mu = ml[:, :LAT_P]                                    # [TB, 128] (cols >=10 are 0)
    logvar = ml[:, LAT_P:]                                # [TB, 128] (cols >=10 are 0)

    # ---- reparametrize: z = eps * exp(0.5*logvar) + mu ----
    # padded cols: eps=0, mu=0, logvar=0 -> z=0, so decoder padding stays inert.
    z = eps_ref[...] * jnp.exp(0.5 * logvar) + mu         # [TB, 128] f32

    # ---- decoder ----
    d = relu_bf16(linear(z.astype(bf16), dw1, "db1"))
    d = relu_bf16(linear(d, dw2, "db2"))
    d = relu_bf16(linear(d, dw3, "db3"))
    recon = jax.nn.sigmoid(linear(d, dw4, "db4"))         # [TB, 896] f32

    recon_ref[...] = recon.astype(recon_ref.dtype)        # bf16 store (half writeback)
    ml_ref[...] = ml                                      # f32 (small; keeps mu/logvar precise)


# -----------------------------------------------------------------------------
# Parameter preparation (pad, fuse, pack, cast to bf16)
# -----------------------------------------------------------------------------
def prepare_params(params):
    """Pad feature dims to 128 multiples, fuse mu/logvar weights, pack biases,
    cast all weights to bf16. Returns (bias_pack, 8 weight arrays)."""
    (ew1, eb1, ew2, eb2, ew3, eb3,
     w_mu, b_mu, w_lv, b_lv,
     dw1, db1, dw2, db2, dw3, db3, dw4, db4) = params

    def wpad(w, rp, cp):
        return _pad2(w, rp, cp).astype(jnp.bfloat16)

    ew1p = wpad(ew1, D_IN_P, H1_P)
    ew2p = wpad(ew2, H1_P, H2_P)
    ew3p = wpad(ew3, H2_P, H3_P)

    w_ml = jnp.zeros((H3_P, ML_P), jnp.float32)
    w_ml = w_ml.at[:H3, :LAT].set(w_mu).at[:H3, LAT_P:LAT_P + LAT].set(w_lv)
    w_mlp = w_ml.astype(jnp.bfloat16)

    dw1p = wpad(dw1, LAT_P, H3_P)
    dw2p = wpad(dw2, H3_P, H2_P)
    dw3p = wpad(dw3, H2_P, H1_P)
    dw4p = wpad(dw4, H1_P, D_OUT_P)

    bias = jnp.zeros((1, BIAS_TOTAL), jnp.float32)

    def put(b, name, vec, extra_off=0):
        off, _ = _BIAS_SEGS[name]
        return b.at[:, off + extra_off: off + extra_off + vec.shape[1]].set(vec)

    bias = put(bias, "eb1", eb1)
    bias = put(bias, "eb2", eb2)
    bias = put(bias, "eb3", eb3)
    bias = put(bias, "b_ml", b_mu)                   # mu bias at local cols [0:10)
    bias = put(bias, "b_ml", b_lv, extra_off=LAT_P)  # logvar bias at [128:138)
    bias = put(bias, "db1", db1)
    bias = put(bias, "db2", db2)
    bias = put(bias, "db3", db3)
    bias = put(bias, "db4", db4)

    return (bias, ew1p, ew2p, ew3p, w_mlp, dw1p, dw2p, dw3p, dw4p)


# -----------------------------------------------------------------------------
# Forward wrapper
# -----------------------------------------------------------------------------
@jax.jit
def vae_forward(x_img, eps, prepped):
    """x_img: [B, 1, 28, 28] f32; eps: [B, 10] f32 reparam noise;
    prepped: output of prepare_params()."""
    bias, ew1, ew2, ew3, w_ml, dw1, dw2, dw3, dw4 = prepped

    B = x_img.shape[0]
    x = x_img.reshape(B, D_IN)

    # Regime-aware batch tiling:
    #   * B <= 128: single tile -> weights stream exactly once (this regime is
    #     weight-DMA bound; more grid steps would only re-stream them).
    #   * B  > 128: tile_b is a multiple of 128 chosen so the grid has >=2
    #     steps (feeds both v7x TensorCores), capped at 256 rows.
    if B <= 128:
        tile_b = _round_up(B, 8)
    else:
        tile_b = min(_TILE_B_MAX, _round_up(-(-B // 2), 128))
    b_pad = _round_up(B, tile_b)

    # bf16 activation streaming (halves x/recon HBM traffic); eps stays f32
    # (tiny, and keeps the reparametrization math in f32).
    x_pad = _pad2(x.astype(jnp.bfloat16), b_pad, D_IN_P)
    eps_pad = _pad2(eps.astype(jnp.float32), b_pad, LAT_P)

    grid = (b_pad // tile_b,)

    def batch_spec(cols):
        return pl.BlockSpec((tile_b, cols), lambda i: (i, 0))

    def resident_spec(arr):
        # grid-invariant block index -> DMA'd once, stays resident across tiles
        return pl.BlockSpec(arr.shape, lambda i: (0, 0))

    in_specs = [
        batch_spec(D_IN_P),        # x (bf16)
        batch_spec(LAT_P),         # eps (f32)
        resident_spec(bias),       # packed biases (single DMA)
        resident_spec(ew1), resident_spec(ew2), resident_spec(ew3),
        resident_spec(w_ml),
        resident_spec(dw1), resident_spec(dw2), resident_spec(dw3),
        resident_spec(dw4),
    ]
    out_shapes = (
        jax.ShapeDtypeStruct((b_pad, D_OUT_P), jnp.bfloat16),  # recon (padded, bf16)
        jax.ShapeDtypeStruct((b_pad, ML_P), jnp.float32),      # mu | logvar (padded)
    )
    out_specs = (batch_spec(D_OUT_P), batch_spec(ML_P))

    cost = pl.CostEstimate(
        flops=int(2 * b_pad * _MACS_PER_ROW),
        transcendentals=int(b_pad * (D_OUT_P + LAT_P)),   # sigmoid + exp
        bytes_accessed=int(
            _WEIGHT_BYTES + BIAS_TOTAL * 4
            + b_pad * D_IN_P * 2        # x in (bf16)
            + b_pad * LAT_P * 4         # eps in (f32)
            + b_pad * D_OUT_P * 2       # recon out (bf16)
            + b_pad * ML_P * 4          # ml out (f32)
        ),
    )

    recon_pad, ml_pad = pl.pallas_call(
        _vae_kernel,
        out_shape=out_shapes,
        grid_spec=pltpu.PrefetchScalarGridSpec(
            num_scalar_prefetch=0,
            grid=grid,
            in_specs=in_specs,
            out_specs=out_specs,
        ),
        compiler_params=pltpu.CompilerParams(
            dimension_semantics=("parallel",),
            vmem_limit_bytes=32 * 1024 * 1024,  # ~13 MiB actual footprint @ tile_b=256
        ),
        cost_estimate=cost,
    )(x_pad, eps_pad, bias, ew1, ew2, ew3, w_ml, dw1, dw2, dw3, dw4)

    recon = recon_pad[:B, :D_OUT].astype(jnp.float32)
    mu = ml_pad[:B, :LAT]
    logvar = ml_pad[:B, LAT_P:LAT_P + LAT]
    return recon, mu, logvar


# -----------------------------------------------------------------------------
# Synthetic params + pure-JAX reference
# -----------------------------------------------------------------------------
def init_params(key):
    """Deterministic synthetic init. Weights stored as [in, out]; biases [1, out]."""
    dims = [
        (784, 500), (500, 500), (500, 200),              # encoder
        (200, 10), (200, 10),                            # fc1 (mu), fc2 (logvar)
        (10, 200), (200, 500), (500, 500), (500, 784),   # decoder
    ]
    params = []
    for (din, dout) in dims:
        key, kw, kb = jax.random.split(key, 3)
        scale = 1.0 / jnp.sqrt(jnp.float32(din))
        w = jax.random.uniform(kw, (din, dout), jnp.float32, -scale, scale)
        b = jax.random.uniform(kb, (1, dout), jnp.float32, -scale, scale)
        params.extend([w, b])
    return tuple(params)


def vae_reference(x_img, eps, params):
    """Pure-JAX reference mirroring the kernel's bf16-weight / f32-accum numerics."""
    (ew1, eb1, ew2, eb2, ew3, eb3,
     w_mu, b_mu, w_lv, b_lv,
     dw1, db1, dw2, db2, dw3, db3, dw4, db4) = params
    bf16, f32 = jnp.bfloat16, jnp.float32

    def lin(h, w, b):
        return jnp.dot(h.astype(bf16), w.astype(bf16),
                       preferred_element_type=f32) + b

    x = x_img.reshape(x_img.shape[0], D_IN).astype(f32)
    h = jax.nn.relu(lin(x, ew1, eb1))
    h = jax.nn.relu(lin(h, ew2, eb2))
    h = jax.nn.relu(lin(h, ew3, eb3))
    mu = lin(h, w_mu, b_mu)
    logvar = lin(h, w_lv, b_lv)
    z = eps * jnp.exp(0.5 * logvar) + mu
    d = jax.nn.relu(lin(z, dw1, db1))
    d = jax.nn.relu(lin(d, dw2, db2))
    d = jax.nn.relu(lin(d, dw3, db3))
    recon = jax.nn.sigmoid(lin(d, dw4, db4))
    return recon, mu, logvar


if __name__ == "__main__":
    key = jax.random.PRNGKey(0)
    k_params, k_x, k_eps = jax.random.split(key, 3)

    B = 8
    # MNIST-shaped NCHW input, flattened to [B, 784] inside the wrapper.
    x_img = jax.random.normal(k_x, (B, 1, 28, 28), jnp.float32)
    # Reparametrization noise (PyTorch draws it with .normal_(); here it is a
    # deterministic input so the kernel is reproducible).
    eps = jax.random.normal(k_eps, (B, LAT), jnp.float32)

    params = init_params(k_params)
    prepped = prepare_params(params)

    recon, mu, logvar = vae_forward(x_img, eps, prepped)
    jax.block_until_ready((recon, mu, logvar))

    # sanity check against pure-JAX reference (bf16 weights/activations -> looser tol)
    r_ref, mu_ref, lv_ref = vae_reference(x_img, eps, params)
    assert recon.shape == (B, D_OUT) and mu.shape == (B, LAT) and logvar.shape == (B, LAT)
    assert jnp.allclose(recon, r_ref, atol=2e-2, rtol=2e-2)
    assert jnp.allclose(mu, mu_ref, atol=2e-2, rtol=2e-2)
    assert jnp.allclose(logvar, lv_ref, atol=2e-2, rtol=2e-2)

    print("KERNEL_OK")
</pallas_src>

<mosaic_0001>
module attributes {stable_mosaic.version = 11 : i64} {
  func.func @_vae_kernel(%arg0: i32, %arg1: memref<8x896xbf16, #tpu.memory_space<vmem>>, %arg2: memref<8x128xf32, #tpu.memory_space<vmem>>, %arg3: memref<1x3712xf32, #tpu.memory_space<vmem>>, %arg4: memref<896x512xbf16, #tpu.memory_space<vmem>>, %arg5: memref<512x512xbf16, #tpu.memory_space<vmem>>, %arg6: memref<512x256xbf16, #tpu.memory_space<vmem>>, %arg7: memref<256x256xbf16, #tpu.memory_space<vmem>>, %arg8: memref<128x256xbf16, #tpu.memory_space<vmem>>, %arg9: memref<256x512xbf16, #tpu.memory_space<vmem>>, %arg10: memref<512x512xbf16, #tpu.memory_space<vmem>>, %arg11: memref<512x896xbf16, #tpu.memory_space<vmem>>, %arg12: memref<8x896xbf16, #tpu.memory_space<vmem>>, %arg13: memref<8x256xf32, #tpu.memory_space<vmem>>) attributes {dimension_semantics = [#tpu.dimension_semantics<parallel>], iteration_bounds = array<i64: 1>, scalar_prefetch = 0 : i64, scratch_operands = 0 : i64, tpu.core_type = #tpu.core_type<tc>, window_params = [{transform_indices = @transform_0, window_bounds = array<i64: 8, 896>}, {transform_indices = @transform_1, window_bounds = array<i64: 8, 128>}, {pipeline_mode = #tpu.pipeline_mode<synchronous>, transform_indices = @transform_2, window_bounds = array<i64: 1, 3712>}, {pipeline_mode = #tpu.pipeline_mode<synchronous>, transform_indices = @transform_3, window_bounds = array<i64: 896, 512>}, {pipeline_mode = #tpu.pipeline_mode<synchronous>, transform_indices = @transform_4, window_bounds = array<i64: 512, 512>}, {pipeline_mode = #tpu.pipeline_mode<synchronous>, transform_indices = @transform_5, window_bounds = array<i64: 512, 256>}, {pipeline_mode = #tpu.pipeline_mode<synchronous>, transform_indices = @transform_6, window_bounds = array<i64: 256, 256>}, {pipeline_mode = #tpu.pipeline_mode<synchronous>, transform_indices = @transform_7, window_bounds = array<i64: 128, 256>}, {pipeline_mode = #tpu.pipeline_mode<synchronous>, transform_indices = @transform_8, window_bounds = array<i64: 256, 512>}, {pipeline_mode = #tpu.pipeline_mode<synchronous>, transform_indices = @transform_9, window_bounds = array<i64: 512, 512>}, {pipeline_mode = #tpu.pipeline_mode<synchronous>, transform_indices = @transform_10, window_bounds = array<i64: 512, 896>}, {transform_indices = @transform_11, window_bounds = array<i64: 8, 896>}, {transform_indices = @transform_12, window_bounds = array<i64: 8, 256>}]} {
    %c0 = arith.constant 0 : index
    %c0_0 = arith.constant 0 : index
    %0 = vector.load %arg1[%c0, %c0_0] : memref<8x896xbf16, #tpu.memory_space<vmem>>, vector<8x896xbf16>
    %c0_1 = arith.constant 0 : index
    %c0_2 = arith.constant 0 : index
    %1 = vector.load %arg3[%c0_1, %c0_2] : memref<1x3712xf32, #tpu.memory_space<vmem>>, vector<1x512xf32>
    %c0_3 = arith.constant 0 : index
    %c0_4 = arith.constant 0 : index
    %2 = vector.load %arg4[%c0_3, %c0_4] : memref<896x512xbf16, #tpu.memory_space<vmem>>, vector<896x512xbf16>
    %cst = arith.constant dense<0.000000e+00> : vector<8x512xf32>
    %3 = tpu.matmul %0, %2, %cst {dimension_numbers = #tpu.dot_dimension_numbers<[1], [0], [0], [1], [0, 0, 1, 1], [], []>} : vector<8x896xbf16>, vector<896x512xbf16>, vector<8x512xf32> -> vector<8x512xf32>
    %4 = vector.broadcast %1 : vector<1x512xf32> to vector<8x512xf32>
    %5 = arith.addf %3, %4 : vector<8x512xf32>
    %cst_5 = arith.constant 0.000000e+00 : f32
    %6 = vector.broadcast %cst_5 : f32 to vector<8x512xf32>
    %7 = arith.maximumf %5, %6 : vector<8x512xf32>
    %8 = arith.truncf %7 : vector<8x512xf32> to vector<8x512xbf16>
    %c0_6 = arith.constant 0 : index
    %c512 = arith.constant 512 : index
    %9 = vector.load %arg3[%c0_6, %c512] : memref<1x3712xf32, #tpu.memory_space<vmem>>, vector<1x512xf32>
    %c0_7 = arith.constant 0 : index
    %c0_8 = arith.constant 0 : index
    %10 = vector.load %arg5[%c0_7, %c0_8] : memref<512x512xbf16, #tpu.memory_space<vmem>>, vector<512x512xbf16>
    %cst_9 = arith.constant dense<0.000000e+00> : vector<8x512xf32>
    %11 = tpu.matmul %8, %10, %cst_9 {dimension_numbers = #tpu.dot_dimension_numbers<[1], [0], [0], [1], [0, 0, 1, 1], [], []>} : vector<8x512xbf16>, vector<512x512xbf16>, vector<8x512xf32> -> vector<8x512xf32>
    %12 = vector.broadcast %9 : vector<1x512xf32> to vector<8x512xf32>
    %13 = arith.addf %11, %12 : vector<8x512xf32>
    %cst_10 = arith.constant 0.000000e+00 : f32
    %14 = vector.broadcast %cst_10 : f32 to vector<8x512xf32>
    %15 = arith.maximumf %13, %14 : vector<8x512xf32>
    %16 = arith.truncf %15 : vector<8x512xf32> to vector<8x512xbf16>
    %c0_11 = arith.constant 0 : index
    %c1024 = arith.constant 1024 : index
    %17 = vector.load %arg3[%c0_11, %c1024] : memref<1x3712xf32, #tpu.memory_space<vmem>>, vector<1x256xf32>
    %c0_12 = arith.constant 0 : index
    %c0_13 = arith.constant 0 : index
    %18 = vector.load %arg6[%c0_12, %c0_13] : memref<512x256xbf16, #tpu.memory_space<vmem>>, vector<512x256xbf16>
    %cst_14 = arith.constant dense<0.000000e+00> : vector<8x256xf32>
    %19 = tpu.matmul %16, %18, %cst_14 {dimension_numbers = #tpu.dot_dimension_numbers<[1], [0], [0], [1], [0, 0, 1, 1], [], []>} : vector<8x512xbf16>, vector<512x256xbf16>, vector<8x256xf32> -> vector<8x256xf32>
    %20 = vector.broadcast %17 : vector<1x256xf32> to vector<8x256xf32>
    %21 = arith.addf %19, %20 : vector<8x256xf32>
    %cst_15 = arith.constant 0.000000e+00 : f32
    %22 = vector.broadcast %cst_15 : f32 to vector<8x256xf32>
    %23 = arith.maximumf %21, %22 : vector<8x256xf32>
    %24 = arith.truncf %23 : vector<8x256xf32> to vector<8x256xbf16>
    %c0_16 = arith.constant 0 : index
    %c1280 = arith.constant 1280 : index
    %25 = vector.load %arg3[%c0_16, %c1280] : memref<1x3712xf32, #tpu.memory_space<vmem>>, vector<1x256xf32>
    %c0_17 = arith.constant 0 : index
    %c0_18 = arith.constant 0 : index
    %26 = vector.load %arg7[%c0_17, %c0_18] : memref<256x256xbf16, #tpu.memory_space<vmem>>, vector<256x256xbf16>
    %cst_19 = arith.constant dense<0.000000e+00> : vector<8x256xf32>
    %27 = tpu.matmul %24, %26, %cst_19 {dimension_numbers = #tpu.dot_dimension_numbers<[1], [0], [0], [1], [0, 0, 1, 1], [], []>} : vector<8x256xbf16>, vector<256x256xbf16>, vector<8x256xf32> -> vector<8x256xf32>
    %28 = vector.broadcast %25 : vector<1x256xf32> to vector<8x256xf32>
    %29 = arith.addf %27, %28 : vector<8x256xf32>
    %30 = vector.extract_strided_slice %29 {offsets = [0, 0], sizes = [8, 128], strides = [1, 1]} : vector<8x256xf32> to vector<8x128xf32>
    %31 = vector.extract_strided_slice %29 {offsets = [0, 128], sizes = [8, 128], strides = [1, 1]} : vector<8x256xf32> to vector<8x128xf32>
    %c0_20 = arith.constant 0 : index
    %c0_21 = arith.constant 0 : index
    %32 = vector.load %arg2[%c0_20, %c0_21] : memref<8x128xf32, #tpu.memory_space<vmem>>, vector<8x128xf32>
    %cst_22 = arith.constant 5.000000e-01 : f32
    %33 = vector.broadcast %cst_22 : f32 to vector<8x128xf32>
    %34 = arith.mulf %33, %31 : vector<8x128xf32>
    %35 = math.exp %34 : vector<8x128xf32>
    %36 = arith.mulf %32, %35 : vector<8x128xf32>
    %37 = arith.addf %36, %30 : vector<8x128xf32>
    %38 = arith.truncf %37 : vector<8x128xf32> to vector<8x128xbf16>
    %c0_23 = arith.constant 0 : index
    %c1536 = arith.constant 1536 : index
    %39 = vector.load %arg3[%c0_23, %c1536] : memref<1x3712xf32, #tpu.memory_space<vmem>>, vector<1x256xf32>
    %c0_24 = arith.constant 0 : index
    %c0_25 = arith.constant 0 : index
    %40 = vector.load %arg8[%c0_24, %c0_25] : memref<128x256xbf16, #tpu.memory_space<vmem>>, vector<128x256xbf16>
    %cst_26 = arith.constant dense<0.000000e+00> : vector<8x256xf32>
    %41 = tpu.matmul %38, %40, %cst_26 {dimension_numbers = #tpu.dot_dimension_numbers<[1], [0], [0], [1], [0, 0, 1, 1], [], []>} : vector<8x128xbf16>, vector<128x256xbf16>, vector<8x256xf32> -> vector<8x256xf32>
    %42 = vector.broadcast %39 : vector<1x256xf32> to vector<8x256xf32>
    %43 = arith.addf %41, %42 : vector<8x256xf32>
    %cst_27 = arith.constant 0.000000e+00 : f32
    %44 = vector.broadcast %cst_27 : f32 to vector<8x256xf32>
    %45 = arith.maximumf %43, %44 : vector<8x256xf32>
    %46 = arith.truncf %45 : vector<8x256xf32> to vector<8x256xbf16>
    %c0_28 = arith.constant 0 : index
    %c1792 = arith.constant 1792 : index
    %47 = vector.load %arg3[%c0_28, %c1792] : memref<1x3712xf32, #tpu.memory_space<vmem>>, vector<1x512xf32>
    %c0_29 = arith.constant 0 : index
    %c0_30 = arith.constant 0 : index
    %48 = vector.load %arg9[%c0_29, %c0_30] : memref<256x512xbf16, #tpu.memory_space<vmem>>, vector<256x512xbf16>
    %cst_31 = arith.constant dense<0.000000e+00> : vector<8x512xf32>
    %49 = tpu.matmul %46, %48, %cst_31 {dimension_numbers = #tpu.dot_dimension_numbers<[1], [0], [0], [1], [0, 0, 1, 1], [], []>} : vector<8x256xbf16>, vector<256x512xbf16>, vector<8x512xf32> -> vector<8x512xf32>
    %50 = vector.broadcast %47 : vector<1x512xf32> to vector<8x512xf32>
    %51 = arith.addf %49, %50 : vector<8x512xf32>
    %cst_32 = arith.constant 0.000000e+00 : f32
    %52 = vector.broadcast %cst_32 : f32 to vector<8x512xf32>
    %53 = arith.maximumf %51, %52 : vector<8x512xf32>
    %54 = arith.truncf %53 : vector<8x512xf32> to vector<8x512xbf16>
    %c0_33 = arith.constant 0 : index
    %c2304 = arith.constant 2304 : index
    %55 = vector.load %arg3[%c0_33, %c2304] : memref<1x3712xf32, #tpu.memory_space<vmem>>, vector<1x512xf32>
    %c0_34 = arith.constant 0 : index
    %c0_35 = arith.constant 0 : index
    %56 = vector.load %arg10[%c0_34, %c0_35] : memref<512x512xbf16, #tpu.memory_space<vmem>>, vector<512x512xbf16>
    %cst_36 = arith.constant dense<0.000000e+00> : vector<8x512xf32>
    %57 = tpu.matmul %54, %56, %cst_36 {dimension_numbers = #tpu.dot_dimension_numbers<[1], [0], [0], [1], [0, 0, 1, 1], [], []>} : vector<8x512xbf16>, vector<512x512xbf16>, vector<8x512xf32> -> vector<8x512xf32>
    %58 = vector.broadcast %55 : vector<1x512xf32> to vector<8x512xf32>
    %59 = arith.addf %57, %58 : vector<8x512xf32>
    %cst_37 = arith.constant 0.000000e+00 : f32
    %60 = vector.broadcast %cst_37 : f32 to vector<8x512xf32>
    %61 = arith.maximumf %59, %60 : vector<8x512xf32>
    %62 = arith.truncf %61 : vector<8x512xf32> to vector<8x512xbf16>
    %c0_38 = arith.constant 0 : index
    %c2816 = arith.constant 2816 : index
    %63 = vector.load %arg3[%c0_38, %c2816] : memref<1x3712xf32, #tpu.memory_space<vmem>>, vector<1x896xf32>
    %c0_39 = arith.constant 0 : index
    %c0_40 = arith.constant 0 : index
    %64 = vector.load %arg11[%c0_39, %c0_40] : memref<512x896xbf16, #tpu.memory_space<vmem>>, vector<512x896xbf16>
    %cst_41 = arith.constant dense<0.000000e+00> : vector<8x896xf32>
    %65 = tpu.matmul %62, %64, %cst_41 {dimension_numbers = #tpu.dot_dimension_numbers<[1], [0], [0], [1], [0, 0, 1, 1], [], []>} : vector<8x512xbf16>, vector<512x896xbf16>, vector<8x896xf32> -> vector<8x896xf32>
    %66 = vector.broadcast %63 : vector<1x896xf32> to vector<8x896xf32>
    %67 = arith.addf %65, %66 : vector<8x896xf32>
    %68 = arith.negf %67 : vector<8x896xf32>
    %69 = math.exp %68 : vector<8x896xf32>
    %cst_42 = arith.constant 1.000000e+00 : f32
    %70 = vector.broadcast %cst_42 : f32 to vector<8x896xf32>
    %71 = arith.addf %70, %69 : vector<8x896xf32>
    %72 = arith.divf %70, %71 : vector<8x896xf32>
    %73 = arith.truncf %72 : vector<8x896xf32> to vector<8x896xbf16>
    %c0_43 = arith.constant 0 : index
    %c0_44 = arith.constant 0 : index
    %74 = vector.load %arg12[%c0_43, %c0_44] : memref<8x896xbf16, #tpu.memory_space<vmem>>, vector<8x896xbf16>
    tpu.vector_store %arg12[%c0_43, %c0_44], %73 {strides = array<i32>} : memref<8x896xbf16, #tpu.memory_space<vmem>>, vector<8x896xbf16>,
    %c0_45 = arith.constant 0 : index
    %c0_46 = arith.constant 0 : index
    %75 = vector.load %arg13[%c0_45, %c0_46] : memref<8x256xf32, #tpu.memory_space<vmem>>, vector<8x256xf32>
    tpu.vector_store %arg13[%c0_45, %c0_46], %29 {strides = array<i32>} : memref<8x256xf32, #tpu.memory_space<vmem>>, vector<8x256xf32>,
    return
  }
  func.func @transform_0(%arg0: i32) -> (i32, i32) {
    %c0_i32 = arith.constant 0 : i32
    %c0_i32_0 = arith.constant 0 : i32
    return %arg0, %c0_i32 : i32, i32
  }
  func.func @transform_1(%arg0: i32) -> (i32, i32) {
    %c0_i32 = arith.constant 0 : i32
    %c0_i32_0 = arith.constant 0 : i32
    return %arg0, %c0_i32 : i32, i32
  }
  func.func @transform_2(%arg0: i32) -> (i32, i32) {
    %c0_i32 = arith.constant 0 : i32
    %c0_i32_0 = arith.constant 0 : i32
    %c0_i32_1 = arith.constant 0 : i32
    return %c0_i32, %c0_i32_0 : i32, i32
  }
  func.func @transform_3(%arg0: i32) -> (i32, i32) {
    %c0_i32 = arith.constant 0 : i32
    %c0_i32_0 = arith.constant 0 : i32
    %c0_i32_1 = arith.constant 0 : i32
    return %c0_i32, %c0_i32_0 : i32, i32
  }
  func.func @transform_4(%arg0: i32) -> (i32, i32) {
    %c0_i32 = arith.constant 0 : i32
    %c0_i32_0 = arith.constant 0 : i32
    %c0_i32_1 = arith.constant 0 : i32
    return %c0_i32, %c0_i32_0 : i32, i32
  }
  func.func @transform_5(%arg0: i32) -> (i32, i32) {
    %c0_i32 = arith.constant 0 : i32
    %c0_i32_0 = arith.constant 0 : i32
    %c0_i32_1 = arith.constant 0 : i32
    return %c0_i32, %c0_i32_0 : i32, i32
  }
  func.func @transform_6(%arg0: i32) -> (i32, i32) {
    %c0_i32 = arith.constant 0 : i32
    %c0_i32_0 = arith.constant 0 : i32
    %c0_i32_1 = arith.constant 0 : i32
    return %c0_i32, %c0_i32_0 : i32, i32
  }
  func.func @transform_7(%arg0: i32) -> (i32, i32) {
    %c0_i32 = arith.constant 0 : i32
    %c0_i32_0 = arith.constant 0 : i32
    %c0_i32_1 = arith.constant 0 : i32
    return %c0_i32, %c0_i32_0 : i32, i32
  }
  func.func @transform_8(%arg0: i32) -> (i32, i32) {
    %c0_i32 = arith.constant 0 : i32
    %c0_i32_0 = arith.constant 0 : i32
    %c0_i32_1 = arith.constant 0 : i32
    return %c0_i32, %c0_i32_0 : i32, i32
  }
  func.func @transform_9(%arg0: i32) -> (i32, i32) {
    %c0_i32 = arith.constant 0 : i32
    %c0_i32_0 = arith.constant 0 : i32
    %c0_i32_1 = arith.constant 0 : i32
    return %c0_i32, %c0_i32_0 : i32, i32
  }
  func.func @transform_10(%arg0: i32) -> (i32, i32) {
    %c0_i32 = arith.constant 0 : i32
    %c0_i32_0 = arith.constant 0 : i32
    %c0_i32_1 = arith.constant 0 : i32
    return %c0_i32, %c0_i32_0 : i32, i32
  }
  func.func @transform_11(%arg0: i32) -> (i32, i32) {
    %c0_i32 = arith.constant 0 : i32
    %c0_i32_0 = arith.constant 0 : i32
    return %arg0, %c0_i32 : i32, i32
  }
  func.func @transform_12(%arg0: i32) -> (i32, i32) {
    %c0_i32 = arith.constant 0 : i32
    %c0_i32_0 = arith.constant 0 : i32
    return %arg0, %c0_i32 : i32, i32
  }
}

</mosaic_0001>

<llo_original>
// kernel: vae_forward.1
$region0: #{vae_forward.1}
  #allocation0 [shape = 'u32[]', space=smem, size = 0x4, offset = 0x4, fixed_abs, tag = 'smem constant byte address 0x4 - core index']
  #allocation1 [shape = 'u32[144,128]{1,0:T(1,128)}', space=vmem, size = 0x12000, scoped, tag = 'internal scratch']
  %s0 = inlined_call_operand.vmem [shape: bf16[8,896], index: 0, kind: input, shape index: {}]
  %s1 = inlined_call_operand.vmem [shape: f32[8,128], index: 1, kind: input, shape index: {}]
  %s2 = inlined_call_operand.vmem [shape: f32[1,3712], index: 2, kind: input, shape index: {}]
  %s3 = inlined_call_operand.hbm [shape: bf16[896,512], index: 3, kind: input, shape index: {}]
  %s4 = inlined_call_operand.hbm [shape: bf16[512,512], index: 4, kind: input, shape index: {}]
  %s5 = inlined_call_operand.vmem [shape: bf16[512,256], index: 5, kind: input, shape index: {}]
  %s6 = inlined_call_operand.hbm [shape: bf16[256,256], index: 6, kind: input, shape index: {}]
  %s7 = inlined_call_operand.hbm [shape: bf16[128,256], index: 7, kind: input, shape index: {}]
  %s8 = inlined_call_operand.hbm [shape: bf16[256,512], index: 8, kind: input, shape index: {}]
  %s9 = inlined_call_operand.hbm [shape: bf16[512,512], index: 9, kind: input, shape index: {}]
  %s10 = inlined_call_operand.hbm [shape: bf16[512,896], index: 10, kind: input, shape index: {}]
  %s11 = inlined_call_operand.vmem [shape: bf16[8,896], index: 11, kind: output, shape index: {0}]
  %s12 = inlined_call_operand.vmem [shape: f32[8,256], index: 12, kind: output, shape index: {1}]
  %13 = xla_tuple %s11, %s12
  %s14 = sld [smem:[#allocation0]]
  $region90: #{vae_forward.1} parent=0
    _
  %s16 = ssub.s32 1, %s14
  %s17 = scalar_select 0, %s16, %s14
  $region1: #{vae_forward.1} parent=0
    #allocation2 [shape = 'u8[917504]{0}', space=vmem, size = 0xe0000, scoped, tag = 'input window, operand 3, single buffered']
    #allocation3 [shape = 's32[1]{0}', space=sflag, size = 0x4, scoped, tag = 'scoped memory for vae_forward.1']
    #allocation4 [shape = 'u8[524288]{0}', space=vmem, size = 0x80000, scoped, tag = 'input window, operand 4, single buffered']
    #allocation5 [shape = 's32[1]{0}', space=sflag, size = 0x4, scoped, tag = 'scoped memory for vae_forward.1']
    #allocation6 [shape = 'u8[131072]{0}', space=vmem, size = 0x20000, scoped, tag = 'input window, operand 6, single buffered']
    #allocation7 [shape = 'u8[65536]{0}', space=vmem, size = 0x10000, scoped, tag = 'input window, operand 7, single buffered']
    #allocation8 [shape = 's32[1]{0}', space=sflag, size = 0x4, scoped, tag = 'scoped memory for vae_forward.1']
    #allocation9 [shape = 'u8[262144]{0}', space=vmem, size = 0x40000, scoped, tag = 'input window, operand 8, single buffered']
    #allocation10 [shape = 'u8[524288]{0}', space=vmem, size = 0x80000, scoped, tag = 'input window, operand 9, single buffered']
    #allocation11 [shape = 's32[1]{0}', space=sflag, size = 0x4, scoped, tag = 'scoped memory for vae_forward.1']
    #allocation12 [shape = 'u8[917504]{0}', space=vmem, size = 0xe0000, scoped, tag = 'input window, operand 10, single buffered']
    %18 = vsyncpa [#allocation3], 0
    %19 = vsyncpa [#allocation5], 0
    %20 = vsyncpa [#allocation8], 0
    %21 = vsyncpa [#allocation11], 0
    // Predicated region
    $region2: #{vae_forward.1} parent=1 // pred_check
      _
    $region3: #{vae_forward.1} parent=1 // pred_check_branch
      %23 = sbr.rel (0) target = $region5
    $region4: #{vae_forward.1} parent=1 // pred_region
      _
    $region5: #{vae_forward.1} parent=1 // pred_fallthru
      _
    // Predicated region
    $region6: #{vae_forward.1} parent=1 // pred_check
      _
    $region7: #{vae_forward.1} parent=1 // pred_check_branch
      %25 = sbr.rel (0) target = $region9
    $region8: #{vae_forward.1} parent=1 // pred_region
      _
    $region9: #{vae_forward.1} parent=1 // pred_fallthru
      _
    // Predicated region
    $region10: #{vae_forward.1} parent=1 // pred_check
      _
    $region11: #{vae_forward.1} parent=1 // pred_check_branch
      %27 = sbr.rel (0) target = $region13
    $region12: #{vae_forward.1} parent=1 // pred_region
      _
    $region13: #{vae_forward.1} parent=1 // pred_fallthru
      _
    // Predicated region
    $region14: #{vae_forward.1} parent=1 // pred_check
      _
    $region15: #{vae_forward.1} parent=1 // pred_check_branch
      %29 = sbr.rel (0) target = $region17
    $region16: #{vae_forward.1} parent=1 // pred_region
      %s31 = ssub.s32 28672, 28672
      %32 = vsyncadd [#allocation3], %s31
      %s33 = sshll.u32 [#allocation2], 4
      %s34 = int_to_ptr.vmem [resolvable:$true] %s33
      %39 = dma.hbm_to_vmem [thread:$0]  %s3, 28672, %s34, [#allocation3], 256, 256, 16
    $region17: #{vae_forward.1} parent=1 // pred_fallthru
      _
    // Predicated region
    $region18: #{vae_forward.1} parent=1 // pred_check
      _
    $region19: #{vae_forward.1} parent=1 // pred_check_branch
      %41 = sbr.rel (0) target = $region21
    $region20: #{vae_forward.1} parent=1 // pred_region
      %s43 = ssub.s32 16384, 16384
      %44 = vsyncadd [#allocation5], %s43
      %s45 = sshll.u32 [#allocation4], 4
      %s46 = int_to_ptr.vmem [resolvable:$true] %s45
      %51 = dma.hbm_to_vmem [thread:$0]  %s4, 16384, %s46, [#allocation5], 256, 256, 16
    $region21: #{vae_forward.1} parent=1 // pred_fallthru
      _
    // Predicated region
    $region22: #{vae_forward.1} parent=1 // pred_check
      _
    $region23: #{vae_forward.1} parent=1 // pred_check_branch
      %53 = sbr.rel (0) target = $region25
    $region24: #{vae_forward.1} parent=1 // pred_region
      _
    $region25: #{vae_forward.1} parent=1 // pred_fallthru
      _
    // Predicated region
    $region26: #{vae_forward.1} parent=1 // pred_check
      _
    $region27: #{vae_forward.1} parent=1 // pred_check_branch
      %55 = sbr.rel (0) target = $region29
    $region28: #{vae_forward.1} parent=1 // pred_region
      %s57 = ssub.s32 4096, 4096
      %58 = vsyncadd [#allocation5], %s57
      %s59 = sshll.u32 [#allocation6], 4
      %s60 = int_to_ptr.vmem [resolvable:$true] %s59
      %65 = dma.hbm_to_vmem [thread:$0]  %s6, 4096, %s60, [#allocation5], 128, 128, 8
    $region29: #{vae_forward.1} parent=1 // pred_fallthru
      _
    // Predicated region
    $region30: #{vae_forward.1} parent=1 // pred_check
      _
    $region31: #{vae_forward.1} parent=1 // pred_check_branch
      %67 = sbr.rel (0) target = $region33
    $region32: #{vae_forward.1} parent=1 // pred_region
      %s69 = ssub.s32 2048, 2048
      %70 = vsyncadd [#allocation8], %s69
      %s71 = sshll.u32 [#allocation7], 4
      %s72 = int_to_ptr.vmem [resolvable:$true] %s71
      %77 = dma.hbm_to_vmem [thread:$0]  %s7, 2048, %s72, [#allocation8], 128, 128, 8
    $region33: #{vae_forward.1} parent=1 // pred_fallthru
      _
    // Predicated region
    $region34: #{vae_forward.1} parent=1 // pred_check
      _
    $region35: #{vae_forward.1} parent=1 // pred_check_branch
      %79 = sbr.rel (0) target = $region37
    $region36: #{vae_forward.1} parent=1 // pred_region
      %s81 = ssub.s32 8192, 8192
      %82 = vsyncadd [#allocation8], %s81
      %s83 = sshll.u32 [#allocation9], 4
      %s84 = int_to_ptr.vmem [resolvable:$true] %s83
      %89 = dma.hbm_to_vmem [thread:$0]  %s8, 8192, %s84, [#allocation8], 256, 256, 16
    $region37: #{vae_forward.1} parent=1 // pred_fallthru
      _
    // Predicated region
    $region38: #{vae_forward.1} parent=1 // pred_check
      _
    $region39: #{vae_forward.1} parent=1 // pred_check_branch
      %91 = sbr.rel (0) target = $region41
    $region40: #{vae_forward.1} parent=1 // pred_region
      %s93 = ssub.s32 16384, 16384
      %94 = vsyncadd [#allocation11], %s93
      %s95 = sshll.u32 [#allocation10], 4
      %s96 = int_to_ptr.vmem [resolvable:$true] %s95
      %101 = dma.hbm_to_vmem [thread:$0]  %s9, 16384, %s96, [#allocation11], 256, 256, 16
    $region41: #{vae_forward.1} parent=1 // pred_fallthru
      _
    // Predicated region
    $region42: #{vae_forward.1} parent=1 // pred_check
      _
    $region43: #{vae_forward.1} parent=1 // pred_check_branch
      %103 = sbr.rel (0) target = $region45
    $region44: #{vae_forward.1} parent=1 // pred_region
      %s105 = ssub.s32 28672, 28672
      %106 = vsyncadd [#allocation11], %s105
      %s107 = sshll.u32 [#allocation12], 4
      %s108 = int_to_ptr.vmem [resolvable:$true] %s107
      %113 = dma.hbm_to_vmem [thread:$0]  %s10, 28672, %s108, [#allocation11], 448, 448, 28
    $region45: #{vae_forward.1} parent=1 // pred_fallthru
      _
    // Predicated region
    $region46: #{vae_forward.1} parent=1 // pred_check
      _
    $region47: #{vae_forward.1} parent=1 // pred_check_branch
      %115 = sbr.rel (0) target = $region49
    $region48: #{vae_forward.1} parent=1 // pred_region
      %116 = dma.done [#allocation3], 28672
    $region49: #{vae_forward.1} parent=1 // pred_fallthru
      _
    // Predicated region
    $region50: #{vae_forward.1} parent=1 // pred_check
      _
    $region51: #{vae_forward.1} parent=1 // pred_check_branch
      %118 = sbr.rel (0) target = $region53
    $region52: #{vae_forward.1} parent=1 // pred_region
      %119 = dma.done [#allocation5], 16384
    $region53: #{vae_forward.1} parent=1 // pred_fallthru
      _
    // Predicated region
    $region54: #{vae_forward.1} parent=1 // pred_check
      _
    $region55: #{vae_forward.1} parent=1 // pred_check_branch
      %121 = sbr.rel (0) target = $region57
    $region56: #{vae_forward.1} parent=1 // pred_region
      %122 = dma.done [#allocation5], 4096
    $region57: #{vae_forward.1} parent=1 // pred_fallthru
      _
    // Predicated region
    $region58: #{vae_forward.1} parent=1 // pred_check
      _
    $region59: #{vae_forward.1} parent=1 // pred_check_branch
      %124 = sbr.rel (0) target = $region61
    $region60: #{vae_forward.1} parent=1 // pred_region
      %125 = dma.done [#allocation8], 2048
    $region61: #{vae_forward.1} parent=1 // pred_fallthru
      _
    // Predicated region
    $region62: #{vae_forward.1} parent=1 // pred_check
      _
    $region63: #{vae_forward.1} parent=1 // pred_check_branch
      %127 = sbr.rel (0) target = $region65
    $region64: #{vae_forward.1} parent=1 // pred_region
      %128 = dma.done [#allocation8], 8192
    $region65: #{vae_forward.1} parent=1 // pred_fallthru
      _
    // Predicated region
    $region66: #{vae_forward.1} parent=1 // pred_check
      _
    $region67: #{vae_forward.1} parent=1 // pred_check_branch
      %130 = sbr.rel (0) target = $region69
    $region68: #{vae_forward.1} parent=1 // pred_region
      %131 = dma.done [#allocation11], 16384
    $region69: #{vae_forward.1} parent=1 // pred_fallthru
      _
    // Predicated region
    $region70: #{vae_forward.1} parent=1 // pred_check
      _
    $region71: #{vae_forward.1} parent=1 // pred_check_branch
      %133 = sbr.rel (0) target = $region73
    $region72: #{vae_forward.1} parent=1 // pred_region
      %134 = dma.done [#allocation11], 28672
    $region73: #{vae_forward.1} parent=1 // pred_fallthru
      _
    %v136 = vld [vmem:[%s0] sm:$0xff]
    %v137 = vld [vmem:[%s0 + $0x8] sm:$0xff]
    %v138 = vld [vmem:[%s0 + $0x10] sm:$0xff]
    %v139 = vld [vmem:[%s0 + $0x18] sm:$0xf]
    %v140 = vld [vmem:[%s2] sm:$0xf]
    %v141 = vld [vmem:[#allocation2] sm:$0xff]
    %v142 = vld [vmem:[#allocation2 + $0x8] sm:$0xff]
    %v143 = vld [vmem:[#allocation2 + $0x10] sm:$0xff]
    %v144 = vld [vmem:[#allocation2 + $0x18] sm:$0xff]
    %v145 = vld [vmem:[#allocation2 + $0x20] sm:$0xff]
    %v146 = vld [vmem:[#allocation2 + $0x28] sm:$0xff]
    %v147 = vld [vmem:[#allocation2 + $0x30] sm:$0xff]
    %v148 = vld [vmem:[#allocation2 + $0x38] sm:$0xff]
    %v149 = vld [vmem:[#allocation2 + $0x40] sm:$0xff]
    %v150 = vld [vmem:[#allocation2 + $0x48] sm:$0xff]
    %v151 = vld [vmem:[#allocation2 + $0x50] sm:$0xff]
    %v152 = vld [vmem:[#allocation2 + $0x58] sm:$0xff]
    %v153 = vld [vmem:[#allocation2 + $0x60] sm:$0xff]
    %v154 = vld [vmem:[#allocation2 + $0x68] sm:$0xff]
    %v155 = vld [vmem:[#allocation2 + $0x70] sm:$0xff]
    %v156 = vld [vmem:[#allocation2 + $0x78] sm:$0xff]
    %v157 = vld [vmem:[#allocation2 + $0x80] sm:$0xff]
    %v158 = vld [vmem:[#allocation2 + $0x88] sm:$0xff]
    %v159 = vld [vmem:[#allocation2 + $0x90] sm:$0xff]
    %v160 = vld [vmem:[#allocation2 + $0x98] sm:$0xff]
    %v161 = vld [vmem:[#allocation2 + $0xa0] sm:$0xff]
    %v162 = vld [vmem:[#allocation2 + $0xa8] sm:$0xff]
    %v163 = vld [vmem:[#allocation2 + $0xb0] sm:$0xff]
    %v164 = vld [vmem:[#allocation2 + $0xb8] sm:$0xff]
    %v165 = vld [vmem:[#allocation2 + $0xc0] sm:$0xff]
    %v166 = vld [vmem:[#allocation2 + $0xc8] sm:$0xff]
    %v167 = vld [vmem:[#allocation2 + $0xd0] sm:$0xff]
    %v168 = vld [vmem:[#allocation2 + $0xd8] sm:$0xff]
    %v169 = vld [vmem:[#allocation2 + $0xe0] sm:$0xff]
    %v170 = vld [vmem:[#allocation2 + $0xe8] sm:$0xff]
    %v171 = vld [vmem:[#allocation2 + $0xf0] sm:$0xff]
    %v172 = vld [vmem:[#allocation2 + $0xf8] sm:$0xff]
    %v173 = vld [vmem:[#allocation2 + $0x100] sm:$0xff]
    %v174 = vld [vmem:[#allocation2 + $0x108] sm:$0xff]
    %v175 = vld [vmem:[#allocation2 + $0x110] sm:$0xff]
    %v176 = vld [vmem:[#allocation2 + $0x118] sm:$0xff]
    %v177 = vld [vmem:[#allocation2 + $0x120] sm:$0xff]
    %v178 = vld [vmem:[#allocation2 + $0x128] sm:$0xff]
    %v179 = vld [vmem:[#allocation2 + $0x130] sm:$0xff]
    %v180 = vld [vmem:[#allocation2 + $0x138] sm:$0xff]
    %v181 = vld [vmem:[#allocation2 + $0x140] sm:$0xff]
    %v182 = vld [vmem:[#allocation2 + $0x148] sm:$0xff]
    %v183 = vld [vmem:[#allocation2 + $0x150] sm:$0xff]
    %v184 = vld [vmem:[#allocation2 + $0x158] sm:$0xff]
    %v185 = vld [vmem:[#allocation2 + $0x160] sm:$0xff]
    %v186 = vld [vmem:[#allocation2 + $0x168] sm:$0xff]
    %v187 = vld [vmem:[#allocation2 + $0x170] sm:$0xff]
    %v188 = vld [vmem:[#allocation2 + $0x178] sm:$0xff]
    %v189 = vld [vmem:[#allocation2 + $0x180] sm:$0xff]
    %v190 = vld [vmem:[#allocation2 + $0x188] sm:$0xff]
    %v191 = vld [vmem:[#allocation2 + $0x190] sm:$0xff]
    %v192 = vld [vmem:[#allocation2 + $0x198] sm:$0xff]
    %v193 = vld [vmem:[#allocation2 + $0x1a0] sm:$0xff]
    %v194 = vld [vmem:[#allocation2 + $0x1a8] sm:$0xff]
    %v195 = vld [vmem:[#allocation2 + $0x1b0] sm:$0xff]
    %v196 = vld [vmem:[#allocation2 + $0x1b8] sm:$0xff]
    %v197 = vld [vmem:[#allocation2 + $0x1c0] sm:$0xff]
    %v198 = vld [vmem:[#allocation2 + $0x1c8] sm:$0xff]
    %v199 = vld [vmem:[#allocation2 + $0x1d0] sm:$0xff]
    %v200 = vld [vmem:[#allocation2 + $0x1d8] sm:$0xff]
    %v201 = vld [vmem:[#allocation2 + $0x1e0] sm:$0xff]
    %v202 = vld [vmem:[#allocation2 + $0x1e8] sm:$0xff]
    %v203 = vld [vmem:[#allocation2 + $0x1f0] sm:$0xff]
    %v204 = vld [vmem:[#allocation2 + $0x1f8] sm:$0xff]
    %v205 = vld [vmem:[#allocation2 + $0x200] sm:$0xff]
    %v206 = vld [vmem:[#allocation2 + $0x208] sm:$0xff]
    %v207 = vld [vmem:[#allocation2 + $0x210] sm:$0xff]
    %v208 = vld [vmem:[#allocation2 + $0x218] sm:$0xff]
    %v209 = vld [vmem:[#allocation2 + $0x220] sm:$0xff]
    %v210 = vld [vmem:[#allocation2 + $0x228] sm:$0xff]
    %v211 = vld [vmem:[#allocation2 + $0x230] sm:$0xff]
    %v212 = vld [vmem:[#allocation2 + $0x238] sm:$0xff]
    %v213 = vld [vmem:[#allocation2 + $0x240] sm:$0xff]
    %v214 = vld [vmem:[#allocation2 + $0x248] sm:$0xff]
    %v215 = vld [vmem:[#allocation2 + $0x250] sm:$0xff]
    %v216 = vld [vmem:[#allocation2 + $0x258] sm:$0xff]
    %v217 = vld [vmem:[#allocation2 + $0x260] sm:$0xff]
    %v218 = vld [vmem:[#allocation2 + $0x268] sm:$0xff]
    %v219 = vld [vmem:[#allocation2 + $0x270] sm:$0xff]
    %v220 = vld [vmem:[#allocation2 + $0x278] sm:$0xff]
    %v221 = vld [vmem:[#allocation2 + $0x280] sm:$0xff]
    %v222 = vld [vmem:[#allocation2 + $0x288] sm:$0xff]
    %v223 = vld [vmem:[#allocation2 + $0x290] sm:$0xff]
    %v224 = vld [vmem:[#allocation2 + $0x298] sm:$0xff]
    %v225 = vld [vmem:[#allocation2 + $0x2a0] sm:$0xff]
    %v226 = vld [vmem:[#allocation2 + $0x2a8] sm:$0xff]
    %v227 = vld [vmem:[#allocation2 + $0x2b0] sm:$0xff]
    %v228 = vld [vmem:[#allocation2 + $0x2b8] sm:$0xff]
    %v229 = vld [vmem:[#allocation2 + $0x2c0] sm:$0xff]
    %v230 = vld [vmem:[#allocation2 + $0x2c8] sm:$0xff]
    %v231 = vld [vmem:[#allocation2 + $0x2d0] sm:$0xff]
    %v232 = vld [vmem:[#allocation2 + $0x2d8] sm:$0xff]
    %v233 = vld [vmem:[#allocation2 + $0x2e0] sm:$0xff]
    %v234 = vld [vmem:[#allocation2 + $0x2e8] sm:$0xff]
    %v235 = vld [vmem:[#allocation2 + $0x2f0] sm:$0xff]
    %v236 = vld [vmem:[#allocation2 + $0x2f8] sm:$0xff]
    %v237 = vld [vmem:[#allocation2 + $0x300] sm:$0xff]
    %v238 = vld [vmem:[#allocation2 + $0x308] sm:$0xff]
    %v239 = vld [vmem:[#allocation2 + $0x310] sm:$0xff]
    %v240 = vld [vmem:[#allocation2 + $0x318] sm:$0xff]
    %v241 = vld [vmem:[#allocation2 + $0x320] sm:$0xff]
    %v242 = vld [vmem:[#allocation2 + $0x328] sm:$0xff]
    %v243 = vld [vmem:[#allocation2 + $0x330] sm:$0xff]
    %v244 = vld [vmem:[#allocation2 + $0x338] sm:$0xff]
    %v245 = vld [vmem:[#allocation2 + $0x340] sm:$0xff]
    %v246 = vld [vmem:[#allocation2 + $0x348] sm:$0xff]
    %v247 = vld [vmem:[#allocation2 + $0x350] sm:$0xff]
    %v248 = vld [vmem:[#allocation2 + $0x358] sm:$0xff]
    %v249 = vld [vmem:[#allocation2 + $0x360] sm:$0xff]
    %v250 = vld [vmem:[#allocation2 + $0x368] sm:$0xff]
    %v251 = vld [vmem:[#allocation2 + $0x370] sm:$0xff]
    %v252 = vld [vmem:[#allocation2 + $0x378] sm:$0xff]
    %v253 = vld [vmem:[#allocation2 + $0x380] sm:$0xff]
    %v254 = vld [vmem:[#allocation2 + $0x388] sm:$0xff]
    %v255 = vld [vmem:[#allocation2 + $0x390] sm:$0xff]
    %v256 = vld [vmem:[#allocation2 + $0x398] sm:$0xff]
    %v257 = vld [vmem:[#allocation2 + $0x3a0] sm:$0xff]
    %v258 = vld [vmem:[#allocation2 + $0x3a8] sm:$0xff]
    %v259 = vld [vmem:[#allocation2 + $0x3b0] sm:$0xff]
    %v260 = vld [vmem:[#allocation2 + $0x3b8] sm:$0xff]
    %v261 = vld [vmem:[#allocation2 + $0x3c0] sm:$0xff]
    %v262 = vld [vmem:[#allocation2 + $0x3c8] sm:$0xff]
    %v263 = vld [vmem:[#allocation2 + $0x3d0] sm:$0xff]
    %v264 = vld [vmem:[#allocation2 + $0x3d8] sm:$0xff]
    %v265 = vld [vmem:[#allocation2 + $0x3e0] sm:$0xff]
    %v266 = vld [vmem:[#allocation2 + $0x3e8] sm:$0xff]
    %v267 = vld [vmem:[#allocation2 + $0x3f0] sm:$0xff]
    %v268 = vld [vmem:[#allocation2 + $0x3f8] sm:$0xff]
    %v269 = vld [vmem:[#allocation2 + $0x400] sm:$0xff]
    %v270 = vld [vmem:[#allocation2 + $0x408] sm:$0xff]
    %v271 = vld [vmem:[#allocation2 + $0x410] sm:$0xff]
    %v272 = vld [vmem:[#allocation2 + $0x418] sm:$0xff]
    %v273 = vld [vmem:[#allocation2 + $0x420] sm:$0xff]
    %v274 = vld [vmem:[#allocation2 + $0x428] sm:$0xff]
    %v275 = vld [vmem:[#allocation2 + $0x430] sm:$0xff]
    %v276 = vld [vmem:[#allocation2 + $0x438] sm:$0xff]
    %v277 = vld [vmem:[#allocation2 + $0x440] sm:$0xff]
    %v278 = vld [vmem:[#allocation2 + $0x448] sm:$0xff]
    %v279 = vld [vmem:[#allocation2 + $0x450] sm:$0xff]
    %v280 = vld [vmem:[#allocation2 + $0x458] sm:$0xff]
    %v281 = vld [vmem:[#allocation2 + $0x460] sm:$0xff]
    %v282 = vld [vmem:[#allocation2 + $0x468] sm:$0xff]
    %v283 = vld [vmem:[#allocation2 + $0x470] sm:$0xff]
    %v284 = vld [vmem:[#allocation2 + $0x478] sm:$0xff]
    %v285 = vld [vmem:[#allocation2 + $0x480] sm:$0xff]
    %v286 = vld [vmem:[#allocation2 + $0x488] sm:$0xff]
    %v287 = vld [vmem:[#allocation2 + $0x490] sm:$0xff]
    %v288 = vld [vmem:[#allocation2 + $0x498] sm:$0xff]
    %v289 = vld [vmem:[#allocation2 + $0x4a0] sm:$0xff]
    %v290 = vld [vmem:[#allocation2 + $0x4a8] sm:$0xff]
    %v291 = vld [vmem:[#allocation2 + $0x4b0] sm:$0xff]
    %v292 = vld [vmem:[#allocation2 + $0x4b8] sm:$0xff]
    %v293 = vld [vmem:[#allocation2 + $0x4c0] sm:$0xff]
    %v294 = vld [vmem:[#allocation2 + $0x4c8] sm:$0xff]
    %v295 = vld [vmem:[#allocation2 + $0x4d0] sm:$0xff]
    %v296 = vld [vmem:[#allocation2 + $0x4d8] sm:$0xff]
    %v297 = vld [vmem:[#allocation2 + $0x4e0] sm:$0xff]
    %v298 = vld [vmem:[#allocation2 + $0x4e8] sm:$0xff]
    %v299 = vld [vmem:[#allocation2 + $0x4f0] sm:$0xff]
    %v300 = vld [vmem:[#allocation2 + $0x4f8] sm:$0xff]
    %v301 = vld [vmem:[#allocation2 + $0x500] sm:$0xff]
    %v302 = vld [vmem:[#allocation2 + $0x508] sm:$0xff]
    %v303 = vld [vmem:[#allocation2 + $0x510] sm:$0xff]
    %v304 = vld [vmem:[#allocation2 + $0x518] sm:$0xff]
    %v305 = vld [vmem:[#allocation2 + $0x520] sm:$0xff]
    %v306 = vld [vmem:[#allocation2 + $0x528] sm:$0xff]
    %v307 = vld [vmem:[#allocation2 + $0x530] sm:$0xff]
    %v308 = vld [vmem:[#allocation2 + $0x538] sm:$0xff]
    %v309 = vld [vmem:[#allocation2 + $0x540] sm:$0xff]
    %v310 = vld [vmem:[#allocation2 + $0x548] sm:$0xff]
    %v311 = vld [vmem:[#allocation2 + $0x550] sm:$0xff]
    %v312 = vld [vmem:[#allocation2 + $0x558] sm:$0xff]
    %v313 = vld [vmem:[#allocation2 + $0x560] sm:$0xff]
    %v314 = vld [vmem:[#allocation2 + $0x568] sm:$0xff]
    %v315 = vld [vmem:[#allocation2 + $0x570] sm:$0xff]
    %v316 = vld [vmem:[#allocation2 + $0x578] sm:$0xff]
    %v317 = vld [vmem:[#allocation2 + $0x580] sm:$0xff]
    %v318 = vld [vmem:[#allocation2 + $0x588] sm:$0xff]
    %v319 = vld [vmem:[#allocation2 + $0x590] sm:$0xff]
    %v320 = vld [vmem:[#allocation2 + $0x598] sm:$0xff]
    %v321 = vld [vmem:[#allocation2 + $0x5a0] sm:$0xff]
    %v322 = vld [vmem:[#allocation2 + $0x5a8] sm:$0xff]
    %v323 = vld [vmem:[#allocation2 + $0x5b0] sm:$0xff]
    %v324 = vld [vmem:[#allocation2 + $0x5b8] sm:$0xff]
    %v325 = vld [vmem:[#allocation2 + $0x5c0] sm:$0xff]
    %v326 = vld [vmem:[#allocation2 + $0x5c8] sm:$0xff]
    %v327 = vld [vmem:[#allocation2 + $0x5d0] sm:$0xff]
    %v328 = vld [vmem:[#allocation2 + $0x5d8] sm:$0xff]
    %v329 = vld [vmem:[#allocation2 + $0x5e0] sm:$0xff]
    %v330 = vld [vmem:[#allocation2 + $0x5e8] sm:$0xff]
    %v331 = vld [vmem:[#allocation2 + $0x5f0] sm:$0xff]
    %v332 = vld [vmem:[#allocation2 + $0x5f8] sm:$0xff]
    %v333 = vld [vmem:[#allocation2 + $0x600] sm:$0xff]
    %v334 = vld [vmem:[#allocation2 + $0x608] sm:$0xff]
    %v335 = vld [vmem:[#allocation2 + $0x610] sm:$0xff]
    %v336 = vld [vmem:[#allocation2 + $0x618] sm:$0xff]
    %v337 = vld [vmem:[#allocation2 + $0x620] sm:$0xff]
    %v338 = vld [vmem:[#allocation2 + $0x628] sm:$0xff]
    %v339 = vld [vmem:[#allocation2 + $0x630] sm:$0xff]
    %v340 = vld [vmem:[#allocation2 + $0x638] sm:$0xff]
    %v341 = vld [vmem:[#allocation2 + $0x640] sm:$0xff]
    %v342 = vld [vmem:[#allocation2 + $0x648] sm:$0xff]
    %v343 = vld [vmem:[#allocation2 + $0x650] sm:$0xff]
    %v344 = vld [vmem:[#allocation2 + $0x658] sm:$0xff]
    %v345 = vld [vmem:[#allocation2 + $0x660] sm:$0xff]
    %v346 = vld [vmem:[#allocation2 + $0x668] sm:$0xff]
    %v347 = vld [vmem:[#allocation2 + $0x670] sm:$0xff]
    %v348 = vld [vmem:[#allocation2 + $0x678] sm:$0xff]
    %v349 = vld [vmem:[#allocation2 + $0x680] sm:$0xff]
    %v350 = vld [vmem:[#allocation2 + $0x688] sm:$0xff]
    %v351 = vld [vmem:[#allocation2 + $0x690] sm:$0xff]
    %v352 = vld [vmem:[#allocation2 + $0x698] sm:$0xff]
    %v353 = vld [vmem:[#allocation2 + $0x6a0] sm:$0xff]
    %v354 = vld [vmem:[#allocation2 + $0x6a8] sm:$0xff]
    %v355 = vld [vmem:[#allocation2 + $0x6b0] sm:$0xff]
    %v356 = vld [vmem:[#allocation2 + $0x6b8] sm:$0xff]
    %v357 = vld [vmem:[#allocation2 + $0x6c0] sm:$0xff]
    %v358 = vld [vmem:[#allocation2 + $0x6c8] sm:$0xff]
    %v359 = vld [vmem:[#allocation2 + $0x6d0] sm:$0xff]
    %v360 = vld [vmem:[#allocation2 + $0x6d8] sm:$0xff]
    %v361 = vld [vmem:[#allocation2 + $0x6e0] sm:$0xff]
    %v362 = vld [vmem:[#allocation2 + $0x6e8] sm:$0xff]
    %v363 = vld [vmem:[#allocation2 + $0x6f0] sm:$0xff]
    %v364 = vld [vmem:[#allocation2 + $0x6f8] sm:$0xff]
    %v366 = vlaneseq
    %v367 = vshrl.u32 %v366, 7
    %v368 = vsub.s32 0, %v367
    %v369 = vrot.slane %v140, %v368
    %v370 = vlaneseq
    %v371 = vshrl.u32 %v370, 7
    %v372 = vsub.s32 1, %v371
    %v373 = vrot.slane %v140, %v372
    %v374 = vlaneseq
    %v375 = vshrl.u32 %v374, 7
    %v376 = vsub.s32 2, %v375
    %v377 = vrot.slane %v140, %v376
    %v378 = vlaneseq
    %v379 = vshrl.u32 %v378, 7
    %v380 = vsub.s32 3, %v379
    %v381 = vrot.slane %v140, %v380
    %v390 = vunpack.c.l.b16 %v136
    %v391 = vunpack.c.h.b16 %v136
    %v392 = vunpack.c.l.b16 %v137
    %v393 = vunpack.c.h.b16 %v137
    %v394 = vunpack.c.l.b16 %v138
    %v395 = vunpack.c.h.b16 %v138
    %v396 = vunpack.c.l.b16 %v139
    %v397 = vpack.c.b16 %v390, %v390
    %v398 = vpack.c.b16 %v391, %v391
    %v399 = vpack.c.b16 %v392, %v392
    %v400 = vpack.c.b16 %v393, %v393
    %v401 = vpack.c.b16 %v394, %v394
    %v402 = vpack.c.b16 %v395, %v395
    %v403 = vpack.c.b16 %v396, %v396
    %v635 = vunpack.c.l.b16 %v141
    %v636 = vunpack.c.h.b16 %v141
    %v637 = vunpack.c.l.b16 %v142
    %v638 = vunpack.c.h.b16 %v142
    %v639 = vunpack.c.l.b16 %v143
    %v640 = vunpack.c.h.b16 %v143
    %v641 = vunpack.c.l.b16 %v144
    %v642 = vunpack.c.h.b16 %v144
    %v643 = vunpack.c.l.b16 %v145
    %v644 = vunpack.c.h.b16 %v145
    %v645 = vunpack.c.l.b16 %v146
    %v646 = vunpack.c.h.b16 %v146
    %v647 = vunpack.c.l.b16 %v147
    %v648 = vunpack.c.h.b16 %v147
    %v649 = vunpack.c.l.b16 %v148
    %v650 = vunpack.c.h.b16 %v148
    %v651 = vunpack.c.l.b16 %v149
    %v652 = vunpack.c.h.b16 %v149
    %v653 = vunpack.c.l.b16 %v150
    %v654 = vunpack.c.h.b16 %v150
    %v655 = vunpack.c.l.b16 %v151
    %v656 = vunpack.c.h.b16 %v151
    %v657 = vunpack.c.l.b16 %v152
    %v658 = vunpack.c.h.b16 %v152
    %v659 = vunpack.c.l.b16 %v153
    %v660 = vunpack.c.h.b16 %v153
    %v661 = vunpack.c.l.b16 %v154
    %v662 = vunpack.c.h.b16 %v154
    %v663 = vunpack.c.l.b16 %v155
    %v664 = vunpack.c.h.b16 %v155
    %v665 = vunpack.c.l.b16 %v156
    %v666 = vunpack.c.h.b16 %v156
    %v667 = vunpack.c.l.b16 %v157
    %v668 = vunpack.c.h.b16 %v157
    %v669 = vunpack.c.l.b16 %v158
    %v670 = vunpack.c.h.b16 %v158
    %v671 = vunpack.c.l.b16 %v159
    %v672 = vunpack.c.h.b16 %v159
    %v673 = vunpack.c.l.b16 %v160
    %v674 = vunpack.c.h.b16 %v160
    %v675 = vunpack.c.l.b16 %v161
    %v676 = vunpack.c.h.b16 %v161
    %v677 = vunpack.c.l.b16 %v162
    %v678 = vunpack.c.h.b16 %v162
    %v679 = vunpack.c.l.b16 %v163
    %v680 = vunpack.c.h.b16 %v163
    %v681 = vunpack.c.l.b16 %v164
    %v682 = vunpack.c.h.b16 %v164
    %v683 = vunpack.c.l.b16 %v165
    %v684 = vunpack.c.h.b16 %v165
    %v685 = vunpack.c.l.b16 %v166
    %v686 = vunpack.c.h.b16 %v166
    %v687 = vunpack.c.l.b16 %v167
    %v688 = vunpack.c.h.b16 %v167
    %v689 = vunpack.c.l.b16 %v168
    %v690 = vunpack.c.h.b16 %v168
    %v691 = vunpack.c.l.b16 %v169
    %v692 = vunpack.c.h.b16 %v169
    %v693 = vunpack.c.l.b16 %v170
    %v694 = vunpack.c.h.b16 %v170
    %v695 = vunpack.c.l.b16 %v171
    %v696 = vunpack.c.h.b16 %v171
    %v697 = vunpack.c.l.b16 %v172
    %v698 = vunpack.c.h.b16 %v172
    %v699 = vunpack.c.l.b16 %v173
    %v700 = vunpack.c.h.b16 %v173
    %v701 = vunpack.c.l.b16 %v174
    %v702 = vunpack.c.h.b16 %v174
    %v703 = vunpack.c.l.b16 %v175
    %v704 = vunpack.c.h.b16 %v175
    %v705 = vunpack.c.l.b16 %v176
    %v706 = vunpack.c.h.b16 %v176
    %v707 = vunpack.c.l.b16 %v177
    %v708 = vunpack.c.h.b16 %v177
    %v709 = vunpack.c.l.b16 %v178
    %v710 = vunpack.c.h.b16 %v178
    %v711 = vunpack.c.l.b16 %v179
    %v712 = vunpack.c.h.b16 %v179
    %v713 = vunpack.c.l.b16 %v180
    %v714 = vunpack.c.h.b16 %v180
    %v715 = vunpack.c.l.b16 %v181
    %v716 = vunpack.c.h.b16 %v181
    %v717 = vunpack.c.l.b16 %v182
    %v718 = vunpack.c.h.b16 %v182
    %v719 = vunpack.c.l.b16 %v183
    %v720 = vunpack.c.h.b16 %v183
    %v721 = vunpack.c.l.b16 %v184
    %v722 = vunpack.c.h.b16 %v184
    %v723 = vunpack.c.l.b16 %v185
    %v724 = vunpack.c.h.b16 %v185
    %v725 = vunpack.c.l.b16 %v186
    %v726 = vunpack.c.h.b16 %v186
    %v727 = vunpack.c.l.b16 %v187
    %v728 = vunpack.c.h.b16 %v187
    %v729 = vunpack.c.l.b16 %v188
    %v730 = vunpack.c.h.b16 %v188
    %v731 = vunpack.c.l.b16 %v189
    %v732 = vunpack.c.h.b16 %v189
    %v733 = vunpack.c.l.b16 %v190
    %v734 = vunpack.c.h.b16 %v190
    %v735 = vunpack.c.l.b16 %v191
    %v736 = vunpack.c.h.b16 %v191
    %v737 = vunpack.c.l.b16 %v192
    %v738 = vunpack.c.h.b16 %v192
    %v739 = vunpack.c.l.b16 %v193
    %v740 = vunpack.c.h.b16 %v193
    %v741 = vunpack.c.l.b16 %v194
    %v742 = vunpack.c.h.b16 %v194
    %v743 = vunpack.c.l.b16 %v195
    %v744 = vunpack.c.h.b16 %v195
    %v745 = vunpack.c.l.b16 %v196
    %v746 = vunpack.c.h.b16 %v196
    %v747 = vunpack.c.l.b16 %v197
    %v748 = vunpack.c.h.b16 %v197
    %v749 = vunpack.c.l.b16 %v198
    %v750 = vunpack.c.h.b16 %v198
    %v751 = vunpack.c.l.b16 %v199
    %v752 = vunpack.c.h.b16 %v199
    %v753 = vunpack.c.l.b16 %v200
    %v754 = vunpack.c.h.b16 %v200
    %v755 = vunpack.c.l.b16 %v201
    %v756 = vunpack.c.h.b16 %v201
    %v757 = vunpack.c.l.b16 %v202
    %v758 = vunpack.c.h.b16 %v202
    %v759 = vunpack.c.l.b16 %v203
    %v760 = vunpack.c.h.b16 %v203
    %v761 = vunpack.c.l.b16 %v204
    %v762 = vunpack.c.h.b16 %v204
    %v763 = vunpack.c.l.b16 %v205
    %v764 = vunpack.c.h.b16 %v205
    %v765 = vunpack.c.l.b16 %v206
    %v766 = vunpack.c.h.b16 %v206
    %v767 = vunpack.c.l.b16 %v207
    %v768 = vunpack.c.h.b16 %v207
    %v769 = vunpack.c.l.b16 %v208
    %v770 = vunpack.c.h.b16 %v208
    %v771 = vunpack.c.l.b16 %v209
    %v772 = vunpack.c.h.b16 %v209
    %v773 = vunpack.c.l.b16 %v210
    %v774 = vunpack.c.h.b16 %v210
    %v775 = vunpack.c.l.b16 %v211
    %v776 = vunpack.c.h.b16 %v211
    %v777 = vunpack.c.l.b16 %v212
    %v778 = vunpack.c.h.b16 %v212
    %v779 = vunpack.c.l.b16 %v213
    %v780 = vunpack.c.h.b16 %v213
    %v781 = vunpack.c.l.b16 %v214
    %v782 = vunpack.c.h.b16 %v214
    %v783 = vunpack.c.l.b16 %v215
    %v784 = vunpack.c.h.b16 %v215
    %v785 = vunpack.c.l.b16 %v216
    %v786 = vunpack.c.h.b16 %v216
    %v787 = vunpack.c.l.b16 %v217
    %v788 = vunpack.c.h.b16 %v217
    %v789 = vunpack.c.l.b16 %v218
    %v790 = vunpack.c.h.b16 %v218
    %v791 = vunpack.c.l.b16 %v219
    %v792 = vunpack.c.h.b16 %v219
    %v793 = vunpack.c.l.b16 %v220
    %v794 = vunpack.c.h.b16 %v220
    %v795 = vunpack.c.l.b16 %v221
    %v796 = vunpack.c.h.b16 %v221
    %v797 = vunpack.c.l.b16 %v222
    %v798 = vunpack.c.h.b16 %v222
    %v799 = vunpack.c.l.b16 %v223
    %v800 = vunpack.c.h.b16 %v223
    %v801 = vunpack.c.l.b16 %v224
    %v802 = vunpack.c.h.b16 %v224
    %v803 = vunpack.c.l.b16 %v225
    %v804 = vunpack.c.h.b16 %v225
    %v805 = vunpack.c.l.b16 %v226
    %v806 = vunpack.c.h.b16 %v226
    %v807 = vunpack.c.l.b16 %v227
    %v808 = vunpack.c.h.b16 %v227
    %v809 = vunpack.c.l.b16 %v228
    %v810 = vunpack.c.h.b16 %v228
    %v811 = vunpack.c.l.b16 %v229
    %v812 = vunpack.c.h.b16 %v229
    %v813 = vunpack.c.l.b16 %v230
    %v814 = vunpack.c.h.b16 %v230
    %v815 = vunpack.c.l.b16 %v231
    %v816 = vunpack.c.h.b16 %v231
    %v817 = vunpack.c.l.b16 %v232
    %v818 = vunpack.c.h.b16 %v232
    %v819 = vunpack.c.l.b16 %v233
    %v820 = vunpack.c.h.b16 %v233
    %v821 = vunpack.c.l.b16 %v234
    %v822 = vunpack.c.h.b16 %v234
    %v823 = vunpack.c.l.b16 %v235
    %v824 = vunpack.c.h.b16 %v235
    %v825 = vunpack.c.l.b16 %v236
    %v826 = vunpack.c.h.b16 %v236
    %v827 = vunpack.c.l.b16 %v237
    %v828 = vunpack.c.h.b16 %v237
    %v829 = vunpack.c.l.b16 %v238
    %v830 = vunpack.c.h.b16 %v238
    %v831 = vunpack.c.l.b16 %v239
    %v832 = vunpack.c.h.b16 %v239
    %v833 = vunpack.c.l.b16 %v240
    %v834 = vunpack.c.h.b16 %v240
    %v835 = vunpack.c.l.b16 %v241
    %v836 = vunpack.c.h.b16 %v241
    %v837 = vunpack.c.l.b16 %v242
    %v838 = vunpack.c.h.b16 %v242
    %v839 = vunpack.c.l.b16 %v243
    %v840 = vunpack.c.h.b16 %v243
    %v841 = vunpack.c.l.b16 %v244
    %v842 = vunpack.c.h.b16 %v244
    %v843 = vunpack.c.l.b16 %v245
    %v844 = vunpack.c.h.b16 %v245
    %v845 = vunpack.c.l.b16 %v246
    %v846 = vunpack.c.h.b16 %v246
    %v847 = vunpack.c.l.b16 %v247
    %v848 = vunpack.c.h.b16 %v247
    %v849 = vunpack.c.l.b16 %v248
    %v850 = vunpack.c.h.b16 %v248
    %v851 = vunpack.c.l.b16 %v249
    %v852 = vunpack.c.h.b16 %v249
    %v853 = vunpack.c.l.b16 %v250
    %v854 = vunpack.c.h.b16 %v250
    %v855 = vunpack.c.l.b16 %v251
    %v856 = vunpack.c.h.b16 %v251
    %v857 = vunpack.c.l.b16 %v252
    %v858 = vunpack.c.h.b16 %v252
    %v859 = vunpack.c.l.b16 %v253
    %v860 = vunpack.c.h.b16 %v253
    %v861 = vunpack.c.l.b16 %v254
    %v862 = vunpack.c.h.b16 %v254
    %v863 = vunpack.c.l.b16 %v255
    %v864 = vunpack.c.h.b16 %v255
    %v865 = vunpack.c.l.b16 %v256
    %v866 = vunpack.c.h.b16 %v256
    %v867 = vunpack.c.l.b16 %v257
    %v868 = vunpack.c.h.b16 %v257
    %v869 = vunpack.c.l.b16 %v258
    %v870 = vunpack.c.h.b16 %v258
    %v871 = vunpack.c.l.b16 %v259
    %v872 = vunpack.c.h.b16 %v259
    %v873 = vunpack.c.l.b16 %v260
    %v874 = vunpack.c.h.b16 %v260
    %v875 = vunpack.c.l.b16 %v261
    %v876 = vunpack.c.h.b16 %v261
    %v877 = vunpack.c.l.b16 %v262
    %v878 = vunpack.c.h.b16 %v262
    %v879 = vunpack.c.l.b16 %v263
    %v880 = vunpack.c.h.b16 %v263
    %v881 = vunpack.c.l.b16 %v264
    %v882 = vunpack.c.h.b16 %v264
    %v883 = vunpack.c.l.b16 %v265
    %v884 = vunpack.c.h.b16 %v265
    %v885 = vunpack.c.l.b16 %v266
    %v886 = vunpack.c.h.b16 %v266
    %v887 = vunpack.c.l.b16 %v267
    %v888 = vunpack.c.h.b16 %v267
    %v889 = vunpack.c.l.b16 %v268
    %v890 = vunpack.c.h.b16 %v268
    %v891 = vunpack.c.l.b16 %v269
    %v892 = vunpack.c.h.b16 %v269
    %v893 = vunpack.c.l.b16 %v270
    %v894 = vunpack.c.h.b16 %v270
    %v895 = vunpack.c.l.b16 %v271
    %v896 = vunpack.c.h.b16 %v271
    %v897 = vunpack.c.l.b16 %v272
    %v898 = vunpack.c.h.b16 %v272
    %v899 = vunpack.c.l.b16 %v273
    %v900 = vunpack.c.h.b16 %v273
    %v901 = vunpack.c.l.b16 %v274
    %v902 = vunpack.c.h.b16 %v274
    %v903 = vunpack.c.l.b16 %v275
    %v904 = vunpack.c.h.b16 %v275
    %v905 = vunpack.c.l.b16 %v276
    %v906 = vunpack.c.h.b16 %v276
    %v907 = vunpack.c.l.b16 %v277
    %v908 = vunpack.c.h.b16 %v277
    %v909 = vunpack.c.l.b16 %v278
    %v910 = vunpack.c.h.b16 %v278
    %v911 = vunpack.c.l.b16 %v279
    %v912 = vunpack.c.h.b16 %v279
    %v913 = vunpack.c.l.b16 %v280
    %v914 = vunpack.c.h.b16 %v280
    %v915 = vunpack.c.l.b16 %v281
    %v916 = vunpack.c.h.b16 %v281
    %v917 = vunpack.c.l.b16 %v282
    %v918 = vunpack.c.h.b16 %v282
    %v919 = vunpack.c.l.b16 %v283
    %v920 = vunpack.c.h.b16 %v283
    %v921 = vunpack.c.l.b16 %v284
    %v922 = vunpack.c.h.b16 %v284
    %v923 = vunpack.c.l.b16 %v285
    %v924 = vunpack.c.h.b16 %v285
    %v925 = vunpack.c.l.b16 %v286
    %v926 = vunpack.c.h.b16 %v286
    %v927 = vunpack.c.l.b16 %v287
    %v928 = vunpack.c.h.b16 %v287
    %v929 = vunpack.c.l.b16 %v288
    %v930 = vunpack.c.h.b16 %v288
    %v931 = vunpack.c.l.b16 %v289
    %v932 = vunpack.c.h.b16 %v289
    %v933 = vunpack.c.l.b16 %v290
    %v934 = vunpack.c.h.b16 %v290
    %v935 = vunpack.c.l.b16 %v291
    %v936 = vunpack.c.h.b16 %v291
    %v937 = vunpack.c.l.b16 %v292
    %v938 = vunpack.c.h.b16 %v292
    %v939 = vunpack.c.l.b16 %v293
    %v940 = vunpack.c.h.b16 %v293
    %v941 = vunpack.c.l.b16 %v294
    %v942 = vunpack.c.h.b16 %v294
    %v943 = vunpack.c.l.b16 %v295
    %v944 = vunpack.c.h.b16 %v295
    %v945 = vunpack.c.l.b16 %v296
    %v946 = vunpack.c.h.b16 %v296
    %v947 = vunpack.c.l.b16 %v297
    %v948 = vunpack.c.h.b16 %v297
    %v949 = vunpack.c.l.b16 %v298
    %v950 = vunpack.c.h.b16 %v298
    %v951 = vunpack.c.l.b16 %v299
    %v952 = vunpack.c.h.b16 %v299
    %v953 = vunpack.c.l.b16 %v300
    %v954 = vunpack.c.h.b16 %v300
    %v955 = vunpack.c.l.b16 %v301
    %v956 = vunpack.c.h.b16 %v301
    %v957 = vunpack.c.l.b16 %v302
    %v958 = vunpack.c.h.b16 %v302
    %v959 = vunpack.c.l.b16 %v303
    %v960 = vunpack.c.h.b16 %v303
    %v961 = vunpack.c.l.b16 %v304
    %v962 = vunpack.c.h.b16 %v304
    %v963 = vunpack.c.l.b16 %v305
    %v964 = vunpack.c.h.b16 %v305
    %v965 = vunpack.c.l.b16 %v306
    %v966 = vunpack.c.h.b16 %v306
    %v967 = vunpack.c.l.b16 %v307
    %v968 = vunpack.c.h.b16 %v307
    %v969 = vunpack.c.l.b16 %v308
    %v970 = vunpack.c.h.b16 %v308
    %v971 = vunpack.c.l.b16 %v309
    %v972 = vunpack.c.h.b16 %v309
    %v973 = vunpack.c.l.b16 %v310
    %v974 = vunpack.c.h.b16 %v310
    %v975 = vunpack.c.l.b16 %v311
    %v976 = vunpack.c.h.b16 %v311
    %v977 = vunpack.c.l.b16 %v312
    %v978 = vunpack.c.h.b16 %v312
    %v979 = vunpack.c.l.b16 %v313
    %v980 = vunpack.c.h.b16 %v313
    %v981 = vunpack.c.l.b16 %v314
    %v982 = vunpack.c.h.b16 %v314
    %v983 = vunpack.c.l.b16 %v315
    %v984 = vunpack.c.h.b16 %v315
    %v985 = vunpack.c.l.b16 %v316
    %v986 = vunpack.c.h.b16 %v316
    %v987 = vunpack.c.l.b16 %v317
    %v988 = vunpack.c.h.b16 %v317
    %v989 = vunpack.c.l.b16 %v318
    %v990 = vunpack.c.h.b16 %v318
    %v991 = vunpack.c.l.b16 %v319
    %v992 = vunpack.c.h.b16 %v319
    %v993 = vunpack.c.l.b16 %v320
    %v994 = vunpack.c.h.b16 %v320
    %v995 = vunpack.c.l.b16 %v321
    %v996 = vunpack.c.h.b16 %v321
    %v997 = vunpack.c.l.b16 %v322
    %v998 = vunpack.c.h.b16 %v322
    %v999 = vunpack.c.l.b16 %v323
    %v1000 = vunpack.c.h.b16 %v323
    %v1001 = vunpack.c.l.b16 %v324
    %v1002 = vunpack.c.h.b16 %v324
    %v1003 = vunpack.c.l.b16 %v325
    %v1004 = vunpack.c.h.b16 %v325
    %v1005 = vunpack.c.l.b16 %v326
    %v1006 = vunpack.c.h.b16 %v326
    %v1007 = vunpack.c.l.b16 %v327
    %v1008 = vunpack.c.h.b16 %v327
    %v1009 = vunpack.c.l.b16 %v328
    %v1010 = vunpack.c.h.b16 %v328
    %v1011 = vunpack.c.l.b16 %v329
    %v1012 = vunpack.c.h.b16 %v329
    %v1013 = vunpack.c.l.b16 %v330
    %v1014 = vunpack.c.h.b16 %v330
    %v1015 = vunpack.c.l.b16 %v331
    %v1016 = vunpack.c.h.b16 %v331
    %v1017 = vunpack.c.l.b16 %v332
    %v1018 = vunpack.c.h.b16 %v332
    %v1019 = vunpack.c.l.b16 %v333
    %v1020 = vunpack.c.h.b16 %v333
    %v1021 = vunpack.c.l.b16 %v334
    %v1022 = vunpack.c.h.b16 %v334
    %v1023 = vunpack.c.l.b16 %v335
    %v1024 = vunpack.c.h.b16 %v335
    %v1025 = vunpack.c.l.b16 %v336
    %v1026 = vunpack.c.h.b16 %v336
    %v1027 = vunpack.c.l.b16 %v337
    %v1028 = vunpack.c.h.b16 %v337
    %v1029 = vunpack.c.l.b16 %v338
    %v1030 = vunpack.c.h.b16 %v338
    %v1031 = vunpack.c.l.b16 %v339
    %v1032 = vunpack.c.h.b16 %v339
    %v1033 = vunpack.c.l.b16 %v340
    %v1034 = vunpack.c.h.b16 %v340
    %v1035 = vunpack.c.l.b16 %v341
    %v1036 = vunpack.c.h.b16 %v341
    %v1037 = vunpack.c.l.b16 %v342
    %v1038 = vunpack.c.h.b16 %v342
    %v1039 = vunpack.c.l.b16 %v343
    %v1040 = vunpack.c.h.b16 %v343
    %v1041 = vunpack.c.l.b16 %v344
    %v1042 = vunpack.c.h.b16 %v344
    %v1043 = vunpack.c.l.b16 %v345
    %v1044 = vunpack.c.h.b16 %v345
    %v1045 = vunpack.c.l.b16 %v346
    %v1046 = vunpack.c.h.b16 %v346
    %v1047 = vunpack.c.l.b16 %v347
    %v1048 = vunpack.c.h.b16 %v347
    %v1049 = vunpack.c.l.b16 %v348
    %v1050 = vunpack.c.h.b16 %v348
    %v1051 = vunpack.c.l.b16 %v349
    %v1052 = vunpack.c.h.b16 %v349
    %v1053 = vunpack.c.l.b16 %v350
    %v1054 = vunpack.c.h.b16 %v350
    %v1055 = vunpack.c.l.b16 %v351
    %v1056 = vunpack.c.h.b16 %v351
    %v1057 = vunpack.c.l.b16 %v352
    %v1058 = vunpack.c.h.b16 %v352
    %v1059 = vunpack.c.l.b16 %v353
    %v1060 = vunpack.c.h.b16 %v353
    %v1061 = vunpack.c.l.b16 %v354
    %v1062 = vunpack.c.h.b16 %v354
    %v1063 = vunpack.c.l.b16 %v355
    %v1064 = vunpack.c.h.b16 %v355
    %v1065 = vunpack.c.l.b16 %v356
    %v1066 = vunpack.c.h.b16 %v356
    %v1067 = vunpack.c.l.b16 %v357
    %v1068 = vunpack.c.h.b16 %v357
    %v1069 = vunpack.c.l.b16 %v358
    %v1070 = vunpack.c.h.b16 %v358
    %v1071 = vunpack.c.l.b16 %v359
    %v1072 = vunpack.c.h.b16 %v359
    %v1073 = vunpack.c.l.b16 %v360
    %v1074 = vunpack.c.h.b16 %v360
    %v1075 = vunpack.c.l.b16 %v361
    %v1076 = vunpack.c.h.b16 %v361
    %v1077 = vunpack.c.l.b16 %v362
    %v1078 = vunpack.c.h.b16 %v362
    %v1079 = vunpack.c.l.b16 %v363
    %v1080 = vunpack.c.h.b16 %v363
    %v1081 = vunpack.c.l.b16 %v364
    %v1082 = vunpack.c.h.b16 %v364
    %v1083 = vpack.c.b16 %v639, %v635
    %v1084 = vpack.c.b16 %v640, %v636
    %v1085 = vpack.c.b16 %v641, %v637
    %v1086 = vpack.c.b16 %v642, %v638
    %v1087 = vpack.c.b16 %v647, %v643
    %v1088 = vpack.c.b16 %v648, %v644
    %v1089 = vpack.c.b16 %v649, %v645
    %v1090 = vpack.c.b16 %v650, %v646
    %v1091 = vpack.c.b16 %v655, %v651
    %v1092 = vpack.c.b16 %v656, %v652
    %v1093 = vpack.c.b16 %v657, %v653
    %v1094 = vpack.c.b16 %v658, %v654
    %v1095 = vpack.c.b16 %v663, %v659
    %v1096 = vpack.c.b16 %v664, %v660
    %v1097 = vpack.c.b16 %v665, %v661
    %v1098 = vpack.c.b16 %v666, %v662
    %v1099 = vpack.c.b16 %v671, %v667
    %v1100 = vpack.c.b16 %v672, %v668
    %v1101 = vpack.c.b16 %v673, %v669
    %v1102 = vpack.c.b16 %v674, %v670
    %v1103 = vpack.c.b16 %v679, %v675
    %v1104 = vpack.c.b16 %v680, %v676
    %v1105 = vpack.c.b16 %v681, %v677
    %v1106 = vpack.c.b16 %v682, %v678
    %v1107 = vpack.c.b16 %v687, %v683
    %v1108 = vpack.c.b16 %v688, %v684
    %v1109 = vpack.c.b16 %v689, %v685
    %v1110 = vpack.c.b16 %v690, %v686
    %v1111 = vpack.c.b16 %v695, %v691
    %v1112 = vpack.c.b16 %v696, %v692
    %v1113 = vpack.c.b16 %v697, %v693
    %v1114 = vpack.c.b16 %v698, %v694
    %v1115 = vpack.c.b16 %v703, %v699
    %v1116 = vpack.c.b16 %v704, %v700
    %v1117 = vpack.c.b16 %v705, %v701
    %v1118 = vpack.c.b16 %v706, %v702
    %v1119 = vpack.c.b16 %v711, %v707
    %v1120 = vpack.c.b16 %v712, %v708
    %v1121 = vpack.c.b16 %v713, %v709
    %v1122 = vpack.c.b16 %v714, %v710
    %v1123 = vpack.c.b16 %v719, %v715
    %v1124 = vpack.c.b16 %v720, %v716
    %v1125 = vpack.c.b16 %v721, %v717
    %v1126 = vpack.c.b16 %v722, %v718
    %v1127 = vpack.c.b16 %v727, %v723
    %v1128 = vpack.c.b16 %v728, %v724
    %v1129 = vpack.c.b16 %v729, %v725
    %v1130 = vpack.c.b16 %v730, %v726
    %v1131 = vpack.c.b16 %v735, %v731
    %v1132 = vpack.c.b16 %v736, %v732
    %v1133 = vpack.c.b16 %v737, %v733
    %v1134 = vpack.c.b16 %v738, %v734
    %v1135 = vpack.c.b16 %v743, %v739
    %v1136 = vpack.c.b16 %v744, %v740
    %v1137 = vpack.c.b16 %v745, %v741
    %v1138 = vpack.c.b16 %v746, %v742
    %v1139 = vpack.c.b16 %v751, %v747
    %v1140 = vpack.c.b16 %v752, %v748
    %v1141 = vpack.c.b16 %v753, %v749
    %v1142 = vpack.c.b16 %v754, %v750
    %v1143 = vpack.c.b16 %v759, %v755
    %v1144 = vpack.c.b16 %v760, %v756
    %v1145 = vpack.c.b16 %v761, %v757
    %v1146 = vpack.c.b16 %v762, %v758
    %v1147 = vpack.c.b16 %v767, %v763
    %v1148 = vpack.c.b16 %v768, %v764
    %v1149 = vpack.c.b16 %v769, %v765
    %v1150 = vpack.c.b16 %v770, %v766
    %v1151 = vpack.c.b16 %v775, %v771
    %v1152 = vpack.c.b16 %v776, %v772
    %v1153 = vpack.c.b16 %v777, %v773
    %v1154 = vpack.c.b16 %v778, %v774
    %v1155 = vpack.c.b16 %v783, %v779
    %v1156 = vpack.c.b16 %v784, %v780
    %v1157 = vpack.c.b16 %v785, %v781
    %v1158 = vpack.c.b16 %v786, %v782
    %v1159 = vpack.c.b16 %v791, %v787
    %v1160 = vpack.c.b16 %v792, %v788
    %v1161 = vpack.c.b16 %v793, %v789
    %v1162 = vpack.c.b16 %v794, %v790
    %v1163 = vpack.c.b16 %v799, %v795
    %v1164 = vpack.c.b16 %v800, %v796
    %v1165 = vpack.c.b16 %v801, %v797
    %v1166 = vpack.c.b16 %v802, %v798
    %v1167 = vpack.c.b16 %v807, %v803
    %v1168 = vpack.c.b16 %v808, %v804
    %v1169 = vpack.c.b16 %v809, %v805
    %v1170 = vpack.c.b16 %v810, %v806
    %v1171 = vpack.c.b16 %v815, %v811
    %v1172 = vpack.c.b16 %v816, %v812
    %v1173 = vpack.c.b16 %v817, %v813
    %v1174 = vpack.c.b16 %v818, %v814
    %v1175 = vpack.c.b16 %v823, %v819
    %v1176 = vpack.c.b16 %v824, %v820
    %v1177 = vpack.c.b16 %v825, %v821
    %v1178 = vpack.c.b16 %v826, %v822
    %v1179 = vpack.c.b16 %v831, %v827
    %v1180 = vpack.c.b16 %v832, %v828
    %v1181 = vpack.c.b16 %v833, %v829
    %v1182 = vpack.c.b16 %v834, %v830
    %v1183 = vpack.c.b16 %v839, %v835
    %v1184 = vpack.c.b16 %v840, %v836
    %v1185 = vpack.c.b16 %v841, %v837
    %v1186 = vpack.c.b16 %v842, %v838
    %v1187 = vpack.c.b16 %v847, %v843
    %v1188 = vpack.c.b16 %v848, %v844
    %v1189 = vpack.c.b16 %v849, %v845
    %v1190 = vpack.c.b16 %v850, %v846
    %v1191 = vpack.c.b16 %v855, %v851
    %v1192 = vpack.c.b16 %v856, %v852
    %v1193 = vpack.c.b16 %v857, %v853
    %v1194 = vpack.c.b16 %v858, %v854
    %v1195 = vpack.c.b16 %v863, %v859
    %v1196 = vpack.c.b16 %v864, %v860
    %v1197 = vpack.c.b16 %v865, %v861
    %v1198 = vpack.c.b16 %v866, %v862
    %v1199 = vpack.c.b16 %v871, %v867
    %v1200 = vpack.c.b16 %v872, %v868
    %v1201 = vpack.c.b16 %v873, %v869
    %v1202 = vpack.c.b16 %v874, %v870
    %v1203 = vpack.c.b16 %v879, %v875
    %v1204 = vpack.c.b16 %v880, %v876
    %v1205 = vpack.c.b16 %v881, %v877
    %v1206 = vpack.c.b16 %v882, %v878
    %v1207 = vpack.c.b16 %v887, %v883
    %v1208 = vpack.c.b16 %v888, %v884
    %v1209 = vpack.c.b16 %v889, %v885
    %v1210 = vpack.c.b16 %v890, %v886
    %v1211 = vpack.c.b16 %v895, %v891
    %v1212 = vpack.c.b16 %v896, %v892
    %v1213 = vpack.c.b16 %v897, %v893
    %v1214 = vpack.c.b16 %v898, %v894
    %v1215 = vpack.c.b16 %v903, %v899
    %v1216 = vpack.c.b16 %v904, %v900
    %v1217 = vpack.c.b16 %v905, %v901
    %v1218 = vpack.c.b16 %v906, %v902
    %v1219 = vpack.c.b16 %v911, %v907
    %v1220 = vpack.c.b16 %v912, %v908
    %v1221 = vpack.c.b16 %v913, %v909
    %v1222 = vpack.c.b16 %v914, %v910
    %v1223 = vpack.c.b16 %v919, %v915
    %v1224 = vpack.c.b16 %v920, %v916
    %v1225 = vpack.c.b16 %v921, %v917
    %v1226 = vpack.c.b16 %v922, %v918
    %v1227 = vpack.c.b16 %v927, %v923
    %v1228 = vpack.c.b16 %v928, %v924
    %v1229 = vpack.c.b16 %v929, %v925
    %v1230 = vpack.c.b16 %v930, %v926
    %v1231 = vpack.c.b16 %v935, %v931
    %v1232 = vpack.c.b16 %v936, %v932
    %v1233 = vpack.c.b16 %v937, %v933
    %v1234 = vpack.c.b16 %v938, %v934
    %v1235 = vpack.c.b16 %v943, %v939
    %v1236 = vpack.c.b16 %v944, %v940
    %v1237 = vpack.c.b16 %v945, %v941
    %v1238 = vpack.c.b16 %v946, %v942
    %v1239 = vpack.c.b16 %v951, %v947
    %v1240 = vpack.c.b16 %v952, %v948
    %v1241 = vpack.c.b16 %v953, %v949
    %v1242 = vpack.c.b16 %v954, %v950
    %v1243 = vpack.c.b16 %v959, %v955
    %v1244 = vpack.c.b16 %v960, %v956
    %v1245 = vpack.c.b16 %v961, %v957
    %v1246 = vpack.c.b16 %v962, %v958
    %v1247 = vpack.c.b16 %v967, %v963
    %v1248 = vpack.c.b16 %v968, %v964
    %v1249 = vpack.c.b16 %v969, %v965
    %v1250 = vpack.c.b16 %v970, %v966
    %v1251 = vpack.c.b16 %v975, %v971
    %v1252 = vpack.c.b16 %v976, %v972
    %v1253 = vpack.c.b16 %v977, %v973
    %v1254 = vpack.c.b16 %v978, %v974
    %v1255 = vpack.c.b16 %v983, %v979
    %v1256 = vpack.c.b16 %v984, %v980
    %v1257 = vpack.c.b16 %v985, %v981
    %v1258 = vpack.c.b16 %v986, %v982
    %v1259 = vpack.c.b16 %v991, %v987
    %v1260 = vpack.c.b16 %v992, %v988
    %v1261 = vpack.c.b16 %v993, %v989
    %v1262 = vpack.c.b16 %v994, %v990
    %v1263 = vpack.c.b16 %v999, %v995
    %v1264 = vpack.c.b16 %v1000, %v996
    %v1265 = vpack.c.b16 %v1001, %v997
    %v1266 = vpack.c.b16 %v1002, %v998
    %v1267 = vpack.c.b16 %v1007, %v1003
    %v1268 = vpack.c.b16 %v1008, %v1004
    %v1269 = vpack.c.b16 %v1009, %v1005
    %v1270 = vpack.c.b16 %v1010, %v1006
    %v1271 = vpack.c.b16 %v1015, %v1011
    %v1272 = vpack.c.b16 %v1016, %v1012
    %v1273 = vpack.c.b16 %v1017, %v1013
    %v1274 = vpack.c.b16 %v1018, %v1014
    %v1275 = vpack.c.b16 %v1023, %v1019
    %v1276 = vpack.c.b16 %v1024, %v1020
    %v1277 = vpack.c.b16 %v1025, %v1021
    %v1278 = vpack.c.b16 %v1026, %v1022
    %v1279 = vpack.c.b16 %v1031, %v1027
    %v1280 = vpack.c.b16 %v1032, %v1028
    %v1281 = vpack.c.b16 %v1033, %v1029
    %v1282 = vpack.c.b16 %v1034, %v1030
    %v1283 = vpack.c.b16 %v1039, %v1035
    %v1284 = vpack.c.b16 %v1040, %v1036
    %v1285 = vpack.c.b16 %v1041, %v1037
    %v1286 = vpack.c.b16 %v1042, %v1038
    %v1287 = vpack.c.b16 %v1047, %v1043
    %v1288 = vpack.c.b16 %v1048, %v1044
    %v1289 = vpack.c.b16 %v1049, %v1045
    %v1290 = vpack.c.b16 %v1050, %v1046
    %v1291 = vpack.c.b16 %v1055, %v1051
    %v1292 = vpack.c.b16 %v1056, %v1052
    %v1293 = vpack.c.b16 %v1057, %v1053
    %v1294 = vpack.c.b16 %v1058, %v1054
    %v1295 = vpack.c.b16 %v1063, %v1059
    %v1296 = vpack.c.b16 %v1064, %v1060
    %v1297 = vpack.c.b16 %v1065, %v1061
    %v1298 = vpack.c.b16 %v1066, %v1062
    %v1299 = vpack.c.b16 %v1071, %v1067
    %v1300 = vpack.c.b16 %v1072, %v1068
    %v1301 = vpack.c.b16 %v1073, %v1069
    %v1302 = vpack.c.b16 %v1074, %v1070
    %v1303 = vpack.c.b16 %v1079, %v1075
    %v1304 = vpack.c.b16 %v1080, %v1076
    %v1305 = vpack.c.b16 %v1081, %v1077
    %v1306 = vpack.c.b16 %v1082, %v1078
    %1531 = vmatprep.subr.bf16.mxu0 %v1112
    %1532 = vmatpush1.bf16.msra.mxu0 %v1111
    %1533 = vmatprep.subr.bf16.mxu0 %v1108
    %1534 = vmatpush1.bf16.msra.mxu0 %v1107
    %1535 = vmatprep.subr.bf16.mxu0 %v1104
    %1536 = vmatpush1.bf16.msra.mxu0 %v1103
    %1537 = vmatprep.subr.bf16.mxu0 %v1100
    %1538 = vmatpush1.bf16.msra.mxu0 %v1099
    %1539 = vmatprep.subr.bf16.mxu0 %v1096
    %1540 = vmatpush1.bf16.msra.mxu0 %v1095
    %1541 = vmatprep.subr.bf16.mxu0 %v1092
    %1542 = vmatpush1.bf16.msra.mxu0 %v1091
    %1543 = vmatprep.subr.bf16.mxu0 %v1088
    %1544 = vmatpush1.bf16.msra.mxu0 %v1087
    %1545 = vmatprep.subr.bf16.mxu0 %v1084
    %1546 = vmatpush1.bf16.msra.mxu0 %v1083
    %1547 = vmatprep.subr.bf16.mxu0 %v1144
    %1548 = vmatpush2.bf16.msra.mxu0 %v1143
    %1549 = vmatprep.subr.bf16.mxu0 %v1140
    %1550 = vmatpush2.bf16.msra.mxu0 %v1139
    %1551 = vmatprep.subr.bf16.mxu0 %v1136
    %1552 = vmatpush2.bf16.msra.mxu0 %v1135
    %1553 = vmatprep.subr.bf16.mxu0 %v1132
    %1554 = vmatpush2.bf16.msra.mxu0 %v1131
    %1555 = vmatprep.subr.bf16.mxu0 %v1128
    %1556 = vmatpush2.bf16.msra.mxu0 %v1127
    %1557 = vmatprep.subr.bf16.mxu0 %v1124
    %1558 = vmatpush2.bf16.msra.mxu0 %v1123
    %1559 = vmatprep.subr.bf16.mxu0 %v1120
    %1560 = vmatpush2.bf16.msra.mxu0 %v1119
    %1561 = vmatprep.subr.bf16.mxu0 %v1116
    %1562 = vmatpush2.bf16.msra.mxu0 %v1115
    %1563 = vmatprep.mubr.bf16.mxu0 %v398
    %1564 = vmatmul.mubr.bf16.gmra.mxu0 %v397
    %v1565 = vpop.f32.mrf.mxu0
    %v1566 = vadd.f32 %v369, %v1565
    %v1567 = vpop.f32.mrf.mxu0
    %v1568 = vadd.f32 %v373, %v1567
    %v1569 = vpop.f32.mrf.mxu0
    %v1570 = vpop.f32.mrf.mxu0
    %1571 = vdwg.mxu0
    %1572 = vmatprep.subr.bf16.mxu0 %v1176
    %1573 = vmatpush1.bf16.msra.mxu0 %v1175
    %1574 = vmatprep.subr.bf16.mxu0 %v1172
    %1575 = vmatpush1.bf16.msra.mxu0 %v1171
    %1576 = vmatprep.subr.bf16.mxu0 %v1168
    %1577 = vmatpush1.bf16.msra.mxu0 %v1167
    %1578 = vmatprep.subr.bf16.mxu0 %v1164
    %1579 = vmatpush1.bf16.msra.mxu0 %v1163
    %1580 = vmatprep.subr.bf16.mxu0 %v1160
    %1581 = vmatpush1.bf16.msra.mxu0 %v1159
    %1582 = vmatprep.subr.bf16.mxu0 %v1156
    %1583 = vmatpush1.bf16.msra.mxu0 %v1155
    %1584 = vmatprep.subr.bf16.mxu0 %v1152
    %1585 = vmatpush1.bf16.msra.mxu0 %v1151
    %1586 = vmatprep.subr.bf16.mxu0 %v1148
    %1587 = vmatpush1.bf16.msra.mxu0 %v1147
    %1588 = vmatprep.subr.bf16.mxu0 %v1208
    %1589 = vmatpush2.bf16.msra.mxu0 %v1207
    %1590 = vmatprep.subr.bf16.mxu0 %v1204
    %1591 = vmatpush2.bf16.msra.mxu0 %v1203
    %1592 = vmatprep.subr.bf16.mxu0 %v1200
    %1593 = vmatpush2.bf16.msra.mxu0 %v1199
    %1594 = vmatprep.subr.bf16.mxu0 %v1196
    %1595 = vmatpush2.bf16.msra.mxu0 %v1195
    %1596 = vmatprep.subr.bf16.mxu0 %v1192
    %1597 = vmatpush2.bf16.msra.mxu0 %v1191
    %1598 = vmatprep.subr.bf16.mxu0 %v1188
    %1599 = vmatpush2.bf16.msra.mxu0 %v1187
    %1600 = vmatprep.subr.bf16.mxu0 %v1184
    %1601 = vmatpush2.bf16.msra.mxu0 %v1183
    %1602 = vmatprep.subr.bf16.mxu0 %v1180
    %1603 = vmatpush2.bf16.msra.mxu0 %v1179
    %1604 = vmatprep.mubr.bf16.mxu0 %v400
    %1605 = vmatmul.mubr.bf16.gmra.mxu0 %v399
    %v1606 = vpop.f32.mrf.mxu0
    %v1607 = vadd.f32 %v1566, %v1606
    %v1608 = vpop.f32.mrf.mxu0
    %v1609 = vadd.f32 %v1568, %v1608
    %v1610 = vpop.f32.mrf.mxu0
    %v1611 = vpop.f32.mrf.mxu0
    %1612 = vdwg.mxu0
    %1613 = vmatprep.subr.bf16.mxu0 %v1240
    %1614 = vmatpush1.bf16.msra.mxu0 %v1239
    %1615 = vmatprep.subr.bf16.mxu0 %v1236
    %1616 = vmatpush1.bf16.msra.mxu0 %v1235
    %1617 = vmatprep.subr.bf16.mxu0 %v1232
    %1618 = vmatpush1.bf16.msra.mxu0 %v1231
    %1619 = vmatprep.subr.bf16.mxu0 %v1228
    %1620 = vmatpush1.bf16.msra.mxu0 %v1227
    %1621 = vmatprep.subr.bf16.mxu0 %v1224
    %1622 = vmatpush1.bf16.msra.mxu0 %v1223
    %1623 = vmatprep.subr.bf16.mxu0 %v1220
    %1624 = vmatpush1.bf16.msra.mxu0 %v1219
    %1625 = vmatprep.subr.bf16.mxu0 %v1216
    %1626 = vmatpush1.bf16.msra.mxu0 %v1215
    %1627 = vmatprep.subr.bf16.mxu0 %v1212
    %1628 = vmatpush1.bf16.msra.mxu0 %v1211
    %1629 = vmatprep.subr.bf16.mxu0 %v1272
    %1630 = vmatpush2.bf16.msra.mxu0 %v1271
    %1631 = vmatprep.subr.bf16.mxu0 %v1268
    %1632 = vmatpush2.bf16.msra.mxu0 %v1267
    %1633 = vmatprep.subr.bf16.mxu0 %v1264
    %1634 = vmatpush2.bf16.msra.mxu0 %v1263
    %1635 = vmatprep.subr.bf16.mxu0 %v1260
    %1636 = vmatpush2.bf16.msra.mxu0 %v1259
    %1637 = vmatprep.subr.bf16.mxu0 %v1256
    %1638 = vmatpush2.bf16.msra.mxu0 %v1255
    %1639 = vmatprep.subr.bf16.mxu0 %v1252
    %1640 = vmatpush2.bf16.msra.mxu0 %v1251
    %1641 = vmatprep.subr.bf16.mxu0 %v1248
    %1642 = vmatpush2.bf16.msra.mxu0 %v1247
    %1643 = vmatprep.subr.bf16.mxu0 %v1244
    %1644 = vmatpush2.bf16.msra.mxu0 %v1243
    %1645 = vmatprep.mubr.bf16.mxu0 %v402
    %1646 = vmatmul.mubr.bf16.gmra.mxu0 %v401
    %v1647 = vpop.f32.mrf.mxu0
    %v1648 = vadd.f32 %v1607, %v1647
    %v1649 = vpop.f32.mrf.mxu0
    %v1650 = vadd.f32 %v1609, %v1649
    %v1651 = vpop.f32.mrf.mxu0
    %v1652 = vpop.f32.mrf.mxu0
    %1653 = vdwg.mxu0
    %1654 = vmatprep.subr.bf16.mxu0 %v1304
    %1655 = vmatpush1.bf16.msra.mxu0 %v1303
    %1656 = vmatprep.subr.bf16.mxu0 %v1300
    %1657 = vmatpush1.bf16.msra.mxu0 %v1299
    %1658 = vmatprep.subr.bf16.mxu0 %v1296
    %1659 = vmatpush1.bf16.msra.mxu0 %v1295
    %1660 = vmatprep.subr.bf16.mxu0 %v1292
    %1661 = vmatpush1.bf16.msra.mxu0 %v1291
    %1662 = vmatprep.subr.bf16.mxu0 %v1288
    %1663 = vmatpush1.bf16.msra.mxu0 %v1287
    %1664 = vmatprep.subr.bf16.mxu0 %v1284
    %1665 = vmatpush1.bf16.msra.mxu0 %v1283
    %1666 = vmatprep.subr.bf16.mxu0 %v1280
    %1667 = vmatpush1.bf16.msra.mxu0 %v1279
    %1668 = vmatprep.subr.bf16.mxu0 %v1276
    %1669 = vmatpush1.bf16.msra.mxu0 %v1275
    %1670 = vmatprep.subr.bf16.mxu0 0
    %1671 = vmatpush2.bf16.msra.mxu0 0
    %1672 = vmatprep.subr.bf16.mxu0 0
    %1673 = vmatpush2.bf16.msra.mxu0 0
    %1674 = vmatprep.subr.bf16.mxu0 0
    %1675 = vmatpush2.bf16.msra.mxu0 0
    %1676 = vmatprep.subr.bf16.mxu0 0
    %1677 = vmatpush2.bf16.msra.mxu0 0
    %1678 = vmatprep.subr.bf16.mxu0 0
    %1679 = vmatpush2.bf16.msra.mxu0 0
    %1680 = vmatprep.subr.bf16.mxu0 0
    %1681 = vmatpush2.bf16.msra.mxu0 0
    %1682 = vmatprep.subr.bf16.mxu0 0
    %1683 = vmatpush2.bf16.msra.mxu0 0
    %1684 = vmatprep.subr.bf16.mxu0 0
    %1685 = vmatpush2.bf16.msra.mxu0 0
    %1686 = vmatprep.mubr.bf16.mxu0 0
    %1687 = vmatmul.mubr.bf16.gmra.mxu0 %v403
    %v1688 = vpop.f32.mrf.mxu0
    %v1689 = vadd.f32 %v1648, %v1688
    %v1690 = vpop.f32.mrf.mxu0
    %v1691 = vadd.f32 %v1650, %v1690
    %v1692 = vpop.f32.mrf.mxu0
    %v1693 = vpop.f32.mrf.mxu0
    %1694 = vdwg.mxu0
    %1695 = vmatprep.subr.bf16.mxu0 %v1114
    %1696 = vmatpush1.bf16.msra.mxu0 %v1113
    %1697 = vmatprep.subr.bf16.mxu0 %v1110
    %1698 = vmatpush1.bf16.msra.mxu0 %v1109
    %1699 = vmatprep.subr.bf16.mxu0 %v1106
    %1700 = vmatpush1.bf16.msra.mxu0 %v1105
    %1701 = vmatprep.subr.bf16.mxu0 %v1102
    %1702 = vmatpush1.bf16.msra.mxu0 %v1101
    %1703 = vmatprep.subr.bf16.mxu0 %v1098
    %1704 = vmatpush1.bf16.msra.mxu0 %v1097
    %1705 = vmatprep.subr.bf16.mxu0 %v1094
    %1706 = vmatpush1.bf16.msra.mxu0 %v1093
    %1707 = vmatprep.subr.bf16.mxu0 %v1090
    %1708 = vmatpush1.bf16.msra.mxu0 %v1089
    %1709 = vmatprep.subr.bf16.mxu0 %v1086
    %1710 = vmatpush1.bf16.msra.mxu0 %v1085
    %1711 = vmatprep.subr.bf16.mxu0 %v1146
    %1712 = vmatpush2.bf16.msra.mxu0 %v1145
    %1713 = vmatprep.subr.bf16.mxu0 %v1142
    %1714 = vmatpush2.bf16.msra.mxu0 %v1141
    %1715 = vmatprep.subr.bf16.mxu0 %v1138
    %1716 = vmatpush2.bf16.msra.mxu0 %v1137
    %1717 = vmatprep.subr.bf16.mxu0 %v1134
    %1718 = vmatpush2.bf16.msra.mxu0 %v1133
    %1719 = vmatprep.subr.bf16.mxu0 %v1130
    %1720 = vmatpush2.bf16.msra.mxu0 %v1129
    %1721 = vmatprep.subr.bf16.mxu0 %v1126
    %1722 = vmatpush2.bf16.msra.mxu0 %v1125
    %1723 = vmatprep.subr.bf16.mxu0 %v1122
    %1724 = vmatpush2.bf16.msra.mxu0 %v1121
    %1725 = vmatprep.subr.bf16.mxu0 %v1118
    %1726 = vmatpush2.bf16.msra.mxu0 %v1117
    %1727 = vmatprep.mubr.bf16.mxu0 %v398
    %1728 = vmatmul.mubr.bf16.gmra.mxu0 %v397
    %v1729 = vpop.f32.mrf.mxu0
    %v1730 = vadd.f32 %v377, %v1729
    %v1731 = vpop.f32.mrf.mxu0
    %v1732 = vadd.f32 %v381, %v1731
    %v1733 = vpop.f32.mrf.mxu0
    %v1734 = vpop.f32.mrf.mxu0
    %1735 = vdwg.mxu0
    %1736 = vmatprep.subr.bf16.mxu0 %v1178
    %1737 = vmatpush1.bf16.msra.mxu0 %v1177
    %1738 = vmatprep.subr.bf16.mxu0 %v1174
    %1739 = vmatpush1.bf16.msra.mxu0 %v1173
    %1740 = vmatprep.subr.bf16.mxu0 %v1170
    %1741 = vmatpush1.bf16.msra.mxu0 %v1169
    %1742 = vmatprep.subr.bf16.mxu0 %v1166
    %1743 = vmatpush1.bf16.msra.mxu0 %v1165
    %1744 = vmatprep.subr.bf16.mxu0 %v1162
    %1745 = vmatpush1.bf16.msra.mxu0 %v1161
    %1746 = vmatprep.subr.bf16.mxu0 %v1158
    %1747 = vmatpush1.bf16.msra.mxu0 %v1157
    %1748 = vmatprep.subr.bf16.mxu0 %v1154
    %1749 = vmatpush1.bf16.msra.mxu0 %v1153
    %1750 = vmatprep.subr.bf16.mxu0 %v1150
    %1751 = vmatpush1.bf16.msra.mxu0 %v1149
    %1752 = vmatprep.subr.bf16.mxu0 %v1210
    %1753 = vmatpush2.bf16.msra.mxu0 %v1209
    %1754 = vmatprep.subr.bf16.mxu0 %v1206
    %1755 = vmatpush2.bf16.msra.mxu0 %v1205
    %1756 = vmatprep.subr.bf16.mxu0 %v1202
    %1757 = vmatpush2.bf16.msra.mxu0 %v1201
    %1758 = vmatprep.subr.bf16.mxu0 %v1198
    %1759 = vmatpush2.bf16.msra.mxu0 %v1197
    %1760 = vmatprep.subr.bf16.mxu0 %v1194
    %1761 = vmatpush2.bf16.msra.mxu0 %v1193
    %1762 = vmatprep.subr.bf16.mxu0 %v1190
    %1763 = vmatpush2.bf16.msra.mxu0 %v1189
    %1764 = vmatprep.subr.bf16.mxu0 %v1186
    %1765 = vmatpush2.bf16.msra.mxu0 %v1185
    %1766 = vmatprep.subr.bf16.mxu0 %v1182
    %1767 = vmatpush2.bf16.msra.mxu0 %v1181
    %1768 = vmatprep.mubr.bf16.mxu0 %v400
    %1769 = vmatmul.mubr.bf16.gmra.mxu0 %v399
    %v1770 = vpop.f32.mrf.mxu0
    %v1771 = vadd.f32 %v1730, %v1770
    %v1772 = vpop.f32.mrf.mxu0
    %v1773 = vadd.f32 %v1732, %v1772
    %v1774 = vpop.f32.mrf.mxu0
    %v1775 = vpop.f32.mrf.mxu0
    %1776 = vdwg.mxu0
    %1777 = vmatprep.subr.bf16.mxu0 %v1242
    %1778 = vmatpush1.bf16.msra.mxu0 %v1241
    %1779 = vmatprep.subr.bf16.mxu0 %v1238
    %1780 = vmatpush1.bf16.msra.mxu0 %v1237
    %1781 = vmatprep.subr.bf16.mxu0 %v1234
    %1782 = vmatpush1.bf16.msra.mxu0 %v1233
    %1783 = vmatprep.subr.bf16.mxu0 %v1230
    %1784 = vmatpush1.bf16.msra.mxu0 %v1229
    %1785 = vmatprep.subr.bf16.mxu0 %v1226
    %1786 = vmatpush1.bf16.msra.mxu0 %v1225
    %1787 = vmatprep.subr.bf16.mxu0 %v1222
    %1788 = vmatpush1.bf16.msra.mxu0 %v1221
    %1789 = vmatprep.subr.bf16.mxu0 %v1218
    %1790 = vmatpush1.bf16.msra.mxu0 %v1217
    %1791 = vmatprep.subr.bf16.mxu0 %v1214
    %1792 = vmatpush1.bf16.msra.mxu0 %v1213
    %1793 = vmatprep.subr.bf16.mxu0 %v1274
    %1794 = vmatpush2.bf16.msra.mxu0 %v1273
    %1795 = vmatprep.subr.bf16.mxu0 %v1270
    %1796 = vmatpush2.bf16.msra.mxu0 %v1269
    %1797 = vmatprep.subr.bf16.mxu0 %v1266
    %1798 = vmatpush2.bf16.msra.mxu0 %v1265
    %1799 = vmatprep.subr.bf16.mxu0 %v1262
    %1800 = vmatpush2.bf16.msra.mxu0 %v1261
    %1801 = vmatprep.subr.bf16.mxu0 %v1258
    %1802 = vmatpush2.bf16.msra.mxu0 %v1257
    %1803 = vmatprep.subr.bf16.mxu0 %v1254
    %1804 = vmatpush2.bf16.msra.mxu0 %v1253
    %1805 = vmatprep.subr.bf16.mxu0 %v1250
    %1806 = vmatpush2.bf16.msra.mxu0 %v1249
    %1807 = vmatprep.subr.bf16.mxu0 %v1246
    %1808 = vmatpush2.bf16.msra.mxu0 %v1245
    %1809 = vmatprep.mubr.bf16.mxu0 %v402
    %1810 = vmatmul.mubr.bf16.gmra.mxu0 %v401
    %v1811 = vpop.f32.mrf.mxu0
    %v1812 = vadd.f32 %v1771, %v1811
    %v1813 = vpop.f32.mrf.mxu0
    %v1814 = vadd.f32 %v1773, %v1813
    %v1815 = vpop.f32.mrf.mxu0
    %v1816 = vpop.f32.mrf.mxu0
    %1817 = vdwg.mxu0
    %1818 = vmatprep.subr.bf16.mxu0 %v1306
    %1819 = vmatpush1.bf16.msra.mxu0 %v1305
    %1820 = vmatprep.subr.bf16.mxu0 %v1302
    %1821 = vmatpush1.bf16.msra.mxu0 %v1301
    %1822 = vmatprep.subr.bf16.mxu0 %v1298
    %1823 = vmatpush1.bf16.msra.mxu0 %v1297
    %1824 = vmatprep.subr.bf16.mxu0 %v1294
    %1825 = vmatpush1.bf16.msra.mxu0 %v1293
    %1826 = vmatprep.subr.bf16.mxu0 %v1290
    %1827 = vmatpush1.bf16.msra.mxu0 %v1289
    %1828 = vmatprep.subr.bf16.mxu0 %v1286
    %1829 = vmatpush1.bf16.msra.mxu0 %v1285
    %1830 = vmatprep.subr.bf16.mxu0 %v1282
    %1831 = vmatpush1.bf16.msra.mxu0 %v1281
    %1832 = vmatprep.subr.bf16.mxu0 %v1278
    %1833 = vmatpush1.bf16.msra.mxu0 %v1277
    %1834 = vmatprep.subr.bf16.mxu0 0
    %1835 = vmatpush2.bf16.msra.mxu0 0
    %1836 = vmatprep.subr.bf16.mxu0 0
    %1837 = vmatpush2.bf16.msra.mxu0 0
    %1838 = vmatprep.subr.bf16.mxu0 0
    %1839 = vmatpush2.bf16.msra.mxu0 0
    %1840 = vmatprep.subr.bf16.mxu0 0
    %1841 = vmatpush2.bf16.msra.mxu0 0
    %1842 = vmatprep.subr.bf16.mxu0 0
    %1843 = vmatpush2.bf16.msra.mxu0 0
    %1844 = vmatprep.subr.bf16.mxu0 0
    %1845 = vmatpush2.bf16.msra.mxu0 0
    %1846 = vmatprep.subr.bf16.mxu0 0
    %1847 = vmatpush2.bf16.msra.mxu0 0
    %1848 = vmatprep.subr.bf16.mxu0 0
    %1849 = vmatpush2.bf16.msra.mxu0 0
    %1850 = vmatprep.mubr.bf16.mxu0 0
    %1851 = vmatmul.mubr.bf16.gmra.mxu0 %v403
    %v1852 = vpop.f32.mrf.mxu0
    %v1853 = vadd.f32 %v1812, %v1852
    %v1854 = vpop.f32.mrf.mxu0
    %v1855 = vadd.f32 %v1814, %v1854
    %v1856 = vpop.f32.mrf.mxu0
    %v1857 = vpop.f32.mrf.mxu0
    %1858 = vdwg.mxu0
    %v1859 = vmax.f32 %v1689, 0.0
    %v1860 = vmax.f32 %v1691, 0.0
    %v1861 = vmax.f32 %v1853, 0.0
    %v1862 = vmax.f32 %v1855, 0.0
    %v1863 = vpack.c.bf16 %v1859, %v1859
    %v1864 = vpack.c.bf16 %v1860, %v1860
    %v1865 = vpack.c.bf16 %v1861, %v1861
    %v1866 = vpack.c.bf16 %v1862, %v1862
    %v1867 = vld [vmem:[%s2 + $0x4] sm:$0xf]
    %v1868 = vld [vmem:[#allocation4] sm:$0xff]
    %v1869 = vld [vmem:[#allocation4 + $0x8] sm:$0xff]
    %v1870 = vld [vmem:[#allocation4 + $0x10] sm:$0xff]
    %v1871 = vld [vmem:[#allocation4 + $0x18] sm:$0xff]
    %v1872 = vld [vmem:[#allocation4 + $0x20] sm:$0xff]
    %v1873 = vld [vmem:[#allocation4 + $0x28] sm:$0xff]
    %v1874 = vld [vmem:[#allocation4 + $0x30] sm:$0xff]
    %v1875 = vld [vmem:[#allocation4 + $0x38] sm:$0xff]
    %v1876 = vld [vmem:[#allocation4 + $0x40] sm:$0xff]
    %v1877 = vld [vmem:[#allocation4 + $0x48] sm:$0xff]
    %v1878 = vld [vmem:[#allocation4 + $0x50] sm:$0xff]
    %v1879 = vld [vmem:[#allocation4 + $0x58] sm:$0xff]
    %v1880 = vld [vmem:[#allocation4 + $0x60] sm:$0xff]
    %v1881 = vld [vmem:[#allocation4 + $0x68] sm:$0xff]
    %v1882 = vld [vmem:[#allocation4 + $0x70] sm:$0xff]
    %v1883 = vld [vmem:[#allocation4 + $0x78] sm:$0xff]
    %v1884 = vld [vmem:[#allocation4 + $0x80] sm:$0xff]
    %v1885 = vld [vmem:[#allocation4 + $0x88] sm:$0xff]
    %v1886 = vld [vmem:[#allocation4 + $0x90] sm:$0xff]
    %v1887 = vld [vmem:[#allocation4 + $0x98] sm:$0xff]
    %v1888 = vld [vmem:[#allocation4 + $0xa0] sm:$0xff]
    %v1889 = vld [vmem:[#allocation4 + $0xa8] sm:$0xff]
    %v1890 = vld [vmem:[#allocation4 + $0xb0] sm:$0xff]
    %v1891 = vld [vmem:[#allocation4 + $0xb8] sm:$0xff]
    %v1892 = vld [vmem:[#allocation4 + $0xc0] sm:$0xff]
    %v1893 = vld [vmem:[#allocation4 + $0xc8] sm:$0xff]
    %v1894 = vld [vmem:[#allocation4 + $0xd0] sm:$0xff]
    %v1895 = vld [vmem:[#allocation4 + $0xd8] sm:$0xff]
    %v1896 = vld [vmem:[#allocation4 + $0xe0] sm:$0xff]
    %v1897 = vld [vmem:[#allocation4 + $0xe8] sm:$0xff]
    %v1898 = vld [vmem:[#allocation4 + $0xf0] sm:$0xff]
    %v1899 = vld [vmem:[#allocation4 + $0xf8] sm:$0xff]
    %v1900 = vld [vmem:[#allocation4 + $0x100] sm:$0xff]
    %v1901 = vld [vmem:[#allocation4 + $0x108] sm:$0xff]
    %v1902 = vld [vmem:[#allocation4 + $0x110] sm:$0xff]
    %v1903 = vld [vmem:[#allocation4 + $0x118] sm:$0xff]
    %v1904 = vld [vmem:[#allocation4 + $0x120] sm:$0xff]
    %v1905 = vld [vmem:[#allocation4 + $0x128] sm:$0xff]
    %v1906 = vld [vmem:[#allocation4 + $0x130] sm:$0xff]
    %v1907 = vld [vmem:[#allocation4 + $0x138] sm:$0xff]
    %v1908 = vld [vmem:[#allocation4 + $0x140] sm:$0xff]
    %v1909 = vld [vmem:[#allocation4 + $0x148] sm:$0xff]
    %v1910 = vld [vmem:[#allocation4 + $0x150] sm:$0xff]
    %v1911 = vld [vmem:[#allocation4 + $0x158] sm:$0xff]
    %v1912 = vld [vmem:[#allocation4 + $0x160] sm:$0xff]
    %v1913 = vld [vmem:[#allocation4 + $0x168] sm:$0xff]
    %v1914 = vld [vmem:[#allocation4 + $0x170] sm:$0xff]
    %v1915 = vld [vmem:[#allocation4 + $0x178] sm:$0xff]
    %v1916 = vld [vmem:[#allocation4 + $0x180] sm:$0xff]
    %v1917 = vld [vmem:[#allocation4 + $0x188] sm:$0xff]
    %v1918 = vld [vmem:[#allocation4 + $0x190] sm:$0xff]
    %v1919 = vld [vmem:[#allocation4 + $0x198] sm:$0xff]
    %v1920 = vld [vmem:[#allocation4 + $0x1a0] sm:$0xff]
    %v1921 = vld [vmem:[#allocation4 + $0x1a8] sm:$0xff]
    %v1922 = vld [vmem:[#allocation4 + $0x1b0] sm:$0xff]
    %v1923 = vld [vmem:[#allocation4 + $0x1b8] sm:$0xff]
    %v1924 = vld [vmem:[#allocation4 + $0x1c0] sm:$0xff]
    %v1925 = vld [vmem:[#allocation4 + $0x1c8] sm:$0xff]
    %v1926 = vld [vmem:[#allocation4 + $0x1d0] sm:$0xff]
    %v1927 = vld [vmem:[#allocation4 + $0x1d8] sm:$0xff]
    %v1928 = vld [vmem:[#allocation4 + $0x1e0] sm:$0xff]
    %v1929 = vld [vmem:[#allocation4 + $0x1e8] sm:$0xff]
    %v1930 = vld [vmem:[#allocation4 + $0x1f0] sm:$0xff]
    %v1931 = vld [vmem:[#allocation4 + $0x1f8] sm:$0xff]
    %v1932 = vld [vmem:[#allocation4 + $0x200] sm:$0xff]
    %v1933 = vld [vmem:[#allocation4 + $0x208] sm:$0xff]
    %v1934 = vld [vmem:[#allocation4 + $0x210] sm:$0xff]
    %v1935 = vld [vmem:[#allocation4 + $0x218] sm:$0xff]
    %v1936 = vld [vmem:[#allocation4 + $0x220] sm:$0xff]
    %v1937 = vld [vmem:[#allocation4 + $0x228] sm:$0xff]
    %v1938 = vld [vmem:[#allocation4 + $0x230] sm:$0xff]
    %v1939 = vld [vmem:[#allocation4 + $0x238] sm:$0xff]
    %v1940 = vld [vmem:[#allocation4 + $0x240] sm:$0xff]
    %v1941 = vld [vmem:[#allocation4 + $0x248] sm:$0xff]
    %v1942 = vld [vmem:[#allocation4 + $0x250] sm:$0xff]
    %v1943 = vld [vmem:[#allocation4 + $0x258] sm:$0xff]
    %v1944 = vld [vmem:[#allocation4 + $0x260] sm:$0xff]
    %v1945 = vld [vmem:[#allocation4 + $0x268] sm:$0xff]
    %v1946 = vld [vmem:[#allocation4 + $0x270] sm:$0xff]
    %v1947 = vld [vmem:[#allocation4 + $0x278] sm:$0xff]
    %v1948 = vld [vmem:[#allocation4 + $0x280] sm:$0xff]
    %v1949 = vld [vmem:[#allocation4 + $0x288] sm:$0xff]
    %v1950 = vld [vmem:[#allocation4 + $0x290] sm:$0xff]
    %v1951 = vld [vmem:[#allocation4 + $0x298] sm:$0xff]
    %v1952 = vld [vmem:[#allocation4 + $0x2a0] sm:$0xff]
    %v1953 = vld [vmem:[#allocation4 + $0x2a8] sm:$0xff]
    %v1954 = vld [vmem:[#allocation4 + $0x2b0] sm:$0xff]
    %v1955 = vld [vmem:[#allocation4 + $0x2b8] sm:$0xff]
    %v1956 = vld [vmem:[#allocation4 + $0x2c0] sm:$0xff]
    %v1957 = vld [vmem:[#allocation4 + $0x2c8] sm:$0xff]
    %v1958 = vld [vmem:[#allocation4 + $0x2d0] sm:$0xff]
    %v1959 = vld [vmem:[#allocation4 + $0x2d8] sm:$0xff]
    %v1960 = vld [vmem:[#allocation4 + $0x2e0] sm:$0xff]
    %v1961 = vld [vmem:[#allocation4 + $0x2e8] sm:$0xff]
    %v1962 = vld [vmem:[#allocation4 + $0x2f0] sm:$0xff]
    %v1963 = vld [vmem:[#allocation4 + $0x2f8] sm:$0xff]
    %v1964 = vld [vmem:[#allocation4 + $0x300] sm:$0xff]
    %v1965 = vld [vmem:[#allocation4 + $0x308] sm:$0xff]
    %v1966 = vld [vmem:[#allocation4 + $0x310] sm:$0xff]
    %v1967 = vld [vmem:[#allocation4 + $0x318] sm:$0xff]
    %v1968 = vld [vmem:[#allocation4 + $0x320] sm:$0xff]
    %v1969 = vld [vmem:[#allocation4 + $0x328] sm:$0xff]
    %v1970 = vld [vmem:[#allocation4 + $0x330] sm:$0xff]
    %v1971 = vld [vmem:[#allocation4 + $0x338] sm:$0xff]
    %v1972 = vld [vmem:[#allocation4 + $0x340] sm:$0xff]
    %v1973 = vld [vmem:[#allocation4 + $0x348] sm:$0xff]
    %v1974 = vld [vmem:[#allocation4 + $0x350] sm:$0xff]
    %v1975 = vld [vmem:[#allocation4 + $0x358] sm:$0xff]
    %v1976 = vld [vmem:[#allocation4 + $0x360] sm:$0xff]
    %v1977 = vld [vmem:[#allocation4 + $0x368] sm:$0xff]
    %v1978 = vld [vmem:[#allocation4 + $0x370] sm:$0xff]
    %v1979 = vld [vmem:[#allocation4 + $0x378] sm:$0xff]
    %v1980 = vld [vmem:[#allocation4 + $0x380] sm:$0xff]
    %v1981 = vld [vmem:[#allocation4 + $0x388] sm:$0xff]
    %v1982 = vld [vmem:[#allocation4 + $0x390] sm:$0xff]
    %v1983 = vld [vmem:[#allocation4 + $0x398] sm:$0xff]
    %v1984 = vld [vmem:[#allocation4 + $0x3a0] sm:$0xff]
    %v1985 = vld [vmem:[#allocation4 + $0x3a8] sm:$0xff]
    %v1986 = vld [vmem:[#allocation4 + $0x3b0] sm:$0xff]
    %v1987 = vld [vmem:[#allocation4 + $0x3b8] sm:$0xff]
    %v1988 = vld [vmem:[#allocation4 + $0x3c0] sm:$0xff]
    %v1989 = vld [vmem:[#allocation4 + $0x3c8] sm:$0xff]
    %v1990 = vld [vmem:[#allocation4 + $0x3d0] sm:$0xff]
    %v1991 = vld [vmem:[#allocation4 + $0x3d8] sm:$0xff]
    %v1992 = vld [vmem:[#allocation4 + $0x3e0] sm:$0xff]
    %v1993 = vld [vmem:[#allocation4 + $0x3e8] sm:$0xff]
    %v1994 = vld [vmem:[#allocation4 + $0x3f0] sm:$0xff]
    %v1995 = vld [vmem:[#allocation4 + $0x3f8] sm:$0xff]
    %v1997 = vlaneseq
    %v1998 = vshrl.u32 %v1997, 7
    %v1999 = vsub.s32 0, %v1998
    %v2000 = vrot.slane %v1867, %v1999
    %v2001 = vlaneseq
    %v2002 = vshrl.u32 %v2001, 7
    %v2003 = vsub.s32 1, %v2002
    %v2004 = vrot.slane %v1867, %v2003
    %v2005 = vlaneseq
    %v2006 = vshrl.u32 %v2005, 7
    %v2007 = vsub.s32 2, %v2006
    %v2008 = vrot.slane %v1867, %v2007
    %v2009 = vlaneseq
    %v2010 = vshrl.u32 %v2009, 7
    %v2011 = vsub.s32 3, %v2010
    %v2012 = vrot.slane %v1867, %v2011
    %v2145 = vunpack.c.l.b16 %v1868
    %v2146 = vunpack.c.h.b16 %v1868
    %v2147 = vunpack.c.l.b16 %v1869
    %v2148 = vunpack.c.h.b16 %v1869
    %v2149 = vunpack.c.l.b16 %v1870
    %v2150 = vunpack.c.h.b16 %v1870
    %v2151 = vunpack.c.l.b16 %v1871
    %v2152 = vunpack.c.h.b16 %v1871
    %v2153 = vunpack.c.l.b16 %v1872
    %v2154 = vunpack.c.h.b16 %v1872
    %v2155 = vunpack.c.l.b16 %v1873
    %v2156 = vunpack.c.h.b16 %v1873
    %v2157 = vunpack.c.l.b16 %v1874
    %v2158 = vunpack.c.h.b16 %v1874
    %v2159 = vunpack.c.l.b16 %v1875
    %v2160 = vunpack.c.h.b16 %v1875
    %v2161 = vunpack.c.l.b16 %v1876
    %v2162 = vunpack.c.h.b16 %v1876
    %v2163 = vunpack.c.l.b16 %v1877
    %v2164 = vunpack.c.h.b16 %v1877
    %v2165 = vunpack.c.l.b16 %v1878
    %v2166 = vunpack.c.h.b16 %v1878
    %v2167 = vunpack.c.l.b16 %v1879
    %v2168 = vunpack.c.h.b16 %v1879
    %v2169 = vunpack.c.l.b16 %v1880
    %v2170 = vunpack.c.h.b16 %v1880
    %v2171 = vunpack.c.l.b16 %v1881
    %v2172 = vunpack.c.h.b16 %v1881
    %v2173 = vunpack.c.l.b16 %v1882
    %v2174 = vunpack.c.h.b16 %v1882
    %v2175 = vunpack.c.l.b16 %v1883
    %v2176 = vunpack.c.h.b16 %v1883
    %v2177 = vunpack.c.l.b16 %v1884
    %v2178 = vunpack.c.h.b16 %v1884
    %v2179 = vunpack.c.l.b16 %v1885
    %v2180 = vunpack.c.h.b16 %v1885
    %v2181 = vunpack.c.l.b16 %v1886
    %v2182 = vunpack.c.h.b16 %v1886
    %v2183 = vunpack.c.l.b16 %v1887
    %v2184 = vunpack.c.h.b16 %v1887
    %v2185 = vunpack.c.l.b16 %v1888
    %v2186 = vunpack.c.h.b16 %v1888
    %v2187 = vunpack.c.l.b16 %v1889
    %v2188 = vunpack.c.h.b16 %v1889
    %v2189 = vunpack.c.l.b16 %v1890
    %v2190 = vunpack.c.h.b16 %v1890
    %v2191 = vunpack.c.l.b16 %v1891
    %v2192 = vunpack.c.h.b16 %v1891
    %v2193 = vunpack.c.l.b16 %v1892
    %v2194 = vunpack.c.h.b16 %v1892
    %v2195 = vunpack.c.l.b16 %v1893
    %v2196 = vunpack.c.h.b16 %v1893
    %v2197 = vunpack.c.l.b16 %v1894
    %v2198 = vunpack.c.h.b16 %v1894
    %v2199 = vunpack.c.l.b16 %v1895
    %v2200 = vunpack.c.h.b16 %v1895
    %v2201 = vunpack.c.l.b16 %v1896
    %v2202 = vunpack.c.h.b16 %v1896
    %v2203 = vunpack.c.l.b16 %v1897
    %v2204 = vunpack.c.h.b16 %v1897
    %v2205 = vunpack.c.l.b16 %v1898
    %v2206 = vunpack.c.h.b16 %v1898
    %v2207 = vunpack.c.l.b16 %v1899
    %v2208 = vunpack.c.h.b16 %v1899
    %v2209 = vunpack.c.l.b16 %v1900
    %v2210 = vunpack.c.h.b16 %v1900
    %v2211 = vunpack.c.l.b16 %v1901
    %v2212 = vunpack.c.h.b16 %v1901
    %v2213 = vunpack.c.l.b16 %v1902
    %v2214 = vunpack.c.h.b16 %v1902
    %v2215 = vunpack.c.l.b16 %v1903
    %v2216 = vunpack.c.h.b16 %v1903
    %v2217 = vunpack.c.l.b16 %v1904
    %v2218 = vunpack.c.h.b16 %v1904
    %v2219 = vunpack.c.l.b16 %v1905
    %v2220 = vunpack.c.h.b16 %v1905
    %v2221 = vunpack.c.l.b16 %v1906
    %v2222 = vunpack.c.h.b16 %v1906
    %v2223 = vunpack.c.l.b16 %v1907
    %v2224 = vunpack.c.h.b16 %v1907
    %v2225 = vunpack.c.l.b16 %v1908
    %v2226 = vunpack.c.h.b16 %v1908
    %v2227 = vunpack.c.l.b16 %v1909
    %v2228 = vunpack.c.h.b16 %v1909
    %v2229 = vunpack.c.l.b16 %v1910
    %v2230 = vunpack.c.h.b16 %v1910
    %v2231 = vunpack.c.l.b16 %v1911
    %v2232 = vunpack.c.h.b16 %v1911
    %v2233 = vunpack.c.l.b16 %v1912
    %v2234 = vunpack.c.h.b16 %v1912
    %v2235 = vunpack.c.l.b16 %v1913
    %v2236 = vunpack.c.h.b16 %v1913
    %v2237 = vunpack.c.l.b16 %v1914
    %v2238 = vunpack.c.h.b16 %v1914
    %v2239 = vunpack.c.l.b16 %v1915
    %v2240 = vunpack.c.h.b16 %v1915
    %v2241 = vunpack.c.l.b16 %v1916
    %v2242 = vunpack.c.h.b16 %v1916
    %v2243 = vunpack.c.l.b16 %v1917
    %v2244 = vunpack.c.h.b16 %v1917
    %v2245 = vunpack.c.l.b16 %v1918
    %v2246 = vunpack.c.h.b16 %v1918
    %v2247 = vunpack.c.l.b16 %v1919
    %v2248 = vunpack.c.h.b16 %v1919
    %v2249 = vunpack.c.l.b16 %v1920
    %v2250 = vunpack.c.h.b16 %v1920
    %v2251 = vunpack.c.l.b16 %v1921
    %v2252 = vunpack.c.h.b16 %v1921
    %v2253 = vunpack.c.l.b16 %v1922
    %v2254 = vunpack.c.h.b16 %v1922
    %v2255 = vunpack.c.l.b16 %v1923
    %v2256 = vunpack.c.h.b16 %v1923
    %v2257 = vunpack.c.l.b16 %v1924
    %v2258 = vunpack.c.h.b16 %v1924
    %v2259 = vunpack.c.l.b16 %v1925
    %v2260 = vunpack.c.h.b16 %v1925
    %v2261 = vunpack.c.l.b16 %v1926
    %v2262 = vunpack.c.h.b16 %v1926
    %v2263 = vunpack.c.l.b16 %v1927
    %v2264 = vunpack.c.h.b16 %v1927
    %v2265 = vunpack.c.l.b16 %v1928
    %v2266 = vunpack.c.h.b16 %v1928
    %v2267 = vunpack.c.l.b16 %v1929
    %v2268 = vunpack.c.h.b16 %v1929
    %v2269 = vunpack.c.l.b16 %v1930
    %v2270 = vunpack.c.h.b16 %v1930
    %v2271 = vunpack.c.l.b16 %v1931
    %v2272 = vunpack.c.h.b16 %v1931
    %v2273 = vunpack.c.l.b16 %v1932
    %v2274 = vunpack.c.h.b16 %v1932
    %v2275 = vunpack.c.l.b16 %v1933
    %v2276 = vunpack.c.h.b16 %v1933
    %v2277 = vunpack.c.l.b16 %v1934
    %v2278 = vunpack.c.h.b16 %v1934
    %v2279 = vunpack.c.l.b16 %v1935
    %v2280 = vunpack.c.h.b16 %v1935
    %v2281 = vunpack.c.l.b16 %v1936
    %v2282 = vunpack.c.h.b16 %v1936
    %v2283 = vunpack.c.l.b16 %v1937
    %v2284 = vunpack.c.h.b16 %v1937
    %v2285 = vunpack.c.l.b16 %v1938
    %v2286 = vunpack.c.h.b16 %v1938
    %v2287 = vunpack.c.l.b16 %v1939
    %v2288 = vunpack.c.h.b16 %v1939
    %v2289 = vunpack.c.l.b16 %v1940
    %v2290 = vunpack.c.h.b16 %v1940
    %v2291 = vunpack.c.l.b16 %v1941
    %v2292 = vunpack.c.h.b16 %v1941
    %v2293 = vunpack.c.l.b16 %v1942
    %v2294 = vunpack.c.h.b16 %v1942
    %v2295 = vunpack.c.l.b16 %v1943
    %v2296 = vunpack.c.h.b16 %v1943
    %v2297 = vunpack.c.l.b16 %v1944
    %v2298 = vunpack.c.h.b16 %v1944
    %v2299 = vunpack.c.l.b16 %v1945
    %v2300 = vunpack.c.h.b16 %v1945
    %v2301 = vunpack.c.l.b16 %v1946
    %v2302 = vunpack.c.h.b16 %v1946
    %v2303 = vunpack.c.l.b16 %v1947
    %v2304 = vunpack.c.h.b16 %v1947
    %v2305 = vunpack.c.l.b16 %v1948
    %v2306 = vunpack.c.h.b16 %v1948
    %v2307 = vunpack.c.l.b16 %v1949
    %v2308 = vunpack.c.h.b16 %v1949
    %v2309 = vunpack.c.l.b16 %v1950
    %v2310 = vunpack.c.h.b16 %v1950
    %v2311 = vunpack.c.l.b16 %v1951
    %v2312 = vunpack.c.h.b16 %v1951
    %v2313 = vunpack.c.l.b16 %v1952
    %v2314 = vunpack.c.h.b16 %v1952
    %v2315 = vunpack.c.l.b16 %v1953
    %v2316 = vunpack.c.h.b16 %v1953
    %v2317 = vunpack.c.l.b16 %v1954
    %v2318 = vunpack.c.h.b16 %v1954
    %v2319 = vunpack.c.l.b16 %v1955
    %v2320 = vunpack.c.h.b16 %v1955
    %v2321 = vunpack.c.l.b16 %v1956
    %v2322 = vunpack.c.h.b16 %v1956
    %v2323 = vunpack.c.l.b16 %v1957
    %v2324 = vunpack.c.h.b16 %v1957
    %v2325 = vunpack.c.l.b16 %v1958
    %v2326 = vunpack.c.h.b16 %v1958
    %v2327 = vunpack.c.l.b16 %v1959
    %v2328 = vunpack.c.h.b16 %v1959
    %v2329 = vunpack.c.l.b16 %v1960
    %v2330 = vunpack.c.h.b16 %v1960
    %v2331 = vunpack.c.l.b16 %v1961
    %v2332 = vunpack.c.h.b16 %v1961
    %v2333 = vunpack.c.l.b16 %v1962
    %v2334 = vunpack.c.h.b16 %v1962
    %v2335 = vunpack.c.l.b16 %v1963
    %v2336 = vunpack.c.h.b16 %v1963
    %v2337 = vunpack.c.l.b16 %v1964
    %v2338 = vunpack.c.h.b16 %v1964
    %v2339 = vunpack.c.l.b16 %v1965
    %v2340 = vunpack.c.h.b16 %v1965
    %v2341 = vunpack.c.l.b16 %v1966
    %v2342 = vunpack.c.h.b16 %v1966
    %v2343 = vunpack.c.l.b16 %v1967
    %v2344 = vunpack.c.h.b16 %v1967
    %v2345 = vunpack.c.l.b16 %v1968
    %v2346 = vunpack.c.h.b16 %v1968
    %v2347 = vunpack.c.l.b16 %v1969
    %v2348 = vunpack.c.h.b16 %v1969
    %v2349 = vunpack.c.l.b16 %v1970
    %v2350 = vunpack.c.h.b16 %v1970
    %v2351 = vunpack.c.l.b16 %v1971
    %v2352 = vunpack.c.h.b16 %v1971
    %v2353 = vunpack.c.l.b16 %v1972
    %v2354 = vunpack.c.h.b16 %v1972
    %v2355 = vunpack.c.l.b16 %v1973
    %v2356 = vunpack.c.h.b16 %v1973
    %v2357 = vunpack.c.l.b16 %v1974
    %v2358 = vunpack.c.h.b16 %v1974
    %v2359 = vunpack.c.l.b16 %v1975
    %v2360 = vunpack.c.h.b16 %v1975
    %v2361 = vunpack.c.l.b16 %v1976
    %v2362 = vunpack.c.h.b16 %v1976
    %v2363 = vunpack.c.l.b16 %v1977
    %v2364 = vunpack.c.h.b16 %v1977
    %v2365 = vunpack.c.l.b16 %v1978
    %v2366 = vunpack.c.h.b16 %v1978
    %v2367 = vunpack.c.l.b16 %v1979
    %v2368 = vunpack.c.h.b16 %v1979
    %v2369 = vunpack.c.l.b16 %v1980
    %v2370 = vunpack.c.h.b16 %v1980
    %v2371 = vunpack.c.l.b16 %v1981
    %v2372 = vunpack.c.h.b16 %v1981
    %v2373 = vunpack.c.l.b16 %v1982
    %v2374 = vunpack.c.h.b16 %v1982
    %v2375 = vunpack.c.l.b16 %v1983
    %v2376 = vunpack.c.h.b16 %v1983
    %v2377 = vunpack.c.l.b16 %v1984
    %v2378 = vunpack.c.h.b16 %v1984
    %v2379 = vunpack.c.l.b16 %v1985
    %v2380 = vunpack.c.h.b16 %v1985
    %v2381 = vunpack.c.l.b16 %v1986
    %v2382 = vunpack.c.h.b16 %v1986
    %v2383 = vunpack.c.l.b16 %v1987
    %v2384 = vunpack.c.h.b16 %v1987
    %v2385 = vunpack.c.l.b16 %v1988
    %v2386 = vunpack.c.h.b16 %v1988
    %v2387 = vunpack.c.l.b16 %v1989
    %v2388 = vunpack.c.h.b16 %v1989
    %v2389 = vunpack.c.l.b16 %v1990
    %v2390 = vunpack.c.h.b16 %v1990
    %v2391 = vunpack.c.l.b16 %v1991
    %v2392 = vunpack.c.h.b16 %v1991
    %v2393 = vunpack.c.l.b16 %v1992
    %v2394 = vunpack.c.h.b16 %v1992
    %v2395 = vunpack.c.l.b16 %v1993
    %v2396 = vunpack.c.h.b16 %v1993
    %v2397 = vunpack.c.l.b16 %v1994
    %v2398 = vunpack.c.h.b16 %v1994
    %v2399 = vunpack.c.l.b16 %v1995
    %v2400 = vunpack.c.h.b16 %v1995
    %v2401 = vpack.c.b16 %v2149, %v2145
    %v2402 = vpack.c.b16 %v2150, %v2146
    %v2403 = vpack.c.b16 %v2151, %v2147
    %v2404 = vpack.c.b16 %v2152, %v2148
    %v2405 = vpack.c.b16 %v2157, %v2153
    %v2406 = vpack.c.b16 %v2158, %v2154
    %v2407 = vpack.c.b16 %v2159, %v2155
    %v2408 = vpack.c.b16 %v2160, %v2156
    %v2409 = vpack.c.b16 %v2165, %v2161
    %v2410 = vpack.c.b16 %v2166, %v2162
    %v2411 = vpack.c.b16 %v2167, %v2163
    %v2412 = vpack.c.b16 %v2168, %v2164
    %v2413 = vpack.c.b16 %v2173, %v2169
    %v2414 = vpack.c.b16 %v2174, %v2170
    %v2415 = vpack.c.b16 %v2175, %v2171
    %v2416 = vpack.c.b16 %v2176, %v2172
    %v2417 = vpack.c.b16 %v2181, %v2177
    %v2418 = vpack.c.b16 %v2182, %v2178
    %v2419 = vpack.c.b16 %v2183, %v2179
    %v2420 = vpack.c.b16 %v2184, %v2180
    %v2421 = vpack.c.b16 %v2189, %v2185
    %v2422 = vpack.c.b16 %v2190, %v2186
    %v2423 = vpack.c.b16 %v2191, %v2187
    %v2424 = vpack.c.b16 %v2192, %v2188
    %v2425 = vpack.c.b16 %v2197, %v2193
    %v2426 = vpack.c.b16 %v2198, %v2194
    %v2427 = vpack.c.b16 %v2199, %v2195
    %v2428 = vpack.c.b16 %v2200, %v2196
    %v2429 = vpack.c.b16 %v2205, %v2201
    %v2430 = vpack.c.b16 %v2206, %v2202
    %v2431 = vpack.c.b16 %v2207, %v2203
    %v2432 = vpack.c.b16 %v2208, %v2204
    %v2433 = vpack.c.b16 %v2213, %v2209
    %v2434 = vpack.c.b16 %v2214, %v2210
    %v2435 = vpack.c.b16 %v2215, %v2211
    %v2436 = vpack.c.b16 %v2216, %v2212
    %v2437 = vpack.c.b16 %v2221, %v2217
    %v2438 = vpack.c.b16 %v2222, %v2218
    %v2439 = vpack.c.b16 %v2223, %v2219
    %v2440 = vpack.c.b16 %v2224, %v2220
    %v2441 = vpack.c.b16 %v2229, %v2225
    %v2442 = vpack.c.b16 %v2230, %v2226
    %v2443 = vpack.c.b16 %v2231, %v2227
    %v2444 = vpack.c.b16 %v2232, %v2228
    %v2445 = vpack.c.b16 %v2237, %v2233
    %v2446 = vpack.c.b16 %v2238, %v2234
    %v2447 = vpack.c.b16 %v2239, %v2235
    %v2448 = vpack.c.b16 %v2240, %v2236
    %v2449 = vpack.c.b16 %v2245, %v2241
    %v2450 = vpack.c.b16 %v2246, %v2242
    %v2451 = vpack.c.b16 %v2247, %v2243
    %v2452 = vpack.c.b16 %v2248, %v2244
    %v2453 = vpack.c.b16 %v2253, %v2249
    %v2454 = vpack.c.b16 %v2254, %v2250
    %v2455 = vpack.c.b16 %v2255, %v2251
    %v2456 = vpack.c.b16 %v2256, %v2252
    %v2457 = vpack.c.b16 %v2261, %v2257
    %v2458 = vpack.c.b16 %v2262, %v2258
    %v2459 = vpack.c.b16 %v2263, %v2259
    %v2460 = vpack.c.b16 %v2264, %v2260
    %v2461 = vpack.c.b16 %v2269, %v2265
    %v2462 = vpack.c.b16 %v2270, %v2266
    %v2463 = vpack.c.b16 %v2271, %v2267
    %v2464 = vpack.c.b16 %v2272, %v2268
    %v2465 = vpack.c.b16 %v2277, %v2273
    %v2466 = vpack.c.b16 %v2278, %v2274
    %v2467 = vpack.c.b16 %v2279, %v2275
    %v2468 = vpack.c.b16 %v2280, %v2276
    %v2469 = vpack.c.b16 %v2285, %v2281
    %v2470 = vpack.c.b16 %v2286, %v2282
    %v2471 = vpack.c.b16 %v2287, %v2283
    %v2472 = vpack.c.b16 %v2288, %v2284
    %v2473 = vpack.c.b16 %v2293, %v2289
    %v2474 = vpack.c.b16 %v2294, %v2290
    %v2475 = vpack.c.b16 %v2295, %v2291
    %v2476 = vpack.c.b16 %v2296, %v2292
    %v2477 = vpack.c.b16 %v2301, %v2297
    %v2478 = vpack.c.b16 %v2302, %v2298
    %v2479 = vpack.c.b16 %v2303, %v2299
    %v2480 = vpack.c.b16 %v2304, %v2300
    %v2481 = vpack.c.b16 %v2309, %v2305
    %v2482 = vpack.c.b16 %v2310, %v2306
    %v2483 = vpack.c.b16 %v2311, %v2307
    %v2484 = vpack.c.b16 %v2312, %v2308
    %v2485 = vpack.c.b16 %v2317, %v2313
    %v2486 = vpack.c.b16 %v2318, %v2314
    %v2487 = vpack.c.b16 %v2319, %v2315
    %v2488 = vpack.c.b16 %v2320, %v2316
    %v2489 = vpack.c.b16 %v2325, %v2321
    %v2490 = vpack.c.b16 %v2326, %v2322
    %v2491 = vpack.c.b16 %v2327, %v2323
    %v2492 = vpack.c.b16 %v2328, %v2324
    %v2493 = vpack.c.b16 %v2333, %v2329
    %v2494 = vpack.c.b16 %v2334, %v2330
    %v2495 = vpack.c.b16 %v2335, %v2331
    %v2496 = vpack.c.b16 %v2336, %v2332
    %v2497 = vpack.c.b16 %v2341, %v2337
    %v2498 = vpack.c.b16 %v2342, %v2338
    %v2499 = vpack.c.b16 %v2343, %v2339
    %v2500 = vpack.c.b16 %v2344, %v2340
    %v2501 = vpack.c.b16 %v2349, %v2345
    %v2502 = vpack.c.b16 %v2350, %v2346
    %v2503 = vpack.c.b16 %v2351, %v2347
    %v2504 = vpack.c.b16 %v2352, %v2348
    %v2505 = vpack.c.b16 %v2357, %v2353
    %v2506 = vpack.c.b16 %v2358, %v2354
    %v2507 = vpack.c.b16 %v2359, %v2355
    %v2508 = vpack.c.b16 %v2360, %v2356
    %v2509 = vpack.c.b16 %v2365, %v2361
    %v2510 = vpack.c.b16 %v2366, %v2362
    %v2511 = vpack.c.b16 %v2367, %v2363
    %v2512 = vpack.c.b16 %v2368, %v2364
    %v2513 = vpack.c.b16 %v2373, %v2369
    %v2514 = vpack.c.b16 %v2374, %v2370
    %v2515 = vpack.c.b16 %v2375, %v2371
    %v2516 = vpack.c.b16 %v2376, %v2372
    %v2517 = vpack.c.b16 %v2381, %v2377
    %v2518 = vpack.c.b16 %v2382, %v2378
    %v2519 = vpack.c.b16 %v2383, %v2379
    %v2520 = vpack.c.b16 %v2384, %v2380
    %v2521 = vpack.c.b16 %v2389, %v2385
    %v2522 = vpack.c.b16 %v2390, %v2386
    %v2523 = vpack.c.b16 %v2391, %v2387
    %v2524 = vpack.c.b16 %v2392, %v2388
    %v2525 = vpack.c.b16 %v2397, %v2393
    %v2526 = vpack.c.b16 %v2398, %v2394
    %v2527 = vpack.c.b16 %v2399, %v2395
    %v2528 = vpack.c.b16 %v2400, %v2396
    %2657 = vmatprep.subr.bf16.mxu0 %v2430
    %2658 = vmatpush1.bf16.msra.mxu0 %v2429
    %2659 = vmatprep.subr.bf16.mxu0 %v2426
    %2660 = vmatpush1.bf16.msra.mxu0 %v2425
    %2661 = vmatprep.subr.bf16.mxu0 %v2422
    %2662 = vmatpush1.bf16.msra.mxu0 %v2421
    %2663 = vmatprep.subr.bf16.mxu0 %v2418
    %2664 = vmatpush1.bf16.msra.mxu0 %v2417
    %2665 = vmatprep.subr.bf16.mxu0 %v2414
    %2666 = vmatpush1.bf16.msra.mxu0 %v2413
    %2667 = vmatprep.subr.bf16.mxu0 %v2410
    %2668 = vmatpush1.bf16.msra.mxu0 %v2409
    %2669 = vmatprep.subr.bf16.mxu0 %v2406
    %2670 = vmatpush1.bf16.msra.mxu0 %v2405
    %2671 = vmatprep.subr.bf16.mxu0 %v2402
    %2672 = vmatpush1.bf16.msra.mxu0 %v2401
    %2673 = vmatprep.subr.bf16.mxu0 %v2462
    %2674 = vmatpush2.bf16.msra.mxu0 %v2461
    %2675 = vmatprep.subr.bf16.mxu0 %v2458
    %2676 = vmatpush2.bf16.msra.mxu0 %v2457
    %2677 = vmatprep.subr.bf16.mxu0 %v2454
    %2678 = vmatpush2.bf16.msra.mxu0 %v2453
    %2679 = vmatprep.subr.bf16.mxu0 %v2450
    %2680 = vmatpush2.bf16.msra.mxu0 %v2449
    %2681 = vmatprep.subr.bf16.mxu0 %v2446
    %2682 = vmatpush2.bf16.msra.mxu0 %v2445
    %2683 = vmatprep.subr.bf16.mxu0 %v2442
    %2684 = vmatpush2.bf16.msra.mxu0 %v2441
    %2685 = vmatprep.subr.bf16.mxu0 %v2438
    %2686 = vmatpush2.bf16.msra.mxu0 %v2437
    %2687 = vmatprep.subr.bf16.mxu0 %v2434
    %2688 = vmatpush2.bf16.msra.mxu0 %v2433
    %2689 = vmatprep.mubr.bf16.mxu0 %v1864
    %2690 = vmatmul.mubr.bf16.gmra.mxu0 %v1863
    %v2691 = vpop.f32.mrf.mxu0
    %v2692 = vadd.f32 %v2000, %v2691
    %v2693 = vpop.f32.mrf.mxu0
    %v2694 = vadd.f32 %v2004, %v2693
    %v2695 = vpop.f32.mrf.mxu0
    %v2696 = vpop.f32.mrf.mxu0
    %2697 = vdwg.mxu0
    %2698 = vmatprep.subr.bf16.mxu0 %v2494
    %2699 = vmatpush1.bf16.msra.mxu0 %v2493
    %2700 = vmatprep.subr.bf16.mxu0 %v2490
    %2701 = vmatpush1.bf16.msra.mxu0 %v2489
    %2702 = vmatprep.subr.bf16.mxu0 %v2486
    %2703 = vmatpush1.bf16.msra.mxu0 %v2485
    %2704 = vmatprep.subr.bf16.mxu0 %v2482
    %2705 = vmatpush1.bf16.msra.mxu0 %v2481
    %2706 = vmatprep.subr.bf16.mxu0 %v2478
    %2707 = vmatpush1.bf16.msra.mxu0 %v2477
    %2708 = vmatprep.subr.bf16.mxu0 %v2474
    %2709 = vmatpush1.bf16.msra.mxu0 %v2473
    %2710 = vmatprep.subr.bf16.mxu0 %v2470
    %2711 = vmatpush1.bf16.msra.mxu0 %v2469
    %2712 = vmatprep.subr.bf16.mxu0 %v2466
    %2713 = vmatpush1.bf16.msra.mxu0 %v2465
    %2714 = vmatprep.subr.bf16.mxu0 %v2526
    %2715 = vmatpush2.bf16.msra.mxu0 %v2525
    %2716 = vmatprep.subr.bf16.mxu0 %v2522
    %2717 = vmatpush2.bf16.msra.mxu0 %v2521
    %2718 = vmatprep.subr.bf16.mxu0 %v2518
    %2719 = vmatpush2.bf16.msra.mxu0 %v2517
    %2720 = vmatprep.subr.bf16.mxu0 %v2514
    %2721 = vmatpush2.bf16.msra.mxu0 %v2513
    %2722 = vmatprep.subr.bf16.mxu0 %v2510
    %2723 = vmatpush2.bf16.msra.mxu0 %v2509
    %2724 = vmatprep.subr.bf16.mxu0 %v2506
    %2725 = vmatpush2.bf16.msra.mxu0 %v2505
    %2726 = vmatprep.subr.bf16.mxu0 %v2502
    %2727 = vmatpush2.bf16.msra.mxu0 %v2501
    %2728 = vmatprep.subr.bf16.mxu0 %v2498
    %2729 = vmatpush2.bf16.msra.mxu0 %v2497
    %2730 = vmatprep.mubr.bf16.mxu0 %v1866
    %2731 = vmatmul.mubr.bf16.gmra.mxu0 %v1865
    %v2732 = vpop.f32.mrf.mxu0
    %v2733 = vadd.f32 %v2692, %v2732
    %v2734 = vpop.f32.mrf.mxu0
    %v2735 = vadd.f32 %v2694, %v2734
    %v2736 = vpop.f32.mrf.mxu0
    %v2737 = vpop.f32.mrf.mxu0
    %2738 = vdwg.mxu0
    %2739 = vmatprep.subr.bf16.mxu0 %v2432
    %2740 = vmatpush1.bf16.msra.mxu0 %v2431
    %2741 = vmatprep.subr.bf16.mxu0 %v2428
    %2742 = vmatpush1.bf16.msra.mxu0 %v2427
    %2743 = vmatprep.subr.bf16.mxu0 %v2424
    %2744 = vmatpush1.bf16.msra.mxu0 %v2423
    %2745 = vmatprep.subr.bf16.mxu0 %v2420
    %2746 = vmatpush1.bf16.msra.mxu0 %v2419
    %2747 = vmatprep.subr.bf16.mxu0 %v2416
    %2748 = vmatpush1.bf16.msra.mxu0 %v2415
    %2749 = vmatprep.subr.bf16.mxu0 %v2412
    %2750 = vmatpush1.bf16.msra.mxu0 %v2411
    %2751 = vmatprep.subr.bf16.mxu0 %v2408
    %2752 = vmatpush1.bf16.msra.mxu0 %v2407
    %2753 = vmatprep.subr.bf16.mxu0 %v2404
    %2754 = vmatpush1.bf16.msra.mxu0 %v2403
    %2755 = vmatprep.subr.bf16.mxu0 %v2464
    %2756 = vmatpush2.bf16.msra.mxu0 %v2463
    %2757 = vmatprep.subr.bf16.mxu0 %v2460
    %2758 = vmatpush2.bf16.msra.mxu0 %v2459
    %2759 = vmatprep.subr.bf16.mxu0 %v2456
    %2760 = vmatpush2.bf16.msra.mxu0 %v2455
    %2761 = vmatprep.subr.bf16.mxu0 %v2452
    %2762 = vmatpush2.bf16.msra.mxu0 %v2451
    %2763 = vmatprep.subr.bf16.mxu0 %v2448
    %2764 = vmatpush2.bf16.msra.mxu0 %v2447
    %2765 = vmatprep.subr.bf16.mxu0 %v2444
    %2766 = vmatpush2.bf16.msra.mxu0 %v2443
    %2767 = vmatprep.subr.bf16.mxu0 %v2440
    %2768 = vmatpush2.bf16.msra.mxu0 %v2439
    %2769 = vmatprep.subr.bf16.mxu0 %v2436
    %2770 = vmatpush2.bf16.msra.mxu0 %v2435
    %2771 = vmatprep.mubr.bf16.mxu0 %v1864
    %2772 = vmatmul.mubr.bf16.gmra.mxu0 %v1863
    %v2773 = vpop.f32.mrf.mxu0
    %v2774 = vadd.f32 %v2008, %v2773
    %v2775 = vpop.f32.mrf.mxu0
    %v2776 = vadd.f32 %v2012, %v2775
    %v2777 = vpop.f32.mrf.mxu0
    %v2778 = vpop.f32.mrf.mxu0
    %2779 = vdwg.mxu0
    %2780 = vmatprep.subr.bf16.mxu0 %v2496
    %2781 = vmatpush1.bf16.msra.mxu0 %v2495
    %2782 = vmatprep.subr.bf16.mxu0 %v2492
    %2783 = vmatpush1.bf16.msra.mxu0 %v2491
    %2784 = vmatprep.subr.bf16.mxu0 %v2488
    %2785 = vmatpush1.bf16.msra.mxu0 %v2487
    %2786 = vmatprep.subr.bf16.mxu0 %v2484
    %2787 = vmatpush1.bf16.msra.mxu0 %v2483
    %2788 = vmatprep.subr.bf16.mxu0 %v2480
    %2789 = vmatpush1.bf16.msra.mxu0 %v2479
    %2790 = vmatprep.subr.bf16.mxu0 %v2476
    %2791 = vmatpush1.bf16.msra.mxu0 %v2475
    %2792 = vmatprep.subr.bf16.mxu0 %v2472
    %2793 = vmatpush1.bf16.msra.mxu0 %v2471
    %2794 = vmatprep.subr.bf16.mxu0 %v2468
    %2795 = vmatpush1.bf16.msra.mxu0 %v2467
    %2796 = vmatprep.subr.bf16.mxu0 %v2528
    %2797 = vmatpush2.bf16.msra.mxu0 %v2527
    %2798 = vmatprep.subr.bf16.mxu0 %v2524
    %2799 = vmatpush2.bf16.msra.mxu0 %v2523
    %2800 = vmatprep.subr.bf16.mxu0 %v2520
    %2801 = vmatpush2.bf16.msra.mxu0 %v2519
    %2802 = vmatprep.subr.bf16.mxu0 %v2516
    %2803 = vmatpush2.bf16.msra.mxu0 %v2515
    %2804 = vmatprep.subr.bf16.mxu0 %v2512
    %2805 = vmatpush2.bf16.msra.mxu0 %v2511
    %2806 = vmatprep.subr.bf16.mxu0 %v2508
    %2807 = vmatpush2.bf16.msra.mxu0 %v2507
    %2808 = vmatprep.subr.bf16.mxu0 %v2504
    %2809 = vmatpush2.bf16.msra.mxu0 %v2503
    %2810 = vmatprep.subr.bf16.mxu0 %v2500
    %2811 = vmatpush2.bf16.msra.mxu0 %v2499
    %2812 = vmatprep.mubr.bf16.mxu0 %v1866
    %2813 = vmatmul.mubr.bf16.gmra.mxu0 %v1865
    %v2814 = vpop.f32.mrf.mxu0
    %v2815 = vadd.f32 %v2774, %v2814
    %v2816 = vpop.f32.mrf.mxu0
    %v2817 = vadd.f32 %v2776, %v2816
    %v2818 = vpop.f32.mrf.mxu0
    %v2819 = vpop.f32.mrf.mxu0
    %2820 = vdwg.mxu0
    %v2821 = vmax.f32 %v2733, 0.0
    %v2822 = vmax.f32 %v2735, 0.0
    %v2823 = vmax.f32 %v2815, 0.0
    %v2824 = vmax.f32 %v2817, 0.0
    %v2825 = vpack.c.bf16 %v2821, %v2821
    %v2826 = vpack.c.bf16 %v2822, %v2822
    %v2827 = vpack.c.bf16 %v2823, %v2823
    %v2828 = vpack.c.bf16 %v2824, %v2824
    %v2829 = vld [vmem:[%s2 + $0x8] sm:$0x3]
    %v2830 = vld [vmem:[%s5] sm:$0xff]
    %v2831 = vld [vmem:[%s5 + $0x8] sm:$0xff]
    %v2832 = vld [vmem:[%s5 + $0x10] sm:$0xff]
    %v2833 = vld [vmem:[%s5 + $0x18] sm:$0xff]
    %v2834 = vld [vmem:[%s5 + $0x20] sm:$0xff]
    %v2835 = vld [vmem:[%s5 + $0x28] sm:$0xff]
    %v2836 = vld [vmem:[%s5 + $0x30] sm:$0xff]
    %v2837 = vld [vmem:[%s5 + $0x38] sm:$0xff]
    %v2838 = vld [vmem:[%s5 + $0x40] sm:$0xff]
    %v2839 = vld [vmem:[%s5 + $0x48] sm:$0xff]
    %v2840 = vld [vmem:[%s5 + $0x50] sm:$0xff]
    %v2841 = vld [vmem:[%s5 + $0x58] sm:$0xff]
    %v2842 = vld [vmem:[%s5 + $0x60] sm:$0xff]
    %v2843 = vld [vmem:[%s5 + $0x68] sm:$0xff]
    %v2844 = vld [vmem:[%s5 + $0x70] sm:$0xff]
    %v2845 = vld [vmem:[%s5 + $0x78] sm:$0xff]
    %v2846 = vld [vmem:[%s5 + $0x80] sm:$0xff]
    %v2847 = vld [vmem:[%s5 + $0x88] sm:$0xff]
    %v2848 = vld [vmem:[%s5 + $0x90] sm:$0xff]
    %v2849 = vld [vmem:[%s5 + $0x98] sm:$0xff]
    %v2850 = vld [vmem:[%s5 + $0xa0] sm:$0xff]
    %v2851 = vld [vmem:[%s5 + $0xa8] sm:$0xff]
    %v2852 = vld [vmem:[%s5 + $0xb0] sm:$0xff]
    %v2853 = vld [vmem:[%s5 + $0xb8] sm:$0xff]
    %v2854 = vld [vmem:[%s5 + $0xc0] sm:$0xff]
    %v2855 = vld [vmem:[%s5 + $0xc8] sm:$0xff]
    %v2856 = vld [vmem:[%s5 + $0xd0] sm:$0xff]
    %v2857 = vld [vmem:[%s5 + $0xd8] sm:$0xff]
    %v2858 = vld [vmem:[%s5 + $0xe0] sm:$0xff]
    %v2859 = vld [vmem:[%s5 + $0xe8] sm:$0xff]
    %v2860 = vld [vmem:[%s5 + $0xf0] sm:$0xff]
    %v2861 = vld [vmem:[%s5 + $0xf8] sm:$0xff]
    %v2862 = vld [vmem:[%s5 + $0x100] sm:$0xff]
    %v2863 = vld [vmem:[%s5 + $0x108] sm:$0xff]
    %v2864 = vld [vmem:[%s5 + $0x110] sm:$0xff]
    %v2865 = vld [vmem:[%s5 + $0x118] sm:$0xff]
    %v2866 = vld [vmem:[%s5 + $0x120] sm:$0xff]
    %v2867 = vld [vmem:[%s5 + $0x128] sm:$0xff]
    %v2868 = vld [vmem:[%s5 + $0x130] sm:$0xff]
    %v2869 = vld [vmem:[%s5 + $0x138] sm:$0xff]
    %v2870 = vld [vmem:[%s5 + $0x140] sm:$0xff]
    %v2871 = vld [vmem:[%s5 + $0x148] sm:$0xff]
    %v2872 = vld [vmem:[%s5 + $0x150] sm:$0xff]
    %v2873 = vld [vmem:[%s5 + $0x158] sm:$0xff]
    %v2874 = vld [vmem:[%s5 + $0x160] sm:$0xff]
    %v2875 = vld [vmem:[%s5 + $0x168] sm:$0xff]
    %v2876 = vld [vmem:[%s5 + $0x170] sm:$0xff]
    %v2877 = vld [vmem:[%s5 + $0x178] sm:$0xff]
    %v2878 = vld [vmem:[%s5 + $0x180] sm:$0xff]
    %v2879 = vld [vmem:[%s5 + $0x188] sm:$0xff]
    %v2880 = vld [vmem:[%s5 + $0x190] sm:$0xff]
    %v2881 = vld [vmem:[%s5 + $0x198] sm:$0xff]
    %v2882 = vld [vmem:[%s5 + $0x1a0] sm:$0xff]
    %v2883 = vld [vmem:[%s5 + $0x1a8] sm:$0xff]
    %v2884 = vld [vmem:[%s5 + $0x1b0] sm:$0xff]
    %v2885 = vld [vmem:[%s5 + $0x1b8] sm:$0xff]
    %v2886 = vld [vmem:[%s5 + $0x1c0] sm:$0xff]
    %v2887 = vld [vmem:[%s5 + $0x1c8] sm:$0xff]
    %v2888 = vld [vmem:[%s5 + $0x1d0] sm:$0xff]
    %v2889 = vld [vmem:[%s5 + $0x1d8] sm:$0xff]
    %v2890 = vld [vmem:[%s5 + $0x1e0] sm:$0xff]
    %v2891 = vld [vmem:[%s5 + $0x1e8] sm:$0xff]
    %v2892 = vld [vmem:[%s5 + $0x1f0] sm:$0xff]
    %v2893 = vld [vmem:[%s5 + $0x1f8] sm:$0xff]
    %v2895 = vlaneseq
    %v2896 = vshrl.u32 %v2895, 7
    %v2897 = vsub.s32 0, %v2896
    %v2898 = vrot.slane %v2829, %v2897
    %v2899 = vlaneseq
    %v2900 = vshrl.u32 %v2899, 7
    %v2901 = vsub.s32 1, %v2900
    %v2902 = vrot.slane %v2829, %v2901
    %v2969 = vunpack.c.l.b16 %v2830
    %v2970 = vunpack.c.h.b16 %v2830
    %v2971 = vunpack.c.l.b16 %v2831
    %v2972 = vunpack.c.h.b16 %v2831
    %v2973 = vunpack.c.l.b16 %v2832
    %v2974 = vunpack.c.h.b16 %v2832
    %v2975 = vunpack.c.l.b16 %v2833
    %v2976 = vunpack.c.h.b16 %v2833
    %v2977 = vunpack.c.l.b16 %v2834
    %v2978 = vunpack.c.h.b16 %v2834
    %v2979 = vunpack.c.l.b16 %v2835
    %v2980 = vunpack.c.h.b16 %v2835
    %v2981 = vunpack.c.l.b16 %v2836
    %v2982 = vunpack.c.h.b16 %v2836
    %v2983 = vunpack.c.l.b16 %v2837
    %v2984 = vunpack.c.h.b16 %v2837
    %v2985 = vunpack.c.l.b16 %v2838
    %v2986 = vunpack.c.h.b16 %v2838
    %v2987 = vunpack.c.l.b16 %v2839
    %v2988 = vunpack.c.h.b16 %v2839
    %v2989 = vunpack.c.l.b16 %v2840
    %v2990 = vunpack.c.h.b16 %v2840
    %v2991 = vunpack.c.l.b16 %v2841
    %v2992 = vunpack.c.h.b16 %v2841
    %v2993 = vunpack.c.l.b16 %v2842
    %v2994 = vunpack.c.h.b16 %v2842
    %v2995 = vunpack.c.l.b16 %v2843
    %v2996 = vunpack.c.h.b16 %v2843
    %v2997 = vunpack.c.l.b16 %v2844
    %v2998 = vunpack.c.h.b16 %v2844
    %v2999 = vunpack.c.l.b16 %v2845
    %v3000 = vunpack.c.h.b16 %v2845
    %v3001 = vunpack.c.l.b16 %v2846
    %v3002 = vunpack.c.h.b16 %v2846
    %v3003 = vunpack.c.l.b16 %v2847
    %v3004 = vunpack.c.h.b16 %v2847
    %v3005 = vunpack.c.l.b16 %v2848
    %v3006 = vunpack.c.h.b16 %v2848
    %v3007 = vunpack.c.l.b16 %v2849
    %v3008 = vunpack.c.h.b16 %v2849
    %v3009 = vunpack.c.l.b16 %v2850
    %v3010 = vunpack.c.h.b16 %v2850
    %v3011 = vunpack.c.l.b16 %v2851
    %v3012 = vunpack.c.h.b16 %v2851
    %v3013 = vunpack.c.l.b16 %v2852
    %v3014 = vunpack.c.h.b16 %v2852
    %v3015 = vunpack.c.l.b16 %v2853
    %v3016 = vunpack.c.h.b16 %v2853
    %v3017 = vunpack.c.l.b16 %v2854
    %v3018 = vunpack.c.h.b16 %v2854
    %v3019 = vunpack.c.l.b16 %v2855
    %v3020 = vunpack.c.h.b16 %v2855
    %v3021 = vunpack.c.l.b16 %v2856
    %v3022 = vunpack.c.h.b16 %v2856
    %v3023 = vunpack.c.l.b16 %v2857
    %v3024 = vunpack.c.h.b16 %v2857
    %v3025 = vunpack.c.l.b16 %v2858
    %v3026 = vunpack.c.h.b16 %v2858
    %v3027 = vunpack.c.l.b16 %v2859
    %v3028 = vunpack.c.h.b16 %v2859
    %v3029 = vunpack.c.l.b16 %v2860
    %v3030 = vunpack.c.h.b16 %v2860
    %v3031 = vunpack.c.l.b16 %v2861
    %v3032 = vunpack.c.h.b16 %v2861
    %v3033 = vunpack.c.l.b16 %v2862
    %v3034 = vunpack.c.h.b16 %v2862
    %v3035 = vunpack.c.l.b16 %v2863
    %v3036 = vunpack.c.h.b16 %v2863
    %v3037 = vunpack.c.l.b16 %v2864
    %v3038 = vunpack.c.h.b16 %v2864
    %v3039 = vunpack.c.l.b16 %v2865
    %v3040 = vunpack.c.h.b16 %v2865
    %v3041 = vunpack.c.l.b16 %v2866
    %v3042 = vunpack.c.h.b16 %v2866
    %v3043 = vunpack.c.l.b16 %v2867
    %v3044 = vunpack.c.h.b16 %v2867
    %v3045 = vunpack.c.l.b16 %v2868
    %v3046 = vunpack.c.h.b16 %v2868
    %v3047 = vunpack.c.l.b16 %v2869
    %v3048 = vunpack.c.h.b16 %v2869
    %v3049 = vunpack.c.l.b16 %v2870
    %v3050 = vunpack.c.h.b16 %v2870
    %v3051 = vunpack.c.l.b16 %v2871
    %v3052 = vunpack.c.h.b16 %v2871
    %v3053 = vunpack.c.l.b16 %v2872
    %v3054 = vunpack.c.h.b16 %v2872
    %v3055 = vunpack.c.l.b16 %v2873
    %v3056 = vunpack.c.h.b16 %v2873
    %v3057 = vunpack.c.l.b16 %v2874
    %v3058 = vunpack.c.h.b16 %v2874
    %v3059 = vunpack.c.l.b16 %v2875
    %v3060 = vunpack.c.h.b16 %v2875
    %v3061 = vunpack.c.l.b16 %v2876
    %v3062 = vunpack.c.h.b16 %v2876
    %v3063 = vunpack.c.l.b16 %v2877
    %v3064 = vunpack.c.h.b16 %v2877
    %v3065 = vunpack.c.l.b16 %v2878
    %v3066 = vunpack.c.h.b16 %v2878
    %v3067 = vunpack.c.l.b16 %v2879
    %v3068 = vunpack.c.h.b16 %v2879
    %v3069 = vunpack.c.l.b16 %v2880
    %v3070 = vunpack.c.h.b16 %v2880
    %v3071 = vunpack.c.l.b16 %v2881
    %v3072 = vunpack.c.h.b16 %v2881
    %v3073 = vunpack.c.l.b16 %v2882
    %v3074 = vunpack.c.h.b16 %v2882
    %v3075 = vunpack.c.l.b16 %v2883
    %v3076 = vunpack.c.h.b16 %v2883
    %v3077 = vunpack.c.l.b16 %v2884
    %v3078 = vunpack.c.h.b16 %v2884
    %v3079 = vunpack.c.l.b16 %v2885
    %v3080 = vunpack.c.h.b16 %v2885
    %v3081 = vunpack.c.l.b16 %v2886
    %v3082 = vunpack.c.h.b16 %v2886
    %v3083 = vunpack.c.l.b16 %v2887
    %v3084 = vunpack.c.h.b16 %v2887
    %v3085 = vunpack.c.l.b16 %v2888
    %v3086 = vunpack.c.h.b16 %v2888
    %v3087 = vunpack.c.l.b16 %v2889
    %v3088 = vunpack.c.h.b16 %v2889
    %v3089 = vunpack.c.l.b16 %v2890
    %v3090 = vunpack.c.h.b16 %v2890
    %v3091 = vunpack.c.l.b16 %v2891
    %v3092 = vunpack.c.h.b16 %v2891
    %v3093 = vunpack.c.l.b16 %v2892
    %v3094 = vunpack.c.h.b16 %v2892
    %v3095 = vunpack.c.l.b16 %v2893
    %v3096 = vunpack.c.h.b16 %v2893
    %v3097 = vpack.c.b16 %v2971, %v2969
    %v3098 = vpack.c.b16 %v2972, %v2970
    %v3099 = vpack.c.b16 %v2975, %v2973
    %v3100 = vpack.c.b16 %v2976, %v2974
    %v3101 = vpack.c.b16 %v2979, %v2977
    %v3102 = vpack.c.b16 %v2980, %v2978
    %v3103 = vpack.c.b16 %v2983, %v2981
    %v3104 = vpack.c.b16 %v2984, %v2982
    %v3105 = vpack.c.b16 %v2987, %v2985
    %v3106 = vpack.c.b16 %v2988, %v2986
    %v3107 = vpack.c.b16 %v2991, %v2989
    %v3108 = vpack.c.b16 %v2992, %v2990
    %v3109 = vpack.c.b16 %v2995, %v2993
    %v3110 = vpack.c.b16 %v2996, %v2994
    %v3111 = vpack.c.b16 %v2999, %v2997
    %v3112 = vpack.c.b16 %v3000, %v2998
    %v3113 = vpack.c.b16 %v3003, %v3001
    %v3114 = vpack.c.b16 %v3004, %v3002
    %v3115 = vpack.c.b16 %v3007, %v3005
    %v3116 = vpack.c.b16 %v3008, %v3006
    %v3117 = vpack.c.b16 %v3011, %v3009
    %v3118 = vpack.c.b16 %v3012, %v3010
    %v3119 = vpack.c.b16 %v3015, %v3013
    %v3120 = vpack.c.b16 %v3016, %v3014
    %v3121 = vpack.c.b16 %v3019, %v3017
    %v3122 = vpack.c.b16 %v3020, %v3018
    %v3123 = vpack.c.b16 %v3023, %v3021
    %v3124 = vpack.c.b16 %v3024, %v3022
    %v3125 = vpack.c.b16 %v3027, %v3025
    %v3126 = vpack.c.b16 %v3028, %v3026
    %v3127 = vpack.c.b16 %v3031, %v3029
    %v3128 = vpack.c.b16 %v3032, %v3030
    %v3129 = vpack.c.b16 %v3035, %v3033
    %v3130 = vpack.c.b16 %v3036, %v3034
    %v3131 = vpack.c.b16 %v3039, %v3037
    %v3132 = vpack.c.b16 %v3040, %v3038
    %v3133 = vpack.c.b16 %v3043, %v3041
    %v3134 = vpack.c.b16 %v3044, %v3042
    %v3135 = vpack.c.b16 %v3047, %v3045
    %v3136 = vpack.c.b16 %v3048, %v3046
    %v3137 = vpack.c.b16 %v3051, %v3049
    %v3138 = vpack.c.b16 %v3052, %v3050
    %v3139 = vpack.c.b16 %v3055, %v3053
    %v3140 = vpack.c.b16 %v3056, %v3054
    %v3141 = vpack.c.b16 %v3059, %v3057
    %v3142 = vpack.c.b16 %v3060, %v3058
    %v3143 = vpack.c.b16 %v3063, %v3061
    %v3144 = vpack.c.b16 %v3064, %v3062
    %v3145 = vpack.c.b16 %v3067, %v3065
    %v3146 = vpack.c.b16 %v3068, %v3066
    %v3147 = vpack.c.b16 %v3071, %v3069
    %v3148 = vpack.c.b16 %v3072, %v3070
    %v3149 = vpack.c.b16 %v3075, %v3073
    %v3150 = vpack.c.b16 %v3076, %v3074
    %v3151 = vpack.c.b16 %v3079, %v3077
    %v3152 = vpack.c.b16 %v3080, %v3078
    %v3153 = vpack.c.b16 %v3083, %v3081
    %v3154 = vpack.c.b16 %v3084, %v3082
    %v3155 = vpack.c.b16 %v3087, %v3085
    %v3156 = vpack.c.b16 %v3088, %v3086
    %v3157 = vpack.c.b16 %v3091, %v3089
    %v3158 = vpack.c.b16 %v3092, %v3090
    %v3159 = vpack.c.b16 %v3095, %v3093
    %v3160 = vpack.c.b16 %v3096, %v3094
    %3225 = vmatprep.subr.bf16.mxu0 %v3112
    %3226 = vmatpush1.bf16.msra.mxu0 %v3111
    %3227 = vmatprep.subr.bf16.mxu0 %v3110
    %3228 = vmatpush1.bf16.msra.mxu0 %v3109
    %3229 = vmatprep.subr.bf16.mxu0 %v3108
    %3230 = vmatpush1.bf16.msra.mxu0 %v3107
    %3231 = vmatprep.subr.bf16.mxu0 %v3106
    %3232 = vmatpush1.bf16.msra.mxu0 %v3105
    %3233 = vmatprep.subr.bf16.mxu0 %v3104
    %3234 = vmatpush1.bf16.msra.mxu0 %v3103
    %3235 = vmatprep.subr.bf16.mxu0 %v3102
    %3236 = vmatpush1.bf16.msra.mxu0 %v3101
    %3237 = vmatprep.subr.bf16.mxu0 %v3100
    %3238 = vmatpush1.bf16.msra.mxu0 %v3099
    %3239 = vmatprep.subr.bf16.mxu0 %v3098
    %3240 = vmatpush1.bf16.msra.mxu0 %v3097
    %3241 = vmatprep.subr.bf16.mxu0 %v3128
    %3242 = vmatpush2.bf16.msra.mxu0 %v3127
    %3243 = vmatprep.subr.bf16.mxu0 %v3126
    %3244 = vmatpush2.bf16.msra.mxu0 %v3125
    %3245 = vmatprep.subr.bf16.mxu0 %v3124
    %3246 = vmatpush2.bf16.msra.mxu0 %v3123
    %3247 = vmatprep.subr.bf16.mxu0 %v3122
    %3248 = vmatpush2.bf16.msra.mxu0 %v3121
    %3249 = vmatprep.subr.bf16.mxu0 %v3120
    %3250 = vmatpush2.bf16.msra.mxu0 %v3119
    %3251 = vmatprep.subr.bf16.mxu0 %v3118
    %3252 = vmatpush2.bf16.msra.mxu0 %v3117
    %3253 = vmatprep.subr.bf16.mxu0 %v3116
    %3254 = vmatpush2.bf16.msra.mxu0 %v3115
    %3255 = vmatprep.subr.bf16.mxu0 %v3114
    %3256 = vmatpush2.bf16.msra.mxu0 %v3113
    %3257 = vmatprep.mubr.bf16.mxu0 %v2826
    %3258 = vmatmul.mubr.bf16.gmra.mxu0 %v2825
    %v3259 = vpop.f32.mrf.mxu0
    %v3260 = vadd.f32 %v2898, %v3259
    %v3261 = vpop.f32.mrf.mxu0
    %v3262 = vadd.f32 %v2902, %v3261
    %v3263 = vpop.f32.mrf.mxu0
    %v3264 = vpop.f32.mrf.mxu0
    %3265 = vdwg.mxu0
    %3266 = vmatprep.subr.bf16.mxu0 %v3144
    %3267 = vmatpush1.bf16.msra.mxu0 %v3143
    %3268 = vmatprep.subr.bf16.mxu0 %v3142
    %3269 = vmatpush1.bf16.msra.mxu0 %v3141
    %3270 = vmatprep.subr.bf16.mxu0 %v3140
    %3271 = vmatpush1.bf16.msra.mxu0 %v3139
    %3272 = vmatprep.subr.bf16.mxu0 %v3138
    %3273 = vmatpush1.bf16.msra.mxu0 %v3137
    %3274 = vmatprep.subr.bf16.mxu0 %v3136
    %3275 = vmatpush1.bf16.msra.mxu0 %v3135
    %3276 = vmatprep.subr.bf16.mxu0 %v3134
    %3277 = vmatpush1.bf16.msra.mxu0 %v3133
    %3278 = vmatprep.subr.bf16.mxu0 %v3132
    %3279 = vmatpush1.bf16.msra.mxu0 %v3131
    %3280 = vmatprep.subr.bf16.mxu0 %v3130
    %3281 = vmatpush1.bf16.msra.mxu0 %v3129
    %3282 = vmatprep.subr.bf16.mxu0 %v3160
    %3283 = vmatpush2.bf16.msra.mxu0 %v3159
    %3284 = vmatprep.subr.bf16.mxu0 %v3158
    %3285 = vmatpush2.bf16.msra.mxu0 %v3157
    %3286 = vmatprep.subr.bf16.mxu0 %v3156
    %3287 = vmatpush2.bf16.msra.mxu0 %v3155
    %3288 = vmatprep.subr.bf16.mxu0 %v3154
    %3289 = vmatpush2.bf16.msra.mxu0 %v3153
    %3290 = vmatprep.subr.bf16.mxu0 %v3152
    %3291 = vmatpush2.bf16.msra.mxu0 %v3151
    %3292 = vmatprep.subr.bf16.mxu0 %v3150
    %3293 = vmatpush2.bf16.msra.mxu0 %v3149
    %3294 = vmatprep.subr.bf16.mxu0 %v3148
    %3295 = vmatpush2.bf16.msra.mxu0 %v3147
    %3296 = vmatprep.subr.bf16.mxu0 %v3146
    %3297 = vmatpush2.bf16.msra.mxu0 %v3145
    %3298 = vmatprep.mubr.bf16.mxu0 %v2828
    %3299 = vmatmul.mubr.bf16.gmra.mxu0 %v2827
    %v3300 = vpop.f32.mrf.mxu0
    %v3301 = vadd.f32 %v3260, %v3300
    %v3302 = vpop.f32.mrf.mxu0
    %v3303 = vadd.f32 %v3262, %v3302
    %v3304 = vpop.f32.mrf.mxu0
    %v3305 = vpop.f32.mrf.mxu0
    %3306 = vdwg.mxu0
    %v3307 = vmax.f32 %v3301, 0.0
    %v3308 = vmax.f32 %v3303, 0.0
    %v3309 = vpack.c.bf16 %v3307, %v3307
    %v3310 = vpack.c.bf16 %v3308, %v3308
    %v3311 = vld [vmem:[%s2 + $0xa] sm:$0x3]
    %v3312 = vld [vmem:[#allocation6] sm:$0xff]
    %v3313 = vld [vmem:[#allocation6 + $0x8] sm:$0xff]
    %v3314 = vld [vmem:[#allocation6 + $0x10] sm:$0xff]
    %v3315 = vld [vmem:[#allocation6 + $0x18] sm:$0xff]
    %v3316 = vld [vmem:[#allocation6 + $0x20] sm:$0xff]
    %v3317 = vld [vmem:[#allocation6 + $0x28] sm:$0xff]
    %v3318 = vld [vmem:[#allocation6 + $0x30] sm:$0xff]
    %v3319 = vld [vmem:[#allocation6 + $0x38] sm:$0xff]
    %v3320 = vld [vmem:[#allocation6 + $0x40] sm:$0xff]
    %v3321 = vld [vmem:[#allocation6 + $0x48] sm:$0xff]
    %v3322 = vld [vmem:[#allocation6 + $0x50] sm:$0xff]
    %v3323 = vld [vmem:[#allocation6 + $0x58] sm:$0xff]
    %v3324 = vld [vmem:[#allocation6 + $0x60] sm:$0xff]
    %v3325 = vld [vmem:[#allocation6 + $0x68] sm:$0xff]
    %v3326 = vld [vmem:[#allocation6 + $0x70] sm:$0xff]
    %v3327 = vld [vmem:[#allocation6 + $0x78] sm:$0xff]
    %v3328 = vld [vmem:[#allocation6 + $0x80] sm:$0xff]
    %v3329 = vld [vmem:[#allocation6 + $0x88] sm:$0xff]
    %v3330 = vld [vmem:[#allocation6 + $0x90] sm:$0xff]
    %v3331 = vld [vmem:[#allocation6 + $0x98] sm:$0xff]
    %v3332 = vld [vmem:[#allocation6 + $0xa0] sm:$0xff]
    %v3333 = vld [vmem:[#allocation6 + $0xa8] sm:$0xff]
    %v3334 = vld [vmem:[#allocation6 + $0xb0] sm:$0xff]
    %v3335 = vld [vmem:[#allocation6 + $0xb8] sm:$0xff]
    %v3336 = vld [vmem:[#allocation6 + $0xc0] sm:$0xff]
    %v3337 = vld [vmem:[#allocation6 + $0xc8] sm:$0xff]
    %v3338 = vld [vmem:[#allocation6 + $0xd0] sm:$0xff]
    %v3339 = vld [vmem:[#allocation6 + $0xd8] sm:$0xff]
    %v3340 = vld [vmem:[#allocation6 + $0xe0] sm:$0xff]
    %v3341 = vld [vmem:[#allocation6 + $0xe8] sm:$0xff]
    %v3342 = vld [vmem:[#allocation6 + $0xf0] sm:$0xff]
    %v3343 = vld [vmem:[#allocation6 + $0xf8] sm:$0xff]
    %v3345 = vlaneseq
    %v3346 = vshrl.u32 %v3345, 7
    %v3347 = vsub.s32 0, %v3346
    %v3348 = vrot.slane %v3311, %v3347
    %v3349 = vlaneseq
    %v3350 = vshrl.u32 %v3349, 7
    %v3351 = vsub.s32 1, %v3350
    %v3352 = vrot.slane %v3311, %v3351
    %v3387 = vunpack.c.l.b16 %v3312
    %v3388 = vunpack.c.h.b16 %v3312
    %v3389 = vunpack.c.l.b16 %v3313
    %v3390 = vunpack.c.h.b16 %v3313
    %v3391 = vunpack.c.l.b16 %v3314
    %v3392 = vunpack.c.h.b16 %v3314
    %v3393 = vunpack.c.l.b16 %v3315
    %v3394 = vunpack.c.h.b16 %v3315
    %v3395 = vunpack.c.l.b16 %v3316
    %v3396 = vunpack.c.h.b16 %v3316
    %v3397 = vunpack.c.l.b16 %v3317
    %v3398 = vunpack.c.h.b16 %v3317
    %v3399 = vunpack.c.l.b16 %v3318
    %v3400 = vunpack.c.h.b16 %v3318
    %v3401 = vunpack.c.l.b16 %v3319
    %v3402 = vunpack.c.h.b16 %v3319
    %v3403 = vunpack.c.l.b16 %v3320
    %v3404 = vunpack.c.h.b16 %v3320
    %v3405 = vunpack.c.l.b16 %v3321
    %v3406 = vunpack.c.h.b16 %v3321
    %v3407 = vunpack.c.l.b16 %v3322
    %v3408 = vunpack.c.h.b16 %v3322
    %v3409 = vunpack.c.l.b16 %v3323
    %v3410 = vunpack.c.h.b16 %v3323
    %v3411 = vunpack.c.l.b16 %v3324
    %v3412 = vunpack.c.h.b16 %v3324
    %v3413 = vunpack.c.l.b16 %v3325
    %v3414 = vunpack.c.h.b16 %v3325
    %v3415 = vunpack.c.l.b16 %v3326
    %v3416 = vunpack.c.h.b16 %v3326
    %v3417 = vunpack.c.l.b16 %v3327
    %v3418 = vunpack.c.h.b16 %v3327
    %v3419 = vunpack.c.l.b16 %v3328
    %v3420 = vunpack.c.h.b16 %v3328
    %v3421 = vunpack.c.l.b16 %v3329
    %v3422 = vunpack.c.h.b16 %v3329
    %v3423 = vunpack.c.l.b16 %v3330
    %v3424 = vunpack.c.h.b16 %v3330
    %v3425 = vunpack.c.l.b16 %v3331
    %v3426 = vunpack.c.h.b16 %v3331
    %v3427 = vunpack.c.l.b16 %v3332
    %v3428 = vunpack.c.h.b16 %v3332
    %v3429 = vunpack.c.l.b16 %v3333
    %v3430 = vunpack.c.h.b16 %v3333
    %v3431 = vunpack.c.l.b16 %v3334
    %v3432 = vunpack.c.h.b16 %v3334
    %v3433 = vunpack.c.l.b16 %v3335
    %v3434 = vunpack.c.h.b16 %v3335
    %v3435 = vunpack.c.l.b16 %v3336
    %v3436 = vunpack.c.h.b16 %v3336
    %v3437 = vunpack.c.l.b16 %v3337
    %v3438 = vunpack.c.h.b16 %v3337
    %v3439 = vunpack.c.l.b16 %v3338
    %v3440 = vunpack.c.h.b16 %v3338
    %v3441 = vunpack.c.l.b16 %v3339
    %v3442 = vunpack.c.h.b16 %v3339
    %v3443 = vunpack.c.l.b16 %v3340
    %v3444 = vunpack.c.h.b16 %v3340
    %v3445 = vunpack.c.l.b16 %v3341
    %v3446 = vunpack.c.h.b16 %v3341
    %v3447 = vunpack.c.l.b16 %v3342
    %v3448 = vunpack.c.h.b16 %v3342
    %v3449 = vunpack.c.l.b16 %v3343
    %v3450 = vunpack.c.h.b16 %v3343
    %v3451 = vpack.c.b16 %v3389, %v3387
    %v3452 = vpack.c.b16 %v3390, %v3388
    %v3453 = vpack.c.b16 %v3393, %v3391
    %v3454 = vpack.c.b16 %v3394, %v3392
    %v3455 = vpack.c.b16 %v3397, %v3395
    %v3456 = vpack.c.b16 %v3398, %v3396
    %v3457 = vpack.c.b16 %v3401, %v3399
    %v3458 = vpack.c.b16 %v3402, %v3400
    %v3459 = vpack.c.b16 %v3405, %v3403
    %v3460 = vpack.c.b16 %v3406, %v3404
    %v3461 = vpack.c.b16 %v3409, %v3407
    %v3462 = vpack.c.b16 %v3410, %v3408
    %v3463 = vpack.c.b16 %v3413, %v3411
    %v3464 = vpack.c.b16 %v3414, %v3412
    %v3465 = vpack.c.b16 %v3417, %v3415
    %v3466 = vpack.c.b16 %v3418, %v3416
    %v3467 = vpack.c.b16 %v3421, %v3419
    %v3468 = vpack.c.b16 %v3422, %v3420
    %v3469 = vpack.c.b16 %v3425, %v3423
    %v3470 = vpack.c.b16 %v3426, %v3424
    %v3471 = vpack.c.b16 %v3429, %v3427
    %v3472 = vpack.c.b16 %v3430, %v3428
    %v3473 = vpack.c.b16 %v3433, %v3431
    %v3474 = vpack.c.b16 %v3434, %v3432
    %v3475 = vpack.c.b16 %v3437, %v3435
    %v3476 = vpack.c.b16 %v3438, %v3436
    %v3477 = vpack.c.b16 %v3441, %v3439
    %v3478 = vpack.c.b16 %v3442, %v3440
    %v3479 = vpack.c.b16 %v3445, %v3443
    %v3480 = vpack.c.b16 %v3446, %v3444
    %v3481 = vpack.c.b16 %v3449, %v3447
    %v3482 = vpack.c.b16 %v3450, %v3448
    %3515 = vmatprep.subr.bf16.mxu0 %v3466
    %3516 = vmatpush1.bf16.msra.mxu0 %v3465
    %3517 = vmatprep.subr.bf16.mxu0 %v3464
    %3518 = vmatpush1.bf16.msra.mxu0 %v3463
    %3519 = vmatprep.subr.bf16.mxu0 %v3462
    %3520 = vmatpush1.bf16.msra.mxu0 %v3461
    %3521 = vmatprep.subr.bf16.mxu0 %v3460
    %3522 = vmatpush1.bf16.msra.mxu0 %v3459
    %3523 = vmatprep.subr.bf16.mxu0 %v3458
    %3524 = vmatpush1.bf16.msra.mxu0 %v3457
    %3525 = vmatprep.subr.bf16.mxu0 %v3456
    %3526 = vmatpush1.bf16.msra.mxu0 %v3455
    %3527 = vmatprep.subr.bf16.mxu0 %v3454
    %3528 = vmatpush1.bf16.msra.mxu0 %v3453
    %3529 = vmatprep.subr.bf16.mxu0 %v3452
    %3530 = vmatpush1.bf16.msra.mxu0 %v3451
    %3531 = vmatprep.subr.bf16.mxu0 %v3482
    %3532 = vmatpush2.bf16.msra.mxu0 %v3481
    %3533 = vmatprep.subr.bf16.mxu0 %v3480
    %3534 = vmatpush2.bf16.msra.mxu0 %v3479
    %3535 = vmatprep.subr.bf16.mxu0 %v3478
    %3536 = vmatpush2.bf16.msra.mxu0 %v3477
    %3537 = vmatprep.subr.bf16.mxu0 %v3476
    %3538 = vmatpush2.bf16.msra.mxu0 %v3475
    %3539 = vmatprep.subr.bf16.mxu0 %v3474
    %3540 = vmatpush2.bf16.msra.mxu0 %v3473
    %3541 = vmatprep.subr.bf16.mxu0 %v3472
    %3542 = vmatpush2.bf16.msra.mxu0 %v3471
    %3543 = vmatprep.subr.bf16.mxu0 %v3470
    %3544 = vmatpush2.bf16.msra.mxu0 %v3469
    %3545 = vmatprep.subr.bf16.mxu0 %v3468
    %3546 = vmatpush2.bf16.msra.mxu0 %v3467
    %3547 = vmatprep.mubr.bf16.mxu0 %v3310
    %3548 = vmatmul.mubr.bf16.gmra.mxu0 %v3309
    %v3549 = vpop.f32.mrf.mxu0
    %v3550 = vadd.f32 %v3348, %v3549
    %v3551 = vpop.f32.mrf.mxu0
    %v3552 = vadd.f32 %v3352, %v3551
    %v3553 = vpop.f32.mrf.mxu0
    %v3554 = vpop.f32.mrf.mxu0
    %3555 = vdwg.mxu0
    %v3556 = vld [vmem:[%s1] sm:$0xff]
    %v3557 = vmul.f32 %v3552, 0.5
    %v3558 = vmul.f32 %v3557, 1.442695
    %v3559 = vpow.pop %v3558
    %v3560 = vmul.f32 %v3556, %v3559
    %v3561 = vadd.f32 %v3560, %v3550
    %v3562 = vpack.c.bf16 %v3561, %v3561
    %v3563 = vld [vmem:[%s2 + $0xc] sm:$0x3]
    %v3564 = vld [vmem:[#allocation7] sm:$0xff]
    %v3565 = vld [vmem:[#allocation7 + $0x8] sm:$0xff]
    %v3566 = vld [vmem:[#allocation7 + $0x10] sm:$0xff]
    %v3567 = vld [vmem:[#allocation7 + $0x18] sm:$0xff]
    %v3568 = vld [vmem:[#allocation7 + $0x20] sm:$0xff]
    %v3569 = vld [vmem:[#allocation7 + $0x28] sm:$0xff]
    %v3570 = vld [vmem:[#allocation7 + $0x30] sm:$0xff]
    %v3571 = vld [vmem:[#allocation7 + $0x38] sm:$0xff]
    %v3572 = vld [vmem:[#allocation7 + $0x40] sm:$0xff]
    %v3573 = vld [vmem:[#allocation7 + $0x48] sm:$0xff]
    %v3574 = vld [vmem:[#allocation7 + $0x50] sm:$0xff]
    %v3575 = vld [vmem:[#allocation7 + $0x58] sm:$0xff]
    %v3576 = vld [vmem:[#allocation7 + $0x60] sm:$0xff]
    %v3577 = vld [vmem:[#allocation7 + $0x68] sm:$0xff]
    %v3578 = vld [vmem:[#allocation7 + $0x70] sm:$0xff]
    %v3579 = vld [vmem:[#allocation7 + $0x78] sm:$0xff]
    %v3581 = vlaneseq
    %v3582 = vshrl.u32 %v3581, 7
    %v3583 = vsub.s32 0, %v3582
    %v3584 = vrot.slane %v3563, %v3583
    %v3585 = vlaneseq
    %v3586 = vshrl.u32 %v3585, 7
    %v3587 = vsub.s32 1, %v3586
    %v3588 = vrot.slane %v3563, %v3587
    %v3607 = vunpack.c.l.b16 %v3564
    %v3608 = vunpack.c.h.b16 %v3564
    %v3609 = vunpack.c.l.b16 %v3565
    %v3610 = vunpack.c.h.b16 %v3565
    %v3611 = vunpack.c.l.b16 %v3566
    %v3612 = vunpack.c.h.b16 %v3566
    %v3613 = vunpack.c.l.b16 %v3567
    %v3614 = vunpack.c.h.b16 %v3567
    %v3615 = vunpack.c.l.b16 %v3568
    %v3616 = vunpack.c.h.b16 %v3568
    %v3617 = vunpack.c.l.b16 %v3569
    %v3618 = vunpack.c.h.b16 %v3569
    %v3619 = vunpack.c.l.b16 %v3570
    %v3620 = vunpack.c.h.b16 %v3570
    %v3621 = vunpack.c.l.b16 %v3571
    %v3622 = vunpack.c.h.b16 %v3571
    %v3623 = vunpack.c.l.b16 %v3572
    %v3624 = vunpack.c.h.b16 %v3572
    %v3625 = vunpack.c.l.b16 %v3573
    %v3626 = vunpack.c.h.b16 %v3573
    %v3627 = vunpack.c.l.b16 %v3574
    %v3628 = vunpack.c.h.b16 %v3574
    %v3629 = vunpack.c.l.b16 %v3575
    %v3630 = vunpack.c.h.b16 %v3575
    %v3631 = vunpack.c.l.b16 %v3576
    %v3632 = vunpack.c.h.b16 %v3576
    %v3633 = vunpack.c.l.b16 %v3577
    %v3634 = vunpack.c.h.b16 %v3577
    %v3635 = vunpack.c.l.b16 %v3578
    %v3636 = vunpack.c.h.b16 %v3578
    %v3637 = vunpack.c.l.b16 %v3579
    %v3638 = vunpack.c.h.b16 %v3579
    %v3639 = vpack.c.b16 %v3609, %v3607
    %v3640 = vpack.c.b16 %v3610, %v3608
    %v3641 = vpack.c.b16 %v3613, %v3611
    %v3642 = vpack.c.b16 %v3614, %v3612
    %v3643 = vpack.c.b16 %v3617, %v3615
    %v3644 = vpack.c.b16 %v3618, %v3616
    %v3645 = vpack.c.b16 %v3621, %v3619
    %v3646 = vpack.c.b16 %v3622, %v3620
    %v3647 = vpack.c.b16 %v3625, %v3623
    %v3648 = vpack.c.b16 %v3626, %v3624
    %v3649 = vpack.c.b16 %v3629, %v3627
    %v3650 = vpack.c.b16 %v3630, %v3628
    %v3651 = vpack.c.b16 %v3633, %v3631
    %v3652 = vpack.c.b16 %v3634, %v3632
    %v3653 = vpack.c.b16 %v3637, %v3635
    %v3654 = vpack.c.b16 %v3638, %v3636
    %3671 = vmatprep.subr.bf16.mxu0 %v3654
    %3672 = vmatpush1.bf16.msra.mxu0 %v3653
    %3673 = vmatprep.subr.bf16.mxu0 %v3652
    %3674 = vmatpush1.bf16.msra.mxu0 %v3651
    %3675 = vmatprep.subr.bf16.mxu0 %v3650
    %3676 = vmatpush1.bf16.msra.mxu0 %v3649
    %3677 = vmatprep.subr.bf16.mxu0 %v3648
    %3678 = vmatpush1.bf16.msra.mxu0 %v3647
    %3679 = vmatprep.subr.bf16.mxu0 %v3646
    %3680 = vmatpush1.bf16.msra.mxu0 %v3645
    %3681 = vmatprep.subr.bf16.mxu0 %v3644
    %3682 = vmatpush1.bf16.msra.mxu0 %v3643
    %3683 = vmatprep.subr.bf16.mxu0 %v3642
    %3684 = vmatpush1.bf16.msra.mxu0 %v3641
    %3685 = vmatprep.subr.bf16.mxu0 %v3640
    %3686 = vmatpush1.bf16.msra.mxu0 %v3639
    %3687 = vmatprep.subr.bf16.mxu0 0
    %3688 = vmatpush2.bf16.msra.mxu0 0
    %3689 = vmatprep.subr.bf16.mxu0 0
    %3690 = vmatpush2.bf16.msra.mxu0 0
    %3691 = vmatprep.subr.bf16.mxu0 0
    %3692 = vmatpush2.bf16.msra.mxu0 0
    %3693 = vmatprep.subr.bf16.mxu0 0
    %3694 = vmatpush2.bf16.msra.mxu0 0
    %3695 = vmatprep.subr.bf16.mxu0 0
    %3696 = vmatpush2.bf16.msra.mxu0 0
    %3697 = vmatprep.subr.bf16.mxu0 0
    %3698 = vmatpush2.bf16.msra.mxu0 0
    %3699 = vmatprep.subr.bf16.mxu0 0
    %3700 = vmatpush2.bf16.msra.mxu0 0
    %3701 = vmatprep.subr.bf16.mxu0 0
    %3702 = vmatpush2.bf16.msra.mxu0 0
    %3703 = vmatprep.mubr.bf16.mxu0 0
    %3704 = vmatmul.mubr.bf16.gmra.mxu0 %v3562
    %v3705 = vpop.f32.mrf.mxu0
    %v3706 = vadd.f32 %v3584, %v3705
    %v3707 = vpop.f32.mrf.mxu0
    %v3708 = vadd.f32 %v3588, %v3707
    %v3709 = vpop.f32.mrf.mxu0
    %v3710 = vpop.f32.mrf.mxu0
    %3711 = vdwg.mxu0
    %v3712 = vmax.f32 %v3706, 0.0
    %v3713 = vmax.f32 %v3708, 0.0
    %v3714 = vpack.c.bf16 %v3712, %v3712
    %v3715 = vpack.c.bf16 %v3713, %v3713
    %v3716 = vld [vmem:[%s2 + $0xe] sm:$0xf]
    %v3717 = vld [vmem:[#allocation9] sm:$0xff]
    %v3718 = vld [vmem:[#allocation9 + $0x8] sm:$0xff]
    %v3719 = vld [vmem:[#allocation9 + $0x10] sm:$0xff]
    %v3720 = vld [vmem:[#allocation9 + $0x18] sm:$0xff]
    %v3721 = vld [vmem:[#allocation9 + $0x20] sm:$0xff]
    %v3722 = vld [vmem:[#allocation9 + $0x28] sm:$0xff]
    %v3723 = vld [vmem:[#allocation9 + $0x30] sm:$0xff]
    %v3724 = vld [vmem:[#allocation9 + $0x38] sm:$0xff]
    %v3725 = vld [vmem:[#allocation9 + $0x40] sm:$0xff]
    %v3726 = vld [vmem:[#allocation9 + $0x48] sm:$0xff]
    %v3727 = vld [vmem:[#allocation9 + $0x50] sm:$0xff]
    %v3728 = vld [vmem:[#allocation9 + $0x58] sm:$0xff]
    %v3729 = vld [vmem:[#allocation9 + $0x60] sm:$0xff]
    %v3730 = vld [vmem:[#allocation9 + $0x68] sm:$0xff]
    %v3731 = vld [vmem:[#allocation9 + $0x70] sm:$0xff]
    %v3732 = vld [vmem:[#allocation9 + $0x78] sm:$0xff]
    %v3733 = vld [vmem:[#allocation9 + $0x80] sm:$0xff]
    %v3734 = vld [vmem:[#allocation9 + $0x88] sm:$0xff]
    %v3735 = vld [vmem:[#allocation9 + $0x90] sm:$0xff]
    %v3736 = vld [vmem:[#allocation9 + $0x98] sm:$0xff]
    %v3737 = vld [vmem:[#allocation9 + $0xa0] sm:$0xff]
    %v3738 = vld [vmem:[#allocation9 + $0xa8] sm:$0xff]
    %v3739 = vld [vmem:[#allocation9 + $0xb0] sm:$0xff]
    %v3740 = vld [vmem:[#allocation9 + $0xb8] sm:$0xff]
    %v3741 = vld [vmem:[#allocation9 + $0xc0] sm:$0xff]
    %v3742 = vld [vmem:[#allocation9 + $0xc8] sm:$0xff]
    %v3743 = vld [vmem:[#allocation9 + $0xd0] sm:$0xff]
    %v3744 = vld [vmem:[#allocation9 + $0xd8] sm:$0xff]
    %v3745 = vld [vmem:[#allocation9 + $0xe0] sm:$0xff]
    %v3746 = vld [vmem:[#allocation9 + $0xe8] sm:$0xff]
    %v3747 = vld [vmem:[#allocation9 + $0xf0] sm:$0xff]
    %v3748 = vld [vmem:[#allocation9 + $0xf8] sm:$0xff]
    %v3749 = vld [vmem:[#allocation9 + $0x100] sm:$0xff]
    %v3750 = vld [vmem:[#allocation9 + $0x108] sm:$0xff]
    %v3751 = vld [vmem:[#allocation9 + $0x110] sm:$0xff]
    %v3752 = vld [vmem:[#allocation9 + $0x118] sm:$0xff]
    %v3753 = vld [vmem:[#allocation9 + $0x120] sm:$0xff]
    %v3754 = vld [vmem:[#allocation9 + $0x128] sm:$0xff]
    %v3755 = vld [vmem:[#allocation9 + $0x130] sm:$0xff]
    %v3756 = vld [vmem:[#allocation9 + $0x138] sm:$0xff]
    %v3757 = vld [vmem:[#allocation9 + $0x140] sm:$0xff]
    %v3758 = vld [vmem:[#allocation9 + $0x148] sm:$0xff]
    %v3759 = vld [vmem:[#allocation9 + $0x150] sm:$0xff]
    %v3760 = vld [vmem:[#allocation9 + $0x158] sm:$0xff]
    %v3761 = vld [vmem:[#allocation9 + $0x160] sm:$0xff]
    %v3762 = vld [vmem:[#allocation9 + $0x168] sm:$0xff]
    %v3763 = vld [vmem:[#allocation9 + $0x170] sm:$0xff]
    %v3764 = vld [vmem:[#allocation9 + $0x178] sm:$0xff]
    %v3765 = vld [vmem:[#allocation9 + $0x180] sm:$0xff]
    %v3766 = vld [vmem:[#allocation9 + $0x188] sm:$0xff]
    %v3767 = vld [vmem:[#allocation9 + $0x190] sm:$0xff]
    %v3768 = vld [vmem:[#allocation9 + $0x198] sm:$0xff]
    %v3769 = vld [vmem:[#allocation9 + $0x1a0] sm:$0xff]
    %v3770 = vld [vmem:[#allocation9 + $0x1a8] sm:$0xff]
    %v3771 = vld [vmem:[#allocation9 + $0x1b0] sm:$0xff]
    %v3772 = vld [vmem:[#allocation9 + $0x1b8] sm:$0xff]
    %v3773 = vld [vmem:[#allocation9 + $0x1c0] sm:$0xff]
    %v3774 = vld [vmem:[#allocation9 + $0x1c8] sm:$0xff]
    %v3775 = vld [vmem:[#allocation9 + $0x1d0] sm:$0xff]
    %v3776 = vld [vmem:[#allocation9 + $0x1d8] sm:$0xff]
    %v3777 = vld [vmem:[#allocation9 + $0x1e0] sm:$0xff]
    %v3778 = vld [vmem:[#allocation9 + $0x1e8] sm:$0xff]
    %v3779 = vld [vmem:[#allocation9 + $0x1f0] sm:$0xff]
    %v3780 = vld [vmem:[#allocation9 + $0x1f8] sm:$0xff]
    %v3782 = vlaneseq
    %v3783 = vshrl.u32 %v3782, 7
    %v3784 = vsub.s32 0, %v3783
    %v3785 = vrot.slane %v3716, %v3784
    %v3786 = vlaneseq
    %v3787 = vshrl.u32 %v3786, 7
    %v3788 = vsub.s32 1, %v3787
    %v3789 = vrot.slane %v3716, %v3788
    %v3790 = vlaneseq
    %v3791 = vshrl.u32 %v3790, 7
    %v3792 = vsub.s32 2, %v3791
    %v3793 = vrot.slane %v3716, %v3792
    %v3794 = vlaneseq
    %v3795 = vshrl.u32 %v3794, 7
    %v3796 = vsub.s32 3, %v3795
    %v3797 = vrot.slane %v3716, %v3796
    %v3866 = vunpack.c.l.b16 %v3717
    %v3867 = vunpack.c.h.b16 %v3717
    %v3868 = vunpack.c.l.b16 %v3718
    %v3869 = vunpack.c.h.b16 %v3718
    %v3870 = vunpack.c.l.b16 %v3719
    %v3871 = vunpack.c.h.b16 %v3719
    %v3872 = vunpack.c.l.b16 %v3720
    %v3873 = vunpack.c.h.b16 %v3720
    %v3874 = vunpack.c.l.b16 %v3721
    %v3875 = vunpack.c.h.b16 %v3721
    %v3876 = vunpack.c.l.b16 %v3722
    %v3877 = vunpack.c.h.b16 %v3722
    %v3878 = vunpack.c.l.b16 %v3723
    %v3879 = vunpack.c.h.b16 %v3723
    %v3880 = vunpack.c.l.b16 %v3724
    %v3881 = vunpack.c.h.b16 %v3724
    %v3882 = vunpack.c.l.b16 %v3725
    %v3883 = vunpack.c.h.b16 %v3725
    %v3884 = vunpack.c.l.b16 %v3726
    %v3885 = vunpack.c.h.b16 %v3726
    %v3886 = vunpack.c.l.b16 %v3727
    %v3887 = vunpack.c.h.b16 %v3727
    %v3888 = vunpack.c.l.b16 %v3728
    %v3889 = vunpack.c.h.b16 %v3728
    %v3890 = vunpack.c.l.b16 %v3729
    %v3891 = vunpack.c.h.b16 %v3729
    %v3892 = vunpack.c.l.b16 %v3730
    %v3893 = vunpack.c.h.b16 %v3730
    %v3894 = vunpack.c.l.b16 %v3731
    %v3895 = vunpack.c.h.b16 %v3731
    %v3896 = vunpack.c.l.b16 %v3732
    %v3897 = vunpack.c.h.b16 %v3732
    %v3898 = vunpack.c.l.b16 %v3733
    %v3899 = vunpack.c.h.b16 %v3733
    %v3900 = vunpack.c.l.b16 %v3734
    %v3901 = vunpack.c.h.b16 %v3734
    %v3902 = vunpack.c.l.b16 %v3735
    %v3903 = vunpack.c.h.b16 %v3735
    %v3904 = vunpack.c.l.b16 %v3736
    %v3905 = vunpack.c.h.b16 %v3736
    %v3906 = vunpack.c.l.b16 %v3737
    %v3907 = vunpack.c.h.b16 %v3737
    %v3908 = vunpack.c.l.b16 %v3738
    %v3909 = vunpack.c.h.b16 %v3738
    %v3910 = vunpack.c.l.b16 %v3739
    %v3911 = vunpack.c.h.b16 %v3739
    %v3912 = vunpack.c.l.b16 %v3740
    %v3913 = vunpack.c.h.b16 %v3740
    %v3914 = vunpack.c.l.b16 %v3741
    %v3915 = vunpack.c.h.b16 %v3741
    %v3916 = vunpack.c.l.b16 %v3742
    %v3917 = vunpack.c.h.b16 %v3742
    %v3918 = vunpack.c.l.b16 %v3743
    %v3919 = vunpack.c.h.b16 %v3743
    %v3920 = vunpack.c.l.b16 %v3744
    %v3921 = vunpack.c.h.b16 %v3744
    %v3922 = vunpack.c.l.b16 %v3745
    %v3923 = vunpack.c.h.b16 %v3745
    %v3924 = vunpack.c.l.b16 %v3746
    %v3925 = vunpack.c.h.b16 %v3746
    %v3926 = vunpack.c.l.b16 %v3747
    %v3927 = vunpack.c.h.b16 %v3747
    %v3928 = vunpack.c.l.b16 %v3748
    %v3929 = vunpack.c.h.b16 %v3748
    %v3930 = vunpack.c.l.b16 %v3749
    %v3931 = vunpack.c.h.b16 %v3749
    %v3932 = vunpack.c.l.b16 %v3750
    %v3933 = vunpack.c.h.b16 %v3750
    %v3934 = vunpack.c.l.b16 %v3751
    %v3935 = vunpack.c.h.b16 %v3751
    %v3936 = vunpack.c.l.b16 %v3752
    %v3937 = vunpack.c.h.b16 %v3752
    %v3938 = vunpack.c.l.b16 %v3753
    %v3939 = vunpack.c.h.b16 %v3753
    %v3940 = vunpack.c.l.b16 %v3754
    %v3941 = vunpack.c.h.b16 %v3754
    %v3942 = vunpack.c.l.b16 %v3755
    %v3943 = vunpack.c.h.b16 %v3755
    %v3944 = vunpack.c.l.b16 %v3756
    %v3945 = vunpack.c.h.b16 %v3756
    %v3946 = vunpack.c.l.b16 %v3757
    %v3947 = vunpack.c.h.b16 %v3757
    %v3948 = vunpack.c.l.b16 %v3758
    %v3949 = vunpack.c.h.b16 %v3758
    %v3950 = vunpack.c.l.b16 %v3759
    %v3951 = vunpack.c.h.b16 %v3759
    %v3952 = vunpack.c.l.b16 %v3760
    %v3953 = vunpack.c.h.b16 %v3760
    %v3954 = vunpack.c.l.b16 %v3761
    %v3955 = vunpack.c.h.b16 %v3761
    %v3956 = vunpack.c.l.b16 %v3762
    %v3957 = vunpack.c.h.b16 %v3762
    %v3958 = vunpack.c.l.b16 %v3763
    %v3959 = vunpack.c.h.b16 %v3763
    %v3960 = vunpack.c.l.b16 %v3764
    %v3961 = vunpack.c.h.b16 %v3764
    %v3962 = vunpack.c.l.b16 %v3765
    %v3963 = vunpack.c.h.b16 %v3765
    %v3964 = vunpack.c.l.b16 %v3766
    %v3965 = vunpack.c.h.b16 %v3766
    %v3966 = vunpack.c.l.b16 %v3767
    %v3967 = vunpack.c.h.b16 %v3767
    %v3968 = vunpack.c.l.b16 %v3768
    %v3969 = vunpack.c.h.b16 %v3768
    %v3970 = vunpack.c.l.b16 %v3769
    %v3971 = vunpack.c.h.b16 %v3769
    %v3972 = vunpack.c.l.b16 %v3770
    %v3973 = vunpack.c.h.b16 %v3770
    %v3974 = vunpack.c.l.b16 %v3771
    %v3975 = vunpack.c.h.b16 %v3771
    %v3976 = vunpack.c.l.b16 %v3772
    %v3977 = vunpack.c.h.b16 %v3772
    %v3978 = vunpack.c.l.b16 %v3773
    %v3979 = vunpack.c.h.b16 %v3773
    %v3980 = vunpack.c.l.b16 %v3774
    %v3981 = vunpack.c.h.b16 %v3774
    %v3982 = vunpack.c.l.b16 %v3775
    %v3983 = vunpack.c.h.b16 %v3775
    %v3984 = vunpack.c.l.b16 %v3776
    %v3985 = vunpack.c.h.b16 %v3776
    %v3986 = vunpack.c.l.b16 %v3777
    %v3987 = vunpack.c.h.b16 %v3777
    %v3988 = vunpack.c.l.b16 %v3778
    %v3989 = vunpack.c.h.b16 %v3778
    %v3990 = vunpack.c.l.b16 %v3779
    %v3991 = vunpack.c.h.b16 %v3779
    %v3992 = vunpack.c.l.b16 %v3780
    %v3993 = vunpack.c.h.b16 %v3780
    %v3994 = vpack.c.b16 %v3870, %v3866
    %v3995 = vpack.c.b16 %v3871, %v3867
    %v3996 = vpack.c.b16 %v3872, %v3868
    %v3997 = vpack.c.b16 %v3873, %v3869
    %v3998 = vpack.c.b16 %v3878, %v3874
    %v3999 = vpack.c.b16 %v3879, %v3875
    %v4000 = vpack.c.b16 %v3880, %v3876
    %v4001 = vpack.c.b16 %v3881, %v3877
    %v4002 = vpack.c.b16 %v3886, %v3882
    %v4003 = vpack.c.b16 %v3887, %v3883
    %v4004 = vpack.c.b16 %v3888, %v3884
    %v4005 = vpack.c.b16 %v3889, %v3885
    %v4006 = vpack.c.b16 %v3894, %v3890
    %v4007 = vpack.c.b16 %v3895, %v3891
    %v4008 = vpack.c.b16 %v3896, %v3892
    %v4009 = vpack.c.b16 %v3897, %v3893
    %v4010 = vpack.c.b16 %v3902, %v3898
    %v4011 = vpack.c.b16 %v3903, %v3899
    %v4012 = vpack.c.b16 %v3904, %v3900
    %v4013 = vpack.c.b16 %v3905, %v3901
    %v4014 = vpack.c.b16 %v3910, %v3906
    %v4015 = vpack.c.b16 %v3911, %v3907
    %v4016 = vpack.c.b16 %v3912, %v3908
    %v4017 = vpack.c.b16 %v3913, %v3909
    %v4018 = vpack.c.b16 %v3918, %v3914
    %v4019 = vpack.c.b16 %v3919, %v3915
    %v4020 = vpack.c.b16 %v3920, %v3916
    %v4021 = vpack.c.b16 %v3921, %v3917
    %v4022 = vpack.c.b16 %v3926, %v3922
    %v4023 = vpack.c.b16 %v3927, %v3923
    %v4024 = vpack.c.b16 %v3928, %v3924
    %v4025 = vpack.c.b16 %v3929, %v3925
    %v4026 = vpack.c.b16 %v3934, %v3930
    %v4027 = vpack.c.b16 %v3935, %v3931
    %v4028 = vpack.c.b16 %v3936, %v3932
    %v4029 = vpack.c.b16 %v3937, %v3933
    %v4030 = vpack.c.b16 %v3942, %v3938
    %v4031 = vpack.c.b16 %v3943, %v3939
    %v4032 = vpack.c.b16 %v3944, %v3940
    %v4033 = vpack.c.b16 %v3945, %v3941
    %v4034 = vpack.c.b16 %v3950, %v3946
    %v4035 = vpack.c.b16 %v3951, %v3947
    %v4036 = vpack.c.b16 %v3952, %v3948
    %v4037 = vpack.c.b16 %v3953, %v3949
    %v4038 = vpack.c.b16 %v3958, %v3954
    %v4039 = vpack.c.b16 %v3959, %v3955
    %v4040 = vpack.c.b16 %v3960, %v3956
    %v4041 = vpack.c.b16 %v3961, %v3957
    %v4042 = vpack.c.b16 %v3966, %v3962
    %v4043 = vpack.c.b16 %v3967, %v3963
    %v4044 = vpack.c.b16 %v3968, %v3964
    %v4045 = vpack.c.b16 %v3969, %v3965
    %v4046 = vpack.c.b16 %v3974, %v3970
    %v4047 = vpack.c.b16 %v3975, %v3971
    %v4048 = vpack.c.b16 %v3976, %v3972
    %v4049 = vpack.c.b16 %v3977, %v3973
    %v4050 = vpack.c.b16 %v3982, %v3978
    %v4051 = vpack.c.b16 %v3983, %v3979
    %v4052 = vpack.c.b16 %v3984, %v3980
    %v4053 = vpack.c.b16 %v3985, %v3981
    %v4054 = vpack.c.b16 %v3990, %v3986
    %v4055 = vpack.c.b16 %v3991, %v3987
    %v4056 = vpack.c.b16 %v3992, %v3988
    %v4057 = vpack.c.b16 %v3993, %v3989
    %4122 = vmatprep.subr.bf16.mxu0 %v4023
    %4123 = vmatpush1.bf16.msra.mxu0 %v4022
    %4124 = vmatprep.subr.bf16.mxu0 %v4019
    %4125 = vmatpush1.bf16.msra.mxu0 %v4018
    %4126 = vmatprep.subr.bf16.mxu0 %v4015
    %4127 = vmatpush1.bf16.msra.mxu0 %v4014
    %4128 = vmatprep.subr.bf16.mxu0 %v4011
    %4129 = vmatpush1.bf16.msra.mxu0 %v4010
    %4130 = vmatprep.subr.bf16.mxu0 %v4007
    %4131 = vmatpush1.bf16.msra.mxu0 %v4006
    %4132 = vmatprep.subr.bf16.mxu0 %v4003
    %4133 = vmatpush1.bf16.msra.mxu0 %v4002
    %4134 = vmatprep.subr.bf16.mxu0 %v3999
    %4135 = vmatpush1.bf16.msra.mxu0 %v3998
    %4136 = vmatprep.subr.bf16.mxu0 %v3995
    %4137 = vmatpush1.bf16.msra.mxu0 %v3994
    %4138 = vmatprep.subr.bf16.mxu0 %v4055
    %4139 = vmatpush2.bf16.msra.mxu0 %v4054
    %4140 = vmatprep.subr.bf16.mxu0 %v4051
    %4141 = vmatpush2.bf16.msra.mxu0 %v4050
    %4142 = vmatprep.subr.bf16.mxu0 %v4047
    %4143 = vmatpush2.bf16.msra.mxu0 %v4046
    %4144 = vmatprep.subr.bf16.mxu0 %v4043
    %4145 = vmatpush2.bf16.msra.mxu0 %v4042
    %4146 = vmatprep.subr.bf16.mxu0 %v4039
    %4147 = vmatpush2.bf16.msra.mxu0 %v4038
    %4148 = vmatprep.subr.bf16.mxu0 %v4035
    %4149 = vmatpush2.bf16.msra.mxu0 %v4034
    %4150 = vmatprep.subr.bf16.mxu0 %v4031
    %4151 = vmatpush2.bf16.msra.mxu0 %v4030
    %4152 = vmatprep.subr.bf16.mxu0 %v4027
    %4153 = vmatpush2.bf16.msra.mxu0 %v4026
    %4154 = vmatprep.mubr.bf16.mxu0 %v3715
    %4155 = vmatmul.mubr.bf16.gmra.mxu0 %v3714
    %v4156 = vpop.f32.mrf.mxu0
    %v4157 = vadd.f32 %v3785, %v4156
    %v4158 = vpop.f32.mrf.mxu0
    %v4159 = vadd.f32 %v3789, %v4158
    %v4160 = vpop.f32.mrf.mxu0
    %v4161 = vpop.f32.mrf.mxu0
    %4162 = vdwg.mxu0
    %4163 = vmatprep.subr.bf16.mxu0 %v4025
    %4164 = vmatpush1.bf16.msra.mxu0 %v4024
    %4165 = vmatprep.subr.bf16.mxu0 %v4021
    %4166 = vmatpush1.bf16.msra.mxu0 %v4020
    %4167 = vmatprep.subr.bf16.mxu0 %v4017
    %4168 = vmatpush1.bf16.msra.mxu0 %v4016
    %4169 = vmatprep.subr.bf16.mxu0 %v4013
    %4170 = vmatpush1.bf16.msra.mxu0 %v4012
    %4171 = vmatprep.subr.bf16.mxu0 %v4009
    %4172 = vmatpush1.bf16.msra.mxu0 %v4008
    %4173 = vmatprep.subr.bf16.mxu0 %v4005
    %4174 = vmatpush1.bf16.msra.mxu0 %v4004
    %4175 = vmatprep.subr.bf16.mxu0 %v4001
    %4176 = vmatpush1.bf16.msra.mxu0 %v4000
    %4177 = vmatprep.subr.bf16.mxu0 %v3997
    %4178 = vmatpush1.bf16.msra.mxu0 %v3996
    %4179 = vmatprep.subr.bf16.mxu0 %v4057
    %4180 = vmatpush2.bf16.msra.mxu0 %v4056
    %4181 = vmatprep.subr.bf16.mxu0 %v4053
    %4182 = vmatpush2.bf16.msra.mxu0 %v4052
    %4183 = vmatprep.subr.bf16.mxu0 %v4049
    %4184 = vmatpush2.bf16.msra.mxu0 %v4048
    %4185 = vmatprep.subr.bf16.mxu0 %v4045
    %4186 = vmatpush2.bf16.msra.mxu0 %v4044
    %4187 = vmatprep.subr.bf16.mxu0 %v4041
    %4188 = vmatpush2.bf16.msra.mxu0 %v4040
    %4189 = vmatprep.subr.bf16.mxu0 %v4037
    %4190 = vmatpush2.bf16.msra.mxu0 %v4036
    %4191 = vmatprep.subr.bf16.mxu0 %v4033
    %4192 = vmatpush2.bf16.msra.mxu0 %v4032
    %4193 = vmatprep.subr.bf16.mxu0 %v4029
    %4194 = vmatpush2.bf16.msra.mxu0 %v4028
    %4195 = vmatprep.mubr.bf16.mxu0 %v3715
    %4196 = vmatmul.mubr.bf16.gmra.mxu0 %v3714
    %v4197 = vpop.f32.mrf.mxu0
    %v4198 = vadd.f32 %v3793, %v4197
    %v4199 = vpop.f32.mrf.mxu0
    %v4200 = vadd.f32 %v3797, %v4199
    %v4201 = vpop.f32.mrf.mxu0
    %v4202 = vpop.f32.mrf.mxu0
    %4203 = vdwg.mxu0
    %v4204 = vmax.f32 %v4157, 0.0
    %v4205 = vmax.f32 %v4159, 0.0
    %v4206 = vmax.f32 %v4198, 0.0
    %v4207 = vmax.f32 %v4200, 0.0
    %v4208 = vpack.c.bf16 %v4204, %v4204
    %v4209 = vpack.c.bf16 %v4205, %v4205
    %v4210 = vpack.c.bf16 %v4206, %v4206
    %v4211 = vpack.c.bf16 %v4207, %v4207
    %v4212 = vld [vmem:[%s2 + $0x12] sm:$0xf]
    %v4213 = vld [vmem:[#allocation10] sm:$0xff]
    %v4214 = vld [vmem:[#allocation10 + $0x8] sm:$0xff]
    %v4215 = vld [vmem:[#allocation10 + $0x10] sm:$0xff]
    %v4216 = vld [vmem:[#allocation10 + $0x18] sm:$0xff]
    %v4217 = vld [vmem:[#allocation10 + $0x20] sm:$0xff]
    %v4218 = vld [vmem:[#allocation10 + $0x28] sm:$0xff]
    %v4219 = vld [vmem:[#allocation10 + $0x30] sm:$0xff]
    %v4220 = vld [vmem:[#allocation10 + $0x38] sm:$0xff]
    %v4221 = vld [vmem:[#allocation10 + $0x40] sm:$0xff]
    %v4222 = vld [vmem:[#allocation10 + $0x48] sm:$0xff]
    %v4223 = vld [vmem:[#allocation10 + $0x50] sm:$0xff]
    %v4224 = vld [vmem:[#allocation10 + $0x58] sm:$0xff]
    %v4225 = vld [vmem:[#allocation10 + $0x60] sm:$0xff]
    %v4226 = vld [vmem:[#allocation10 + $0x68] sm:$0xff]
    %v4227 = vld [vmem:[#allocation10 + $0x70] sm:$0xff]
    %v4228 = vld [vmem:[#allocation10 + $0x78] sm:$0xff]
    %v4229 = vld [vmem:[#allocation10 + $0x80] sm:$0xff]
    %v4230 = vld [vmem:[#allocation10 + $0x88] sm:$0xff]
    %v4231 = vld [vmem:[#allocation10 + $0x90] sm:$0xff]
    %v4232 = vld [vmem:[#allocation10 + $0x98] sm:$0xff]
    %v4233 = vld [vmem:[#allocation10 + $0xa0] sm:$0xff]
    %v4234 = vld [vmem:[#allocation10 + $0xa8] sm:$0xff]
    %v4235 = vld [vmem:[#allocation10 + $0xb0] sm:$0xff]
    %v4236 = vld [vmem:[#allocation10 + $0xb8] sm:$0xff]
    %v4237 = vld [vmem:[#allocation10 + $0xc0] sm:$0xff]
    %v4238 = vld [vmem:[#allocation10 + $0xc8] sm:$0xff]
    %v4239 = vld [vmem:[#allocation10 + $0xd0] sm:$0xff]
    %v4240 = vld [vmem:[#allocation10 + $0xd8] sm:$0xff]
    %v4241 = vld [vmem:[#allocation10 + $0xe0] sm:$0xff]
    %v4242 = vld [vmem:[#allocation10 + $0xe8] sm:$0xff]
    %v4243 = vld [vmem:[#allocation10 + $0xf0] sm:$0xff]
    %v4244 = vld [vmem:[#allocation10 + $0xf8] sm:$0xff]
    %v4245 = vld [vmem:[#allocation10 + $0x100] sm:$0xff]
    %v4246 = vld [vmem:[#allocation10 + $0x108] sm:$0xff]
    %v4247 = vld [vmem:[#allocation10 + $0x110] sm:$0xff]
    %v4248 = vld [vmem:[#allocation10 + $0x118] sm:$0xff]
    %v4249 = vld [vmem:[#allocation10 + $0x120] sm:$0xff]
    %v4250 = vld [vmem:[#allocation10 + $0x128] sm:$0xff]
    %v4251 = vld [vmem:[#allocation10 + $0x130] sm:$0xff]
    %v4252 = vld [vmem:[#allocation10 + $0x138] sm:$0xff]
    %v4253 = vld [vmem:[#allocation10 + $0x140] sm:$0xff]
    %v4254 = vld [vmem:[#allocation10 + $0x148] sm:$0xff]
    %v4255 = vld [vmem:[#allocation10 + $0x150] sm:$0xff]
    %v4256 = vld [vmem:[#allocation10 + $0x158] sm:$0xff]
    %v4257 = vld [vmem:[#allocation10 + $0x160] sm:$0xff]
    %v4258 = vld [vmem:[#allocation10 + $0x168] sm:$0xff]
    %v4259 = vld [vmem:[#allocation10 + $0x170] sm:$0xff]
    %v4260 = vld [vmem:[#allocation10 + $0x178] sm:$0xff]
    %v4261 = vld [vmem:[#allocation10 + $0x180] sm:$0xff]
    %v4262 = vld [vmem:[#allocation10 + $0x188] sm:$0xff]
    %v4263 = vld [vmem:[#allocation10 + $0x190] sm:$0xff]
    %v4264 = vld [vmem:[#allocation10 + $0x198] sm:$0xff]
    %v4265 = vld [vmem:[#allocation10 + $0x1a0] sm:$0xff]
    %v4266 = vld [vmem:[#allocation10 + $0x1a8] sm:$0xff]
    %v4267 = vld [vmem:[#allocation10 + $0x1b0] sm:$0xff]
    %v4268 = vld [vmem:[#allocation10 + $0x1b8] sm:$0xff]
    %v4269 = vld [vmem:[#allocation10 + $0x1c0] sm:$0xff]
    %v4270 = vld [vmem:[#allocation10 + $0x1c8] sm:$0xff]
    %v4271 = vld [vmem:[#allocation10 + $0x1d0] sm:$0xff]
    %v4272 = vld [vmem:[#allocation10 + $0x1d8] sm:$0xff]
    %v4273 = vld [vmem:[#allocation10 + $0x1e0] sm:$0xff]
    %v4274 = vld [vmem:[#allocation10 + $0x1e8] sm:$0xff]
    %v4275 = vld [vmem:[#allocation10 + $0x1f0] sm:$0xff]
    %v4276 = vld [vmem:[#allocation10 + $0x1f8] sm:$0xff]
    %v4277 = vld [vmem:[#allocation10 + $0x200] sm:$0xff]
    %v4278 = vld [vmem:[#allocation10 + $0x208] sm:$0xff]
    %v4279 = vld [vmem:[#allocation10 + $0x210] sm:$0xff]
    %v4280 = vld [vmem:[#allocation10 + $0x218] sm:$0xff]
    %v4281 = vld [vmem:[#allocation10 + $0x220] sm:$0xff]
    %v4282 = vld [vmem:[#allocation10 + $0x228] sm:$0xff]
    %v4283 = vld [vmem:[#allocation10 + $0x230] sm:$0xff]
    %v4284 = vld [vmem:[#allocation10 + $0x238] sm:$0xff]
    %v4285 = vld [vmem:[#allocation10 + $0x240] sm:$0xff]
    %v4286 = vld [vmem:[#allocation10 + $0x248] sm:$0xff]
    %v4287 = vld [vmem:[#allocation10 + $0x250] sm:$0xff]
    %v4288 = vld [vmem:[#allocation10 + $0x258] sm:$0xff]
    %v4289 = vld [vmem:[#allocation10 + $0x260] sm:$0xff]
    %v4290 = vld [vmem:[#allocation10 + $0x268] sm:$0xff]
    %v4291 = vld [vmem:[#allocation10 + $0x270] sm:$0xff]
    %v4292 = vld [vmem:[#allocation10 + $0x278] sm:$0xff]
    %v4293 = vld [vmem:[#allocation10 + $0x280] sm:$0xff]
    %v4294 = vld [vmem:[#allocation10 + $0x288] sm:$0xff]
    %v4295 = vld [vmem:[#allocation10 + $0x290] sm:$0xff]
    %v4296 = vld [vmem:[#allocation10 + $0x298] sm:$0xff]
    %v4297 = vld [vmem:[#allocation10 + $0x2a0] sm:$0xff]
    %v4298 = vld [vmem:[#allocation10 + $0x2a8] sm:$0xff]
    %v4299 = vld [vmem:[#allocation10 + $0x2b0] sm:$0xff]
    %v4300 = vld [vmem:[#allocation10 + $0x2b8] sm:$0xff]
    %v4301 = vld [vmem:[#allocation10 + $0x2c0] sm:$0xff]
    %v4302 = vld [vmem:[#allocation10 + $0x2c8] sm:$0xff]
    %v4303 = vld [vmem:[#allocation10 + $0x2d0] sm:$0xff]
    %v4304 = vld [vmem:[#allocation10 + $0x2d8] sm:$0xff]
    %v4305 = vld [vmem:[#allocation10 + $0x2e0] sm:$0xff]
    %v4306 = vld [vmem:[#allocation10 + $0x2e8] sm:$0xff]
    %v4307 = vld [vmem:[#allocation10 + $0x2f0] sm:$0xff]
    %v4308 = vld [vmem:[#allocation10 + $0x2f8] sm:$0xff]
    %v4309 = vld [vmem:[#allocation10 + $0x300] sm:$0xff]
    %v4310 = vld [vmem:[#allocation10 + $0x308] sm:$0xff]
    %v4311 = vld [vmem:[#allocation10 + $0x310] sm:$0xff]
    %v4312 = vld [vmem:[#allocation10 + $0x318] sm:$0xff]
    %v4313 = vld [vmem:[#allocation10 + $0x320] sm:$0xff]
    %v4314 = vld [vmem:[#allocation10 + $0x328] sm:$0xff]
    %v4315 = vld [vmem:[#allocation10 + $0x330] sm:$0xff]
    %v4316 = vld [vmem:[#allocation10 + $0x338] sm:$0xff]
    %v4317 = vld [vmem:[#allocation10 + $0x340] sm:$0xff]
    %v4318 = vld [vmem:[#allocation10 + $0x348] sm:$0xff]
    %v4319 = vld [vmem:[#allocation10 + $0x350] sm:$0xff]
    %v4320 = vld [vmem:[#allocation10 + $0x358] sm:$0xff]
    %v4321 = vld [vmem:[#allocation10 + $0x360] sm:$0xff]
    %v4322 = vld [vmem:[#allocation10 + $0x368] sm:$0xff]
    %v4323 = vld [vmem:[#allocation10 + $0x370] sm:$0xff]
    %v4324 = vld [vmem:[#allocation10 + $0x378] sm:$0xff]
    %v4325 = vld [vmem:[#allocation10 + $0x380] sm:$0xff]
    %v4326 = vld [vmem:[#allocation10 + $0x388] sm:$0xff]
    %v4327 = vld [vmem:[#allocation10 + $0x390] sm:$0xff]
    %v4328 = vld [vmem:[#allocation10 + $0x398] sm:$0xff]
    %v4329 = vld [vmem:[#allocation10 + $0x3a0] sm:$0xff]
    %v4330 = vld [vmem:[#allocation10 + $0x3a8] sm:$0xff]
    %v4331 = vld [vmem:[#allocation10 + $0x3b0] sm:$0xff]
    %v4332 = vld [vmem:[#allocation10 + $0x3b8] sm:$0xff]
    %v4333 = vld [vmem:[#allocation10 + $0x3c0] sm:$0xff]
    %v4334 = vld [vmem:[#allocation10 + $0x3c8] sm:$0xff]
    %v4335 = vld [vmem:[#allocation10 + $0x3d0] sm:$0xff]
    %v4336 = vld [vmem:[#allocation10 + $0x3d8] sm:$0xff]
    %v4337 = vld [vmem:[#allocation10 + $0x3e0] sm:$0xff]
    %v4338 = vld [vmem:[#allocation10 + $0x3e8] sm:$0xff]
    %v4339 = vld [vmem:[#allocation10 + $0x3f0] sm:$0xff]
    %v4340 = vld [vmem:[#allocation10 + $0x3f8] sm:$0xff]
    %v4342 = vlaneseq
    %v4343 = vshrl.u32 %v4342, 7
    %v4344 = vsub.s32 0, %v4343
    %v4345 = vrot.slane %v4212, %v4344
    %v4346 = vlaneseq
    %v4347 = vshrl.u32 %v4346, 7
    %v4348 = vsub.s32 1, %v4347
    %v4349 = vrot.slane %v4212, %v4348
    %v4350 = vlaneseq
    %v4351 = vshrl.u32 %v4350, 7
    %v4352 = vsub.s32 2, %v4351
    %v4353 = vrot.slane %v4212, %v4352
    %v4354 = vlaneseq
    %v4355 = vshrl.u32 %v4354, 7
    %v4356 = vsub.s32 3, %v4355
    %v4357 = vrot.slane %v4212, %v4356
    %v4490 = vunpack.c.l.b16 %v4213
    %v4491 = vunpack.c.h.b16 %v4213
    %v4492 = vunpack.c.l.b16 %v4214
    %v4493 = vunpack.c.h.b16 %v4214
    %v4494 = vunpack.c.l.b16 %v4215
    %v4495 = vunpack.c.h.b16 %v4215
    %v4496 = vunpack.c.l.b16 %v4216
    %v4497 = vunpack.c.h.b16 %v4216
    %v4498 = vunpack.c.l.b16 %v4217
    %v4499 = vunpack.c.h.b16 %v4217
    %v4500 = vunpack.c.l.b16 %v4218
    %v4501 = vunpack.c.h.b16 %v4218
    %v4502 = vunpack.c.l.b16 %v4219
    %v4503 = vunpack.c.h.b16 %v4219
    %v4504 = vunpack.c.l.b16 %v4220
    %v4505 = vunpack.c.h.b16 %v4220
    %v4506 = vunpack.c.l.b16 %v4221
    %v4507 = vunpack.c.h.b16 %v4221
    %v4508 = vunpack.c.l.b16 %v4222
    %v4509 = vunpack.c.h.b16 %v4222
    %v4510 = vunpack.c.l.b16 %v4223
    %v4511 = vunpack.c.h.b16 %v4223
    %v4512 = vunpack.c.l.b16 %v4224
    %v4513 = vunpack.c.h.b16 %v4224
    %v4514 = vunpack.c.l.b16 %v4225
    %v4515 = vunpack.c.h.b16 %v4225
    %v4516 = vunpack.c.l.b16 %v4226
    %v4517 = vunpack.c.h.b16 %v4226
    %v4518 = vunpack.c.l.b16 %v4227
    %v4519 = vunpack.c.h.b16 %v4227
    %v4520 = vunpack.c.l.b16 %v4228
    %v4521 = vunpack.c.h.b16 %v4228
    %v4522 = vunpack.c.l.b16 %v4229
    %v4523 = vunpack.c.h.b16 %v4229
    %v4524 = vunpack.c.l.b16 %v4230
    %v4525 = vunpack.c.h.b16 %v4230
    %v4526 = vunpack.c.l.b16 %v4231
    %v4527 = vunpack.c.h.b16 %v4231
    %v4528 = vunpack.c.l.b16 %v4232
    %v4529 = vunpack.c.h.b16 %v4232
    %v4530 = vunpack.c.l.b16 %v4233
    %v4531 = vunpack.c.h.b16 %v4233
    %v4532 = vunpack.c.l.b16 %v4234
    %v4533 = vunpack.c.h.b16 %v4234
    %v4534 = vunpack.c.l.b16 %v4235
    %v4535 = vunpack.c.h.b16 %v4235
    %v4536 = vunpack.c.l.b16 %v4236
    %v4537 = vunpack.c.h.b16 %v4236
    %v4538 = vunpack.c.l.b16 %v4237
    %v4539 = vunpack.c.h.b16 %v4237
    %v4540 = vunpack.c.l.b16 %v4238
    %v4541 = vunpack.c.h.b16 %v4238
    %v4542 = vunpack.c.l.b16 %v4239
    %v4543 = vunpack.c.h.b16 %v4239
    %v4544 = vunpack.c.l.b16 %v4240
    %v4545 = vunpack.c.h.b16 %v4240
    %v4546 = vunpack.c.l.b16 %v4241
    %v4547 = vunpack.c.h.b16 %v4241
    %v4548 = vunpack.c.l.b16 %v4242
    %v4549 = vunpack.c.h.b16 %v4242
    %v4550 = vunpack.c.l.b16 %v4243
    %v4551 = vunpack.c.h.b16 %v4243
    %v4552 = vunpack.c.l.b16 %v4244
    %v4553 = vunpack.c.h.b16 %v4244
    %v4554 = vunpack.c.l.b16 %v4245
    %v4555 = vunpack.c.h.b16 %v4245
    %v4556 = vunpack.c.l.b16 %v4246
    %v4557 = vunpack.c.h.b16 %v4246
    %v4558 = vunpack.c.l.b16 %v4247
    %v4559 = vunpack.c.h.b16 %v4247
    %v4560 = vunpack.c.l.b16 %v4248
    %v4561 = vunpack.c.h.b16 %v4248
    %v4562 = vunpack.c.l.b16 %v4249
    %v4563 = vunpack.c.h.b16 %v4249
    %v4564 = vunpack.c.l.b16 %v4250
    %v4565 = vunpack.c.h.b16 %v4250
    %v4566 = vunpack.c.l.b16 %v4251
    %v4567 = vunpack.c.h.b16 %v4251
    %v4568 = vunpack.c.l.b16 %v4252
    %v4569 = vunpack.c.h.b16 %v4252
    %v4570 = vunpack.c.l.b16 %v4253
    %v4571 = vunpack.c.h.b16 %v4253
    %v4572 = vunpack.c.l.b16 %v4254
    %v4573 = vunpack.c.h.b16 %v4254
    %v4574 = vunpack.c.l.b16 %v4255
    %v4575 = vunpack.c.h.b16 %v4255
    %v4576 = vunpack.c.l.b16 %v4256
    %v4577 = vunpack.c.h.b16 %v4256
    %v4578 = vunpack.c.l.b16 %v4257
    %v4579 = vunpack.c.h.b16 %v4257
    %v4580 = vunpack.c.l.b16 %v4258
    %v4581 = vunpack.c.h.b16 %v4258
    %v4582 = vunpack.c.l.b16 %v4259
    %v4583 = vunpack.c.h.b16 %v4259
    %v4584 = vunpack.c.l.b16 %v4260
    %v4585 = vunpack.c.h.b16 %v4260
    %v4586 = vunpack.c.l.b16 %v4261
    %v4587 = vunpack.c.h.b16 %v4261
    %v4588 = vunpack.c.l.b16 %v4262
    %v4589 = vunpack.c.h.b16 %v4262
    %v4590 = vunpack.c.l.b16 %v4263
    %v4591 = vunpack.c.h.b16 %v4263
    %v4592 = vunpack.c.l.b16 %v4264
    %v4593 = vunpack.c.h.b16 %v4264
    %v4594 = vunpack.c.l.b16 %v4265
    %v4595 = vunpack.c.h.b16 %v4265
    %v4596 = vunpack.c.l.b16 %v4266
    %v4597 = vunpack.c.h.b16 %v4266
    %v4598 = vunpack.c.l.b16 %v4267
    %v4599 = vunpack.c.h.b16 %v4267
    %v4600 = vunpack.c.l.b16 %v4268
    %v4601 = vunpack.c.h.b16 %v4268
    %v4602 = vunpack.c.l.b16 %v4269
    %v4603 = vunpack.c.h.b16 %v4269
    %v4604 = vunpack.c.l.b16 %v4270
    %v4605 = vunpack.c.h.b16 %v4270
    %v4606 = vunpack.c.l.b16 %v4271
    %v4607 = vunpack.c.h.b16 %v4271
    %v4608 = vunpack.c.l.b16 %v4272
    %v4609 = vunpack.c.h.b16 %v4272
    %v4610 = vunpack.c.l.b16 %v4273
    %v4611 = vunpack.c.h.b16 %v4273
    %v4612 = vunpack.c.l.b16 %v4274
    %v4613 = vunpack.c.h.b16 %v4274
    %v4614 = vunpack.c.l.b16 %v4275
    %v4615 = vunpack.c.h.b16 %v4275
    %v4616 = vunpack.c.l.b16 %v4276
    %v4617 = vunpack.c.h.b16 %v4276
    %v4618 = vunpack.c.l.b16 %v4277
    %v4619 = vunpack.c.h.b16 %v4277
    %v4620 = vunpack.c.l.b16 %v4278
    %v4621 = vunpack.c.h.b16 %v4278
    %v4622 = vunpack.c.l.b16 %v4279
    %v4623 = vunpack.c.h.b16 %v4279
    %v4624 = vunpack.c.l.b16 %v4280
    %v4625 = vunpack.c.h.b16 %v4280
    %v4626 = vunpack.c.l.b16 %v4281
    %v4627 = vunpack.c.h.b16 %v4281
    %v4628 = vunpack.c.l.b16 %v4282
    %v4629 = vunpack.c.h.b16 %v4282
    %v4630 = vunpack.c.l.b16 %v4283
    %v4631 = vunpack.c.h.b16 %v4283
    %v4632 = vunpack.c.l.b16 %v4284
    %v4633 = vunpack.c.h.b16 %v4284
    %v4634 = vunpack.c.l.b16 %v4285
    %v4635 = vunpack.c.h.b16 %v4285
    %v4636 = vunpack.c.l.b16 %v4286
    %v4637 = vunpack.c.h.b16 %v4286
    %v4638 = vunpack.c.l.b16 %v4287
    %v4639 = vunpack.c.h.b16 %v4287
    %v4640 = vunpack.c.l.b16 %v4288
    %v4641 = vunpack.c.h.b16 %v4288
    %v4642 = vunpack.c.l.b16 %v4289
    %v4643 = vunpack.c.h.b16 %v4289
    %v4644 = vunpack.c.l.b16 %v4290
    %v4645 = vunpack.c.h.b16 %v4290
    %v4646 = vunpack.c.l.b16 %v4291
    %v4647 = vunpack.c.h.b16 %v4291
    %v4648 = vunpack.c.l.b16 %v4292
    %v4649 = vunpack.c.h.b16 %v4292
    %v4650 = vunpack.c.l.b16 %v4293
    %v4651 = vunpack.c.h.b16 %v4293
    %v4652 = vunpack.c.l.b16 %v4294
    %v4653 = vunpack.c.h.b16 %v4294
    %v4654 = vunpack.c.l.b16 %v4295
    %v4655 = vunpack.c.h.b16 %v4295
    %v4656 = vunpack.c.l.b16 %v4296
    %v4657 = vunpack.c.h.b16 %v4296
    %v4658 = vunpack.c.l.b16 %v4297
    %v4659 = vunpack.c.h.b16 %v4297
    %v4660 = vunpack.c.l.b16 %v4298
    %v4661 = vunpack.c.h.b16 %v4298
    %v4662 = vunpack.c.l.b16 %v4299
    %v4663 = vunpack.c.h.b16 %v4299
    %v4664 = vunpack.c.l.b16 %v4300
    %v4665 = vunpack.c.h.b16 %v4300
    %v4666 = vunpack.c.l.b16 %v4301
    %v4667 = vunpack.c.h.b16 %v4301
    %v4668 = vunpack.c.l.b16 %v4302
    %v4669 = vunpack.c.h.b16 %v4302
    %v4670 = vunpack.c.l.b16 %v4303
    %v4671 = vunpack.c.h.b16 %v4303
    %v4672 = vunpack.c.l.b16 %v4304
    %v4673 = vunpack.c.h.b16 %v4304
    %v4674 = vunpack.c.l.b16 %v4305
    %v4675 = vunpack.c.h.b16 %v4305
    %v4676 = vunpack.c.l.b16 %v4306
    %v4677 = vunpack.c.h.b16 %v4306
    %v4678 = vunpack.c.l.b16 %v4307
    %v4679 = vunpack.c.h.b16 %v4307
    %v4680 = vunpack.c.l.b16 %v4308
    %v4681 = vunpack.c.h.b16 %v4308
    %v4682 = vunpack.c.l.b16 %v4309
    %v4683 = vunpack.c.h.b16 %v4309
    %v4684 = vunpack.c.l.b16 %v4310
    %v4685 = vunpack.c.h.b16 %v4310
    %v4686 = vunpack.c.l.b16 %v4311
    %v4687 = vunpack.c.h.b16 %v4311
    %v4688 = vunpack.c.l.b16 %v4312
    %v4689 = vunpack.c.h.b16 %v4312
    %v4690 = vunpack.c.l.b16 %v4313
    %v4691 = vunpack.c.h.b16 %v4313
    %v4692 = vunpack.c.l.b16 %v4314
    %v4693 = vunpack.c.h.b16 %v4314
    %v4694 = vunpack.c.l.b16 %v4315
    %v4695 = vunpack.c.h.b16 %v4315
    %v4696 = vunpack.c.l.b16 %v4316
    %v4697 = vunpack.c.h.b16 %v4316
    %v4698 = vunpack.c.l.b16 %v4317
    %v4699 = vunpack.c.h.b16 %v4317
    %v4700 = vunpack.c.l.b16 %v4318
    %v4701 = vunpack.c.h.b16 %v4318
    %v4702 = vunpack.c.l.b16 %v4319
    %v4703 = vunpack.c.h.b16 %v4319
    %v4704 = vunpack.c.l.b16 %v4320
    %v4705 = vunpack.c.h.b16 %v4320
    %v4706 = vunpack.c.l.b16 %v4321
    %v4707 = vunpack.c.h.b16 %v4321
    %v4708 = vunpack.c.l.b16 %v4322
    %v4709 = vunpack.c.h.b16 %v4322
    %v4710 = vunpack.c.l.b16 %v4323
    %v4711 = vunpack.c.h.b16 %v4323
    %v4712 = vunpack.c.l.b16 %v4324
    %v4713 = vunpack.c.h.b16 %v4324
    %v4714 = vunpack.c.l.b16 %v4325
    %v4715 = vunpack.c.h.b16 %v4325
    %v4716 = vunpack.c.l.b16 %v4326
    %v4717 = vunpack.c.h.b16 %v4326
    %v4718 = vunpack.c.l.b16 %v4327
    %v4719 = vunpack.c.h.b16 %v4327
    %v4720 = vunpack.c.l.b16 %v4328
    %v4721 = vunpack.c.h.b16 %v4328
    %v4722 = vunpack.c.l.b16 %v4329
    %v4723 = vunpack.c.h.b16 %v4329
    %v4724 = vunpack.c.l.b16 %v4330
    %v4725 = vunpack.c.h.b16 %v4330
    %v4726 = vunpack.c.l.b16 %v4331
    %v4727 = vunpack.c.h.b16 %v4331
    %v4728 = vunpack.c.l.b16 %v4332
    %v4729 = vunpack.c.h.b16 %v4332
    %v4730 = vunpack.c.l.b16 %v4333
    %v4731 = vunpack.c.h.b16 %v4333
    %v4732 = vunpack.c.l.b16 %v4334
    %v4733 = vunpack.c.h.b16 %v4334
    %v4734 = vunpack.c.l.b16 %v4335
    %v4735 = vunpack.c.h.b16 %v4335
    %v4736 = vunpack.c.l.b16 %v4336
    %v4737 = vunpack.c.h.b16 %v4336
    %v4738 = vunpack.c.l.b16 %v4337
    %v4739 = vunpack.c.h.b16 %v4337
    %v4740 = vunpack.c.l.b16 %v4338
    %v4741 = vunpack.c.h.b16 %v4338
    %v4742 = vunpack.c.l.b16 %v4339
    %v4743 = vunpack.c.h.b16 %v4339
    %v4744 = vunpack.c.l.b16 %v4340
    %v4745 = vunpack.c.h.b16 %v4340
    %v4746 = vpack.c.b16 %v4494, %v4490
    %v4747 = vpack.c.b16 %v4495, %v4491
    %v4748 = vpack.c.b16 %v4496, %v4492
    %v4749 = vpack.c.b16 %v4497, %v4493
    %v4750 = vpack.c.b16 %v4502, %v4498
    %v4751 = vpack.c.b16 %v4503, %v4499
    %v4752 = vpack.c.b16 %v4504, %v4500
    %v4753 = vpack.c.b16 %v4505, %v4501
    %v4754 = vpack.c.b16 %v4510, %v4506
    %v4755 = vpack.c.b16 %v4511, %v4507
    %v4756 = vpack.c.b16 %v4512, %v4508
    %v4757 = vpack.c.b16 %v4513, %v4509
    %v4758 = vpack.c.b16 %v4518, %v4514
    %v4759 = vpack.c.b16 %v4519, %v4515
    %v4760 = vpack.c.b16 %v4520, %v4516
    %v4761 = vpack.c.b16 %v4521, %v4517
    %v4762 = vpack.c.b16 %v4526, %v4522
    %v4763 = vpack.c.b16 %v4527, %v4523
    %v4764 = vpack.c.b16 %v4528, %v4524
    %v4765 = vpack.c.b16 %v4529, %v4525
    %v4766 = vpack.c.b16 %v4534, %v4530
    %v4767 = vpack.c.b16 %v4535, %v4531
    %v4768 = vpack.c.b16 %v4536, %v4532
    %v4769 = vpack.c.b16 %v4537, %v4533
    %v4770 = vpack.c.b16 %v4542, %v4538
    %v4771 = vpack.c.b16 %v4543, %v4539
    %v4772 = vpack.c.b16 %v4544, %v4540
    %v4773 = vpack.c.b16 %v4545, %v4541
    %v4774 = vpack.c.b16 %v4550, %v4546
    %v4775 = vpack.c.b16 %v4551, %v4547
    %v4776 = vpack.c.b16 %v4552, %v4548
    %v4777 = vpack.c.b16 %v4553, %v4549
    %v4778 = vpack.c.b16 %v4558, %v4554
    %v4779 = vpack.c.b16 %v4559, %v4555
    %v4780 = vpack.c.b16 %v4560, %v4556
    %v4781 = vpack.c.b16 %v4561, %v4557
    %v4782 = vpack.c.b16 %v4566, %v4562
    %v4783 = vpack.c.b16 %v4567, %v4563
    %v4784 = vpack.c.b16 %v4568, %v4564
    %v4785 = vpack.c.b16 %v4569, %v4565
    %v4786 = vpack.c.b16 %v4574, %v4570
    %v4787 = vpack.c.b16 %v4575, %v4571
    %v4788 = vpack.c.b16 %v4576, %v4572
    %v4789 = vpack.c.b16 %v4577, %v4573
    %v4790 = vpack.c.b16 %v4582, %v4578
    %v4791 = vpack.c.b16 %v4583, %v4579
    %v4792 = vpack.c.b16 %v4584, %v4580
    %v4793 = vpack.c.b16 %v4585, %v4581
    %v4794 = vpack.c.b16 %v4590, %v4586
    %v4795 = vpack.c.b16 %v4591, %v4587
    %v4796 = vpack.c.b16 %v4592, %v4588
    %v4797 = vpack.c.b16 %v4593, %v4589
    %v4798 = vpack.c.b16 %v4598, %v4594
    %v4799 = vpack.c.b16 %v4599, %v4595
    %v4800 = vpack.c.b16 %v4600, %v4596
    %v4801 = vpack.c.b16 %v4601, %v4597
    %v4802 = vpack.c.b16 %v4606, %v4602
    %v4803 = vpack.c.b16 %v4607, %v4603
    %v4804 = vpack.c.b16 %v4608, %v4604
    %v4805 = vpack.c.b16 %v4609, %v4605
    %v4806 = vpack.c.b16 %v4614, %v4610
    %v4807 = vpack.c.b16 %v4615, %v4611
    %v4808 = vpack.c.b16 %v4616, %v4612
    %v4809 = vpack.c.b16 %v4617, %v4613
    %v4810 = vpack.c.b16 %v4622, %v4618
    %v4811 = vpack.c.b16 %v4623, %v4619
    %v4812 = vpack.c.b16 %v4624, %v4620
    %v4813 = vpack.c.b16 %v4625, %v4621
    %v4814 = vpack.c.b16 %v4630, %v4626
    %v4815 = vpack.c.b16 %v4631, %v4627
    %v4816 = vpack.c.b16 %v4632, %v4628
    %v4817 = vpack.c.b16 %v4633, %v4629
    %v4818 = vpack.c.b16 %v4638, %v4634
    %v4819 = vpack.c.b16 %v4639, %v4635
    %v4820 = vpack.c.b16 %v4640, %v4636
    %v4821 = vpack.c.b16 %v4641, %v4637
    %v4822 = vpack.c.b16 %v4646, %v4642
    %v4823 = vpack.c.b16 %v4647, %v4643
    %v4824 = vpack.c.b16 %v4648, %v4644
    %v4825 = vpack.c.b16 %v4649, %v4645
    %v4826 = vpack.c.b16 %v4654, %v4650
    %v4827 = vpack.c.b16 %v4655, %v4651
    %v4828 = vpack.c.b16 %v4656, %v4652
    %v4829 = vpack.c.b16 %v4657, %v4653
    %v4830 = vpack.c.b16 %v4662, %v4658
    %v4831 = vpack.c.b16 %v4663, %v4659
    %v4832 = vpack.c.b16 %v4664, %v4660
    %v4833 = vpack.c.b16 %v4665, %v4661
    %v4834 = vpack.c.b16 %v4670, %v4666
    %v4835 = vpack.c.b16 %v4671, %v4667
    %v4836 = vpack.c.b16 %v4672, %v4668
    %v4837 = vpack.c.b16 %v4673, %v4669
    %v4838 = vpack.c.b16 %v4678, %v4674
    %v4839 = vpack.c.b16 %v4679, %v4675
    %v4840 = vpack.c.b16 %v4680, %v4676
    %v4841 = vpack.c.b16 %v4681, %v4677
    %v4842 = vpack.c.b16 %v4686, %v4682
    %v4843 = vpack.c.b16 %v4687, %v4683
    %v4844 = vpack.c.b16 %v4688, %v4684
    %v4845 = vpack.c.b16 %v4689, %v4685
    %v4846 = vpack.c.b16 %v4694, %v4690
    %v4847 = vpack.c.b16 %v4695, %v4691
    %v4848 = vpack.c.b16 %v4696, %v4692
    %v4849 = vpack.c.b16 %v4697, %v4693
    %v4850 = vpack.c.b16 %v4702, %v4698
    %v4851 = vpack.c.b16 %v4703, %v4699
    %v4852 = vpack.c.b16 %v4704, %v4700
    %v4853 = vpack.c.b16 %v4705, %v4701
    %v4854 = vpack.c.b16 %v4710, %v4706
    %v4855 = vpack.c.b16 %v4711, %v4707
    %v4856 = vpack.c.b16 %v4712, %v4708
    %v4857 = vpack.c.b16 %v4713, %v4709
    %v4858 = vpack.c.b16 %v4718, %v4714
    %v4859 = vpack.c.b16 %v4719, %v4715
    %v4860 = vpack.c.b16 %v4720, %v4716
    %v4861 = vpack.c.b16 %v4721, %v4717
    %v4862 = vpack.c.b16 %v4726, %v4722
    %v4863 = vpack.c.b16 %v4727, %v4723
    %v4864 = vpack.c.b16 %v4728, %v4724
    %v4865 = vpack.c.b16 %v4729, %v4725
    %v4866 = vpack.c.b16 %v4734, %v4730
    %v4867 = vpack.c.b16 %v4735, %v4731
    %v4868 = vpack.c.b16 %v4736, %v4732
    %v4869 = vpack.c.b16 %v4737, %v4733
    %v4870 = vpack.c.b16 %v4742, %v4738
    %v4871 = vpack.c.b16 %v4743, %v4739
    %v4872 = vpack.c.b16 %v4744, %v4740
    %v4873 = vpack.c.b16 %v4745, %v4741
    %5002 = vmatprep.subr.bf16.mxu0 %v4775
    %5003 = vmatpush1.bf16.msra.mxu0 %v4774
    %5004 = vmatprep.subr.bf16.mxu0 %v4771
    %5005 = vmatpush1.bf16.msra.mxu0 %v4770
    %5006 = vmatprep.subr.bf16.mxu0 %v4767
    %5007 = vmatpush1.bf16.msra.mxu0 %v4766
    %5008 = vmatprep.subr.bf16.mxu0 %v4763
    %5009 = vmatpush1.bf16.msra.mxu0 %v4762
    %5010 = vmatprep.subr.bf16.mxu0 %v4759
    %5011 = vmatpush1.bf16.msra.mxu0 %v4758
    %5012 = vmatprep.subr.bf16.mxu0 %v4755
    %5013 = vmatpush1.bf16.msra.mxu0 %v4754
    %5014 = vmatprep.subr.bf16.mxu0 %v4751
    %5015 = vmatpush1.bf16.msra.mxu0 %v4750
    %5016 = vmatprep.subr.bf16.mxu0 %v4747
    %5017 = vmatpush1.bf16.msra.mxu0 %v4746
    %5018 = vmatprep.subr.bf16.mxu0 %v4807
    %5019 = vmatpush2.bf16.msra.mxu0 %v4806
    %5020 = vmatprep.subr.bf16.mxu0 %v4803
    %5021 = vmatpush2.bf16.msra.mxu0 %v4802
    %5022 = vmatprep.subr.bf16.mxu0 %v4799
    %5023 = vmatpush2.bf16.msra.mxu0 %v4798
    %5024 = vmatprep.subr.bf16.mxu0 %v4795
    %5025 = vmatpush2.bf16.msra.mxu0 %v4794
    %5026 = vmatprep.subr.bf16.mxu0 %v4791
    %5027 = vmatpush2.bf16.msra.mxu0 %v4790
    %5028 = vmatprep.subr.bf16.mxu0 %v4787
    %5029 = vmatpush2.bf16.msra.mxu0 %v4786
    %5030 = vmatprep.subr.bf16.mxu0 %v4783
    %5031 = vmatpush2.bf16.msra.mxu0 %v4782
    %5032 = vmatprep.subr.bf16.mxu0 %v4779
    %5033 = vmatpush2.bf16.msra.mxu0 %v4778
    %5034 = vmatprep.mubr.bf16.mxu0 %v4209
    %5035 = vmatmul.mubr.bf16.gmra.mxu0 %v4208
    %v5036 = vpop.f32.mrf.mxu0
    %v5037 = vadd.f32 %v4345, %v5036
    %v5038 = vpop.f32.mrf.mxu0
    %v5039 = vadd.f32 %v4349, %v5038
    %v5040 = vpop.f32.mrf.mxu0
    %v5041 = vpop.f32.mrf.mxu0
    %5042 = vdwg.mxu0
    %5043 = vmatprep.subr.bf16.mxu0 %v4839
    %5044 = vmatpush1.bf16.msra.mxu0 %v4838
    %5045 = vmatprep.subr.bf16.mxu0 %v4835
    %5046 = vmatpush1.bf16.msra.mxu0 %v4834
    %5047 = vmatprep.subr.bf16.mxu0 %v4831
    %5048 = vmatpush1.bf16.msra.mxu0 %v4830
    %5049 = vmatprep.subr.bf16.mxu0 %v4827
    %5050 = vmatpush1.bf16.msra.mxu0 %v4826
    %5051 = vmatprep.subr.bf16.mxu0 %v4823
    %5052 = vmatpush1.bf16.msra.mxu0 %v4822
    %5053 = vmatprep.subr.bf16.mxu0 %v4819
    %5054 = vmatpush1.bf16.msra.mxu0 %v4818
    %5055 = vmatprep.subr.bf16.mxu0 %v4815
    %5056 = vmatpush1.bf16.msra.mxu0 %v4814
    %5057 = vmatprep.subr.bf16.mxu0 %v4811
    %5058 = vmatpush1.bf16.msra.mxu0 %v4810
    %5059 = vmatprep.subr.bf16.mxu0 %v4871
    %5060 = vmatpush2.bf16.msra.mxu0 %v4870
    %5061 = vmatprep.subr.bf16.mxu0 %v4867
    %5062 = vmatpush2.bf16.msra.mxu0 %v4866
    %5063 = vmatprep.subr.bf16.mxu0 %v4863
    %5064 = vmatpush2.bf16.msra.mxu0 %v4862
    %5065 = vmatprep.subr.bf16.mxu0 %v4859
    %5066 = vmatpush2.bf16.msra.mxu0 %v4858
    %5067 = vmatprep.subr.bf16.mxu0 %v4855
    %5068 = vmatpush2.bf16.msra.mxu0 %v4854
    %5069 = vmatprep.subr.bf16.mxu0 %v4851
    %5070 = vmatpush2.bf16.msra.mxu0 %v4850
    %5071 = vmatprep.subr.bf16.mxu0 %v4847
    %5072 = vmatpush2.bf16.msra.mxu0 %v4846
    %5073 = vmatprep.subr.bf16.mxu0 %v4843
    %5074 = vmatpush2.bf16.msra.mxu0 %v4842
    %5075 = vmatprep.mubr.bf16.mxu0 %v4211
    %5076 = vmatmul.mubr.bf16.gmra.mxu0 %v4210
    %v5077 = vpop.f32.mrf.mxu0
    %v5078 = vadd.f32 %v5037, %v5077
    %v5079 = vpop.f32.mrf.mxu0
    %v5080 = vadd.f32 %v5039, %v5079
    %v5081 = vpop.f32.mrf.mxu0
    %v5082 = vpop.f32.mrf.mxu0
    %5083 = vdwg.mxu0
    %5084 = vmatprep.subr.bf16.mxu0 %v4777
    %5085 = vmatpush1.bf16.msra.mxu0 %v4776
    %5086 = vmatprep.subr.bf16.mxu0 %v4773
    %5087 = vmatpush1.bf16.msra.mxu0 %v4772
    %5088 = vmatprep.subr.bf16.mxu0 %v4769
    %5089 = vmatpush1.bf16.msra.mxu0 %v4768
    %5090 = vmatprep.subr.bf16.mxu0 %v4765
    %5091 = vmatpush1.bf16.msra.mxu0 %v4764
    %5092 = vmatprep.subr.bf16.mxu0 %v4761
    %5093 = vmatpush1.bf16.msra.mxu0 %v4760
    %5094 = vmatprep.subr.bf16.mxu0 %v4757
    %5095 = vmatpush1.bf16.msra.mxu0 %v4756
    %5096 = vmatprep.subr.bf16.mxu0 %v4753
    %5097 = vmatpush1.bf16.msra.mxu0 %v4752
    %5098 = vmatprep.subr.bf16.mxu0 %v4749
    %5099 = vmatpush1.bf16.msra.mxu0 %v4748
    %5100 = vmatprep.subr.bf16.mxu0 %v4809
    %5101 = vmatpush2.bf16.msra.mxu0 %v4808
    %5102 = vmatprep.subr.bf16.mxu0 %v4805
    %5103 = vmatpush2.bf16.msra.mxu0 %v4804
    %5104 = vmatprep.subr.bf16.mxu0 %v4801
    %5105 = vmatpush2.bf16.msra.mxu0 %v4800
    %5106 = vmatprep.subr.bf16.mxu0 %v4797
    %5107 = vmatpush2.bf16.msra.mxu0 %v4796
    %5108 = vmatprep.subr.bf16.mxu0 %v4793
    %5109 = vmatpush2.bf16.msra.mxu0 %v4792
    %5110 = vmatprep.subr.bf16.mxu0 %v4789
    %5111 = vmatpush2.bf16.msra.mxu0 %v4788
    %5112 = vmatprep.subr.bf16.mxu0 %v4785
    %5113 = vmatpush2.bf16.msra.mxu0 %v4784
    %5114 = vmatprep.subr.bf16.mxu0 %v4781
    %5115 = vmatpush2.bf16.msra.mxu0 %v4780
    %5116 = vmatprep.mubr.bf16.mxu0 %v4209
    %5117 = vmatmul.mubr.bf16.gmra.mxu0 %v4208
    %v5118 = vpop.f32.mrf.mxu0
    %v5119 = vadd.f32 %v4353, %v5118
    %v5120 = vpop.f32.mrf.mxu0
    %v5121 = vadd.f32 %v4357, %v5120
    %v5122 = vpop.f32.mrf.mxu0
    %v5123 = vpop.f32.mrf.mxu0
    %5124 = vdwg.mxu0
    %5125 = vmatprep.subr.bf16.mxu0 %v4841
    %5126 = vmatpush1.bf16.msra.mxu0 %v4840
    %5127 = vmatprep.subr.bf16.mxu0 %v4837
    %5128 = vmatpush1.bf16.msra.mxu0 %v4836
    %5129 = vmatprep.subr.bf16.mxu0 %v4833
    %5130 = vmatpush1.bf16.msra.mxu0 %v4832
    %5131 = vmatprep.subr.bf16.mxu0 %v4829
    %5132 = vmatpush1.bf16.msra.mxu0 %v4828
    %5133 = vmatprep.subr.bf16.mxu0 %v4825
    %5134 = vmatpush1.bf16.msra.mxu0 %v4824
    %5135 = vmatprep.subr.bf16.mxu0 %v4821
    %5136 = vmatpush1.bf16.msra.mxu0 %v4820
    %5137 = vmatprep.subr.bf16.mxu0 %v4817
    %5138 = vmatpush1.bf16.msra.mxu0 %v4816
    %5139 = vmatprep.subr.bf16.mxu0 %v4813
    %5140 = vmatpush1.bf16.msra.mxu0 %v4812
    %5141 = vmatprep.subr.bf16.mxu0 %v4873
    %5142 = vmatpush2.bf16.msra.mxu0 %v4872
    %5143 = vmatprep.subr.bf16.mxu0 %v4869
    %5144 = vmatpush2.bf16.msra.mxu0 %v4868
    %5145 = vmatprep.subr.bf16.mxu0 %v4865
    %5146 = vmatpush2.bf16.msra.mxu0 %v4864
    %5147 = vmatprep.subr.bf16.mxu0 %v4861
    %5148 = vmatpush2.bf16.msra.mxu0 %v4860
    %5149 = vmatprep.subr.bf16.mxu0 %v4857
    %5150 = vmatpush2.bf16.msra.mxu0 %v4856
    %5151 = vmatprep.subr.bf16.mxu0 %v4853
    %5152 = vmatpush2.bf16.msra.mxu0 %v4852
    %5153 = vmatprep.subr.bf16.mxu0 %v4849
    %5154 = vmatpush2.bf16.msra.mxu0 %v4848
    %5155 = vmatprep.subr.bf16.mxu0 %v4845
    %5156 = vmatpush2.bf16.msra.mxu0 %v4844
    %5157 = vmatprep.mubr.bf16.mxu0 %v4211
    %5158 = vmatmul.mubr.bf16.gmra.mxu0 %v4210
    %v5159 = vpop.f32.mrf.mxu0
    %v5160 = vadd.f32 %v5119, %v5159
    %v5161 = vpop.f32.mrf.mxu0
    %v5162 = vadd.f32 %v5121, %v5161
    %v5163 = vpop.f32.mrf.mxu0
    %v5164 = vpop.f32.mrf.mxu0
    %5165 = vdwg.mxu0
    %v5166 = vmax.f32 %v5078, 0.0
    %v5167 = vmax.f32 %v5080, 0.0
    %v5168 = vmax.f32 %v5160, 0.0
    %v5169 = vmax.f32 %v5162, 0.0
    %v5170 = vpack.c.bf16 %v5166, %v5166
    %v5171 = vpack.c.bf16 %v5167, %v5167
    %v5172 = vpack.c.bf16 %v5168, %v5168
    %v5173 = vpack.c.bf16 %v5169, %v5169
    %v5174 = vld [vmem:[%s2 + $0x16] sm:$0xff]
    %v5175 = vld [vmem:[#allocation12] sm:$0xff]
    %v5176 = vld [vmem:[#allocation12 + $0x8] sm:$0xff]
    %v5177 = vld [vmem:[#allocation12 + $0x10] sm:$0xff]
    %v5178 = vld [vmem:[#allocation12 + $0x18] sm:$0xf]
    %v5179 = vld [vmem:[#allocation12 + $0x1c] sm:$0xff]
    %v5180 = vld [vmem:[#allocation12 + $0x24] sm:$0xff]
    %v5181 = vld [vmem:[#allocation12 + $0x2c] sm:$0xff]
    %v5182 = vld [vmem:[#allocation12 + $0x34] sm:$0xf]
    %v5183 = vld [vmem:[#allocation12 + $0x38] sm:$0xff]
    %v5184 = vld [vmem:[#allocation12 + $0x40] sm:$0xff]
    %v5185 = vld [vmem:[#allocation12 + $0x48] sm:$0xff]
    %v5186 = vld [vmem:[#allocation12 + $0x50] sm:$0xf]
    %v5187 = vld [vmem:[#allocation12 + $0x54] sm:$0xff]
    %v5188 = vld [vmem:[#allocation12 + $0x5c] sm:$0xff]
    %v5189 = vld [vmem:[#allocation12 + $0x64] sm:$0xff]
    %v5190 = vld [vmem:[#allocation12 + $0x6c] sm:$0xf]
    %v5191 = vld [vmem:[#allocation12 + $0x70] sm:$0xff]
    %v5192 = vld [vmem:[#allocation12 + $0x78] sm:$0xff]
    %v5193 = vld [vmem:[#allocation12 + $0x80] sm:$0xff]
    %v5194 = vld [vmem:[#allocation12 + $0x88] sm:$0xf]
    %v5195 = vld [vmem:[#allocation12 + $0x8c] sm:$0xff]
    %v5196 = vld [vmem:[#allocation12 + $0x94] sm:$0xff]
    %v5197 = vld [vmem:[#allocation12 + $0x9c] sm:$0xff]
    %v5198 = vld [vmem:[#allocation12 + $0xa4] sm:$0xf]
    %v5199 = vld [vmem:[#allocation12 + $0xa8] sm:$0xff]
    %v5200 = vld [vmem:[#allocation12 + $0xb0] sm:$0xff]
    %v5201 = vld [vmem:[#allocation12 + $0xb8] sm:$0xff]
    %v5202 = vld [vmem:[#allocation12 + $0xc0] sm:$0xf]
    %v5203 = vld [vmem:[#allocation12 + $0xc4] sm:$0xff]
    %v5204 = vld [vmem:[#allocation12 + $0xcc] sm:$0xff]
    %v5205 = vld [vmem:[#allocation12 + $0xd4] sm:$0xff]
    %v5206 = vld [vmem:[#allocation12 + $0xdc] sm:$0xf]
    %v5207 = vld [vmem:[#allocation12 + $0xe0] sm:$0xff]
    %v5208 = vld [vmem:[#allocation12 + $0xe8] sm:$0xff]
    %v5209 = vld [vmem:[#allocation12 + $0xf0] sm:$0xff]
    %v5210 = vld [vmem:[#allocation12 + $0xf8] sm:$0xf]
    %v5211 = vld [vmem:[#allocation12 + $0xfc] sm:$0xff]
    %v5212 = vld [vmem:[#allocation12 + $0x104] sm:$0xff]
    %v5213 = vld [vmem:[#allocation12 + $0x10c] sm:$0xff]
    %v5214 = vld [vmem:[#allocation12 + $0x114] sm:$0xf]
    %v5215 = vld [vmem:[#allocation12 + $0x118] sm:$0xff]
    %v5216 = vld [vmem:[#allocation12 + $0x120] sm:$0xff]
    %v5217 = vld [vmem:[#allocation12 + $0x128] sm:$0xff]
    %v5218 = vld [vmem:[#allocation12 + $0x130] sm:$0xf]
    %v5219 = vld [vmem:[#allocation12 + $0x134] sm:$0xff]
    %v5220 = vld [vmem:[#allocation12 + $0x13c] sm:$0xff]
    %v5221 = vld [vmem:[#allocation12 + $0x144] sm:$0xff]
    %v5222 = vld [vmem:[#allocation12 + $0x14c] sm:$0xf]
    %v5223 = vld [vmem:[#allocation12 + $0x150] sm:$0xff]
    %v5224 = vld [vmem:[#allocation12 + $0x158] sm:$0xff]
    %v5225 = vld [vmem:[#allocation12 + $0x160] sm:$0xff]
    %v5226 = vld [vmem:[#allocation12 + $0x168] sm:$0xf]
    %v5227 = vld [vmem:[#allocation12 + $0x16c] sm:$0xff]
    %v5228 = vld [vmem:[#allocation12 + $0x174] sm:$0xff]
    %v5229 = vld [vmem:[#allocation12 + $0x17c] sm:$0xff]
    %v5230 = vld [vmem:[#allocation12 + $0x184] sm:$0xf]
    %v5231 = vld [vmem:[#allocation12 + $0x188] sm:$0xff]
    %v5232 = vld [vmem:[#allocation12 + $0x190] sm:$0xff]
    %v5233 = vld [vmem:[#allocation12 + $0x198] sm:$0xff]
    %v5234 = vld [vmem:[#allocation12 + $0x1a0] sm:$0xf]
    %v5235 = vld [vmem:[#allocation12 + $0x1a4] sm:$0xff]
    %v5236 = vld [vmem:[#allocation12 + $0x1ac] sm:$0xff]
    %v5237 = vld [vmem:[#allocation12 + $0x1b4] sm:$0xff]
    %v5238 = vld [vmem:[#allocation12 + $0x1bc] sm:$0xf]
    %v5239 = vld [vmem:[#allocation12 + $0x1c0] sm:$0xff]
    %v5240 = vld [vmem:[#allocation12 + $0x1c8] sm:$0xff]
    %v5241 = vld [vmem:[#allocation12 + $0x1d0] sm:$0xff]
    %v5242 = vld [vmem:[#allocation12 + $0x1d8] sm:$0xf]
    %v5243 = vld [vmem:[#allocation12 + $0x1dc] sm:$0xff]
    %v5244 = vld [vmem:[#allocation12 + $0x1e4] sm:$0xff]
    %v5245 = vld [vmem:[#allocation12 + $0x1ec] sm:$0xff]
    %v5246 = vld [vmem:[#allocation12 + $0x1f4] sm:$0xf]
    %v5247 = vld [vmem:[#allocation12 + $0x1f8] sm:$0xff]
    %v5248 = vld [vmem:[#allocation12 + $0x200] sm:$0xff]
    %v5249 = vld [vmem:[#allocation12 + $0x208] sm:$0xff]
    %v5250 = vld [vmem:[#allocation12 + $0x210] sm:$0xf]
    %v5251 = vld [vmem:[#allocation12 + $0x214] sm:$0xff]
    %v5252 = vld [vmem:[#allocation12 + $0x21c] sm:$0xff]
    %v5253 = vld [vmem:[#allocation12 + $0x224] sm:$0xff]
    %v5254 = vld [vmem:[#allocation12 + $0x22c] sm:$0xf]
    %v5255 = vld [vmem:[#allocation12 + $0x230] sm:$0xff]
    %v5256 = vld [vmem:[#allocation12 + $0x238] sm:$0xff]
    %v5257 = vld [vmem:[#allocation12 + $0x240] sm:$0xff]
    %v5258 = vld [vmem:[#allocation12 + $0x248] sm:$0xf]
    %v5259 = vld [vmem:[#allocation12 + $0x24c] sm:$0xff]
    %v5260 = vld [vmem:[#allocation12 + $0x254] sm:$0xff]
    %v5261 = vld [vmem:[#allocation12 + $0x25c] sm:$0xff]
    %v5262 = vld [vmem:[#allocation12 + $0x264] sm:$0xf]
    %v5263 = vld [vmem:[#allocation12 + $0x268] sm:$0xff]
    %v5264 = vld [vmem:[#allocation12 + $0x270] sm:$0xff]
    %v5265 = vld [vmem:[#allocation12 + $0x278] sm:$0xff]
    %v5266 = vld [vmem:[#allocation12 + $0x280] sm:$0xf]
    %v5267 = vld [vmem:[#allocation12 + $0x284] sm:$0xff]
    %v5268 = vld [vmem:[#allocation12 + $0x28c] sm:$0xff]
    %v5269 = vld [vmem:[#allocation12 + $0x294] sm:$0xff]
    %v5270 = vld [vmem:[#allocation12 + $0x29c] sm:$0xf]
    %v5271 = vld [vmem:[#allocation12 + $0x2a0] sm:$0xff]
    %v5272 = vld [vmem:[#allocation12 + $0x2a8] sm:$0xff]
    %v5273 = vld [vmem:[#allocation12 + $0x2b0] sm:$0xff]
    %v5274 = vld [vmem:[#allocation12 + $0x2b8] sm:$0xf]
    %v5275 = vld [vmem:[#allocation12 + $0x2bc] sm:$0xff]
    %v5276 = vld [vmem:[#allocation12 + $0x2c4] sm:$0xff]
    %v5277 = vld [vmem:[#allocation12 + $0x2cc] sm:$0xff]
    %v5278 = vld [vmem:[#allocation12 + $0x2d4] sm:$0xf]
    %v5279 = vld [vmem:[#allocation12 + $0x2d8] sm:$0xff]
    %v5280 = vld [vmem:[#allocation12 + $0x2e0] sm:$0xff]
    %v5281 = vld [vmem:[#allocation12 + $0x2e8] sm:$0xff]
    %v5282 = vld [vmem:[#allocation12 + $0x2f0] sm:$0xf]
    %v5283 = vld [vmem:[#allocation12 + $0x2f4] sm:$0xff]
    %v5284 = vld [vmem:[#allocation12 + $0x2fc] sm:$0xff]
    %v5285 = vld [vmem:[#allocation12 + $0x304] sm:$0xff]
    %v5286 = vld [vmem:[#allocation12 + $0x30c] sm:$0xf]
    %v5287 = vld [vmem:[#allocation12 + $0x310] sm:$0xff]
    %v5288 = vld [vmem:[#allocation12 + $0x318] sm:$0xff]
    %v5289 = vld [vmem:[#allocation12 + $0x320] sm:$0xff]
    %v5290 = vld [vmem:[#allocation12 + $0x328] sm:$0xf]
    %v5291 = vld [vmem:[#allocation12 + $0x32c] sm:$0xff]
    %v5292 = vld [vmem:[#allocation12 + $0x334] sm:$0xff]
    %v5293 = vld [vmem:[#allocation12 + $0x33c] sm:$0xff]
    %v5294 = vld [vmem:[#allocation12 + $0x344] sm:$0xf]
    %v5295 = vld [vmem:[#allocation12 + $0x348] sm:$0xff]
    %v5296 = vld [vmem:[#allocation12 + $0x350] sm:$0xff]
    %v5297 = vld [vmem:[#allocation12 + $0x358] sm:$0xff]
    %v5298 = vld [vmem:[#allocation12 + $0x360] sm:$0xf]
    %v5299 = vld [vmem:[#allocation12 + $0x364] sm:$0xff]
    %v5300 = vld [vmem:[#allocation12 + $0x36c] sm:$0xff]
    %v5301 = vld [vmem:[#allocation12 + $0x374] sm:$0xff]
    %v5302 = vld [vmem:[#allocation12 + $0x37c] sm:$0xf]
    %v5303 = vld [vmem:[#allocation12 + $0x380] sm:$0xff]
    %v5304 = vld [vmem:[#allocation12 + $0x388] sm:$0xff]
    %v5305 = vld [vmem:[#allocation12 + $0x390] sm:$0xff]
    %v5306 = vld [vmem:[#allocation12 + $0x398] sm:$0xf]
    %v5307 = vld [vmem:[#allocation12 + $0x39c] sm:$0xff]
    %v5308 = vld [vmem:[#allocation12 + $0x3a4] sm:$0xff]
    %v5309 = vld [vmem:[#allocation12 + $0x3ac] sm:$0xff]
    %v5310 = vld [vmem:[#allocation12 + $0x3b4] sm:$0xf]
    %v5311 = vld [vmem:[#allocation12 + $0x3b8] sm:$0xff]
    %v5312 = vld [vmem:[#allocation12 + $0x3c0] sm:$0xff]
    %v5313 = vld [vmem:[#allocation12 + $0x3c8] sm:$0xff]
    %v5314 = vld [vmem:[#allocation12 + $0x3d0] sm:$0xf]
    %v5315 = vld [vmem:[#allocation12 + $0x3d4] sm:$0xff]
    %v5316 = vld [vmem:[#allocation12 + $0x3dc] sm:$0xff]
    %v5317 = vld [vmem:[#allocation12 + $0x3e4] sm:$0xff]
    %v5318 = vld [vmem:[#allocation12 + $0x3ec] sm:$0xf]
    %v5319 = vld [vmem:[#allocation12 + $0x3f0] sm:$0xff]
    %v5320 = vld [vmem:[#allocation12 + $0x3f8] sm:$0xff]
    %v5321 = vld [vmem:[#allocation12 + $0x400] sm:$0xff]
    %v5322 = vld [vmem:[#allocation12 + $0x408] sm:$0xf]
    %v5323 = vld [vmem:[#allocation12 + $0x40c] sm:$0xff]
    %v5324 = vld [vmem:[#allocation12 + $0x414] sm:$0xff]
    %v5325 = vld [vmem:[#allocation12 + $0x41c] sm:$0xff]
    %v5326 = vld [vmem:[#allocation12 + $0x424] sm:$0xf]
    %v5327 = vld [vmem:[#allocation12 + $0x428] sm:$0xff]
    %v5328 = vld [vmem:[#allocation12 + $0x430] sm:$0xff]
    %v5329 = vld [vmem:[#allocation12 + $0x438] sm:$0xff]
    %v5330 = vld [vmem:[#allocation12 + $0x440] sm:$0xf]
    %v5331 = vld [vmem:[#allocation12 + $0x444] sm:$0xff]
    %v5332 = vld [vmem:[#allocation12 + $0x44c] sm:$0xff]
    %v5333 = vld [vmem:[#allocation12 + $0x454] sm:$0xff]
    %v5334 = vld [vmem:[#allocation12 + $0x45c] sm:$0xf]
    %v5335 = vld [vmem:[#allocation12 + $0x460] sm:$0xff]
    %v5336 = vld [vmem:[#allocation12 + $0x468] sm:$0xff]
    %v5337 = vld [vmem:[#allocation12 + $0x470] sm:$0xff]
    %v5338 = vld [vmem:[#allocation12 + $0x478] sm:$0xf]
    %v5339 = vld [vmem:[#allocation12 + $0x47c] sm:$0xff]
    %v5340 = vld [vmem:[#allocation12 + $0x484] sm:$0xff]
    %v5341 = vld [vmem:[#allocation12 + $0x48c] sm:$0xff]
    %v5342 = vld [vmem:[#allocation12 + $0x494] sm:$0xf]
    %v5343 = vld [vmem:[#allocation12 + $0x498] sm:$0xff]
    %v5344 = vld [vmem:[#allocation12 + $0x4a0] sm:$0xff]
    %v5345 = vld [vmem:[#allocation12 + $0x4a8] sm:$0xff]
    %v5346 = vld [vmem:[#allocation12 + $0x4b0] sm:$0xf]
    %v5347 = vld [vmem:[#allocation12 + $0x4b4] sm:$0xff]
    %v5348 = vld [vmem:[#allocation12 + $0x4bc] sm:$0xff]
    %v5349 = vld [vmem:[#allocation12 + $0x4c4] sm:$0xff]
    %v5350 = vld [vmem:[#allocation12 + $0x4cc] sm:$0xf]
    %v5351 = vld [vmem:[#allocation12 + $0x4d0] sm:$0xff]
    %v5352 = vld [vmem:[#allocation12 + $0x4d8] sm:$0xff]
    %v5353 = vld [vmem:[#allocation12 + $0x4e0] sm:$0xff]
    %v5354 = vld [vmem:[#allocation12 + $0x4e8] sm:$0xf]
    %v5355 = vld [vmem:[#allocation12 + $0x4ec] sm:$0xff]
    %v5356 = vld [vmem:[#allocation12 + $0x4f4] sm:$0xff]
    %v5357 = vld [vmem:[#allocation12 + $0x4fc] sm:$0xff]
    %v5358 = vld [vmem:[#allocation12 + $0x504] sm:$0xf]
    %v5359 = vld [vmem:[#allocation12 + $0x508] sm:$0xff]
    %v5360 = vld [vmem:[#allocation12 + $0x510] sm:$0xff]
    %v5361 = vld [vmem:[#allocation12 + $0x518] sm:$0xff]
    %v5362 = vld [vmem:[#allocation12 + $0x520] sm:$0xf]
    %v5363 = vld [vmem:[#allocation12 + $0x524] sm:$0xff]
    %v5364 = vld [vmem:[#allocation12 + $0x52c] sm:$0xff]
    %v5365 = vld [vmem:[#allocation12 + $0x534] sm:$0xff]
    %v5366 = vld [vmem:[#allocation12 + $0x53c] sm:$0xf]
    %v5367 = vld [vmem:[#allocation12 + $0x540] sm:$0xff]
    %v5368 = vld [vmem:[#allocation12 + $0x548] sm:$0xff]
    %v5369 = vld [vmem:[#allocation12 + $0x550] sm:$0xff]
    %v5370 = vld [vmem:[#allocation12 + $0x558] sm:$0xf]
    %v5371 = vld [vmem:[#allocation12 + $0x55c] sm:$0xff]
    %v5372 = vld [vmem:[#allocation12 + $0x564] sm:$0xff]
    %v5373 = vld [vmem:[#allocation12 + $0x56c] sm:$0xff]
    %v5374 = vld [vmem:[#allocation12 + $0x574] sm:$0xf]
    %v5375 = vld [vmem:[#allocation12 + $0x578] sm:$0xff]
    %v5376 = vld [vmem:[#allocation12 + $0x580] sm:$0xff]
    %v5377 = vld [vmem:[#allocation12 + $0x588] sm:$0xff]
    %v5378 = vld [vmem:[#allocation12 + $0x590] sm:$0xf]
    %v5379 = vld [vmem:[#allocation12 + $0x594] sm:$0xff]
    %v5380 = vld [vmem:[#allocation12 + $0x59c] sm:$0xff]
    %v5381 = vld [vmem:[#allocation12 + $0x5a4] sm:$0xff]
    %v5382 = vld [vmem:[#allocation12 + $0x5ac] sm:$0xf]
    %v5383 = vld [vmem:[#allocation12 + $0x5b0] sm:$0xff]
    %v5384 = vld [vmem:[#allocation12 + $0x5b8] sm:$0xff]
    %v5385 = vld [vmem:[#allocation12 + $0x5c0] sm:$0xff]
    %v5386 = vld [vmem:[#allocation12 + $0x5c8] sm:$0xf]
    %v5387 = vld [vmem:[#allocation12 + $0x5cc] sm:$0xff]
    %v5388 = vld [vmem:[#allocation12 + $0x5d4] sm:$0xff]
    %v5389 = vld [vmem:[#allocation12 + $0x5dc] sm:$0xff]
    %v5390 = vld [vmem:[#allocation12 + $0x5e4] sm:$0xf]
    %v5391 = vld [vmem:[#allocation12 + $0x5e8] sm:$0xff]
    %v5392 = vld [vmem:[#allocation12 + $0x5f0] sm:$0xff]
    %v5393 = vld [vmem:[#allocation12 + $0x5f8] sm:$0xff]
    %v5394 = vld [vmem:[#allocation12 + $0x600] sm:$0xf]
    %v5395 = vld [vmem:[#allocation12 + $0x604] sm:$0xff]
    %v5396 = vld [vmem:[#allocation12 + $0x60c] sm:$0xff]
    %v5397 = vld [vmem:[#allocation12 + $0x614] sm:$0xff]
    %v5398 = vld [vmem:[#allocation12 + $0x61c] sm:$0xf]
    %v5399 = vld [vmem:[#allocation12 + $0x620] sm:$0xff]
    %v5400 = vld [vmem:[#allocation12 + $0x628] sm:$0xff]
    %v5401 = vld [vmem:[#allocation12 + $0x630] sm:$0xff]
    %v5402 = vld [vmem:[#allocation12 + $0x638] sm:$0xf]
    %v5403 = vld [vmem:[#allocation12 + $0x63c] sm:$0xff]
    %v5404 = vld [vmem:[#allocation12 + $0x644] sm:$0xff]
    %v5405 = vld [vmem:[#allocation12 + $0x64c] sm:$0xff]
    %v5406 = vld [vmem:[#allocation12 + $0x654] sm:$0xf]
    %v5407 = vld [vmem:[#allocation12 + $0x658] sm:$0xff]
    %v5408 = vld [vmem:[#allocation12 + $0x660] sm:$0xff]
    %v5409 = vld [vmem:[#allocation12 + $0x668] sm:$0xff]
    %v5410 = vld [vmem:[#allocation12 + $0x670] sm:$0xf]
    %v5411 = vld [vmem:[#allocation12 + $0x674] sm:$0xff]
    %v5412 = vld [vmem:[#allocation12 + $0x67c] sm:$0xff]
    %v5413 = vld [vmem:[#allocation12 + $0x684] sm:$0xff]
    %v5414 = vld [vmem:[#allocation12 + $0x68c] sm:$0xf]
    %v5415 = vld [vmem:[#allocation12 + $0x690] sm:$0xff]
    %v5416 = vld [vmem:[#allocation12 + $0x698] sm:$0xff]
    %v5417 = vld [vmem:[#allocation12 + $0x6a0] sm:$0xff]
    %v5418 = vld [vmem:[#allocation12 + $0x6a8] sm:$0xf]
    %v5419 = vld [vmem:[#allocation12 + $0x6ac] sm:$0xff]
    %v5420 = vld [vmem:[#allocation12 + $0x6b4] sm:$0xff]
    %v5421 = vld [vmem:[#allocation12 + $0x6bc] sm:$0xff]
    %v5422 = vld [vmem:[#allocation12 + $0x6c4] sm:$0xf]
    %v5423 = vld [vmem:[#allocation12 + $0x6c8] sm:$0xff]
    %v5424 = vld [vmem:[#allocation12 + $0x6d0] sm:$0xff]
    %v5425 = vld [vmem:[#allocation12 + $0x6d8] sm:$0xff]
    %v5426 = vld [vmem:[#allocation12 + $0x6e0] sm:$0xf]
    %v5427 = vld [vmem:[#allocation12 + $0x6e4] sm:$0xff]
    %v5428 = vld [vmem:[#allocation12 + $0x6ec] sm:$0xff]
    %v5429 = vld [vmem:[#allocation12 + $0x6f4] sm:$0xff]
    %v5430 = vld [vmem:[#allocation12 + $0x6fc] sm:$0xf]
    %v5432 = vlaneseq
    %v5433 = vshrl.u32 %v5432, 7
    %v5434 = vsub.s32 0, %v5433
    %v5435 = vrot.slane %v5174, %v5434
    %v5436 = vlaneseq
    %v5437 = vshrl.u32 %v5436, 7
    %v5438 = vsub.s32 1, %v5437
    %v5439 = vrot.slane %v5174, %v5438
    %v5440 = vlaneseq
    %v5441 = vshrl.u32 %v5440, 7
    %v5442 = vsub.s32 2, %v5441
    %v5443 = vrot.slane %v5174, %v5442
    %v5444 = vlaneseq
    %v5445 = vshrl.u32 %v5444, 7
    %v5446 = vsub.s32 3, %v5445
    %v5447 = vrot.slane %v5174, %v5446
    %v5448 = vlaneseq
    %v5449 = vshrl.u32 %v5448, 7
    %v5450 = vsub.s32 4, %v5449
    %v5451 = vrot.slane %v5174, %v5450
    %v5452 = vlaneseq
    %v5453 = vshrl.u32 %v5452, 7
    %v5454 = vsub.s32 5, %v5453
    %v5455 = vrot.slane %v5174, %v5454
    %v5456 = vlaneseq
    %v5457 = vshrl.u32 %v5456, 7
    %v5458 = vsub.s32 6, %v5457
    %v5459 = vrot.slane %v5174, %v5458
    %v5723 = vunpack.c.l.b16 %v5175
    %v5724 = vunpack.c.h.b16 %v5175
    %v5725 = vunpack.c.l.b16 %v5176
    %v5726 = vunpack.c.h.b16 %v5176
    %v5727 = vunpack.c.l.b16 %v5177
    %v5728 = vunpack.c.h.b16 %v5177
    %v5729 = vunpack.c.l.b16 %v5178
    %v5730 = vunpack.c.l.b16 %v5179
    %v5731 = vunpack.c.h.b16 %v5179
    %v5732 = vunpack.c.l.b16 %v5180
    %v5733 = vunpack.c.h.b16 %v5180
    %v5734 = vunpack.c.l.b16 %v5181
    %v5735 = vunpack.c.h.b16 %v5181
    %v5736 = vunpack.c.l.b16 %v5182
    %v5737 = vunpack.c.l.b16 %v5183
    %v5738 = vunpack.c.h.b16 %v5183
    %v5739 = vunpack.c.l.b16 %v5184
    %v5740 = vunpack.c.h.b16 %v5184
    %v5741 = vunpack.c.l.b16 %v5185
    %v5742 = vunpack.c.h.b16 %v5185
    %v5743 = vunpack.c.l.b16 %v5186
    %v5744 = vunpack.c.l.b16 %v5187
    %v5745 = vunpack.c.h.b16 %v5187
    %v5746 = vunpack.c.l.b16 %v5188
    %v5747 = vunpack.c.h.b16 %v5188
    %v5748 = vunpack.c.l.b16 %v5189
    %v5749 = vunpack.c.h.b16 %v5189
    %v5750 = vunpack.c.l.b16 %v5190
    %v5751 = vunpack.c.l.b16 %v5191
    %v5752 = vunpack.c.h.b16 %v5191
    %v5753 = vunpack.c.l.b16 %v5192
    %v5754 = vunpack.c.h.b16 %v5192
    %v5755 = vunpack.c.l.b16 %v5193
    %v5756 = vunpack.c.h.b16 %v5193
    %v5757 = vunpack.c.l.b16 %v5194
    %v5758 = vunpack.c.l.b16 %v5195
    %v5759 = vunpack.c.h.b16 %v5195
    %v5760 = vunpack.c.l.b16 %v5196
    %v5761 = vunpack.c.h.b16 %v5196
    %v5762 = vunpack.c.l.b16 %v5197
    %v5763 = vunpack.c.h.b16 %v5197
    %v5764 = vunpack.c.l.b16 %v5198
    %v5765 = vunpack.c.l.b16 %v5199
    %v5766 = vunpack.c.h.b16 %v5199
    %v5767 = vunpack.c.l.b16 %v5200
    %v5768 = vunpack.c.h.b16 %v5200
    %v5769 = vunpack.c.l.b16 %v5201
    %v5770 = vunpack.c.h.b16 %v5201
    %v5771 = vunpack.c.l.b16 %v5202
    %v5772 = vunpack.c.l.b16 %v5203
    %v5773 = vunpack.c.h.b16 %v5203
    %v5774 = vunpack.c.l.b16 %v5204
    %v5775 = vunpack.c.h.b16 %v5204
    %v5776 = vunpack.c.l.b16 %v5205
    %v5777 = vunpack.c.h.b16 %v5205
    %v5778 = vunpack.c.l.b16 %v5206
    %v5779 = vunpack.c.l.b16 %v5207
    %v5780 = vunpack.c.h.b16 %v5207
    %v5781 = vunpack.c.l.b16 %v5208
    %v5782 = vunpack.c.h.b16 %v5208
    %v5783 = vunpack.c.l.b16 %v5209
    %v5784 = vunpack.c.h.b16 %v5209
    %v5785 = vunpack.c.l.b16 %v5210
    %v5786 = vunpack.c.l.b16 %v5211
    %v5787 = vunpack.c.h.b16 %v5211
    %v5788 = vunpack.c.l.b16 %v5212
    %v5789 = vunpack.c.h.b16 %v5212
    %v5790 = vunpack.c.l.b16 %v5213
    %v5791 = vunpack.c.h.b16 %v5213
    %v5792 = vunpack.c.l.b16 %v5214
    %v5793 = vunpack.c.l.b16 %v5215
    %v5794 = vunpack.c.h.b16 %v5215
    %v5795 = vunpack.c.l.b16 %v5216
    %v5796 = vunpack.c.h.b16 %v5216
    %v5797 = vunpack.c.l.b16 %v5217
    %v5798 = vunpack.c.h.b16 %v5217
    %v5799 = vunpack.c.l.b16 %v5218
    %v5800 = vunpack.c.l.b16 %v5219
    %v5801 = vunpack.c.h.b16 %v5219
    %v5802 = vunpack.c.l.b16 %v5220
    %v5803 = vunpack.c.h.b16 %v5220
    %v5804 = vunpack.c.l.b16 %v5221
    %v5805 = vunpack.c.h.b16 %v5221
    %v5806 = vunpack.c.l.b16 %v5222
    %v5807 = vunpack.c.l.b16 %v5223
    %v5808 = vunpack.c.h.b16 %v5223
    %v5809 = vunpack.c.l.b16 %v5224
    %v5810 = vunpack.c.h.b16 %v5224
    %v5811 = vunpack.c.l.b16 %v5225
    %v5812 = vunpack.c.h.b16 %v5225
    %v5813 = vunpack.c.l.b16 %v5226
    %v5814 = vunpack.c.l.b16 %v5227
    %v5815 = vunpack.c.h.b16 %v5227
    %v5816 = vunpack.c.l.b16 %v5228
    %v5817 = vunpack.c.h.b16 %v5228
    %v5818 = vunpack.c.l.b16 %v5229
    %v5819 = vunpack.c.h.b16 %v5229
    %v5820 = vunpack.c.l.b16 %v5230
    %v5821 = vunpack.c.l.b16 %v5231
    %v5822 = vunpack.c.h.b16 %v5231
    %v5823 = vunpack.c.l.b16 %v5232
    %v5824 = vunpack.c.h.b16 %v5232
    %v5825 = vunpack.c.l.b16 %v5233
    %v5826 = vunpack.c.h.b16 %v5233
    %v5827 = vunpack.c.l.b16 %v5234
    %v5828 = vunpack.c.l.b16 %v5235
    %v5829 = vunpack.c.h.b16 %v5235
    %v5830 = vunpack.c.l.b16 %v5236
    %v5831 = vunpack.c.h.b16 %v5236
    %v5832 = vunpack.c.l.b16 %v5237
    %v5833 = vunpack.c.h.b16 %v5237
    %v5834 = vunpack.c.l.b16 %v5238
    %v5835 = vunpack.c.l.b16 %v5239
    %v5836 = vunpack.c.h.b16 %v5239
    %v5837 = vunpack.c.l.b16 %v5240
    %v5838 = vunpack.c.h.b16 %v5240
    %v5839 = vunpack.c.l.b16 %v5241
    %v5840 = vunpack.c.h.b16 %v5241
    %v5841 = vunpack.c.l.b16 %v5242
    %v5842 = vunpack.c.l.b16 %v5243
    %v5843 = vunpack.c.h.b16 %v5243
    %v5844 = vunpack.c.l.b16 %v5244
    %v5845 = vunpack.c.h.b16 %v5244
    %v5846 = vunpack.c.l.b16 %v5245
    %v5847 = vunpack.c.h.b16 %v5245
    %v5848 = vunpack.c.l.b16 %v5246
    %v5849 = vunpack.c.l.b16 %v5247
    %v5850 = vunpack.c.h.b16 %v5247
    %v5851 = vunpack.c.l.b16 %v5248
    %v5852 = vunpack.c.h.b16 %v5248
    %v5853 = vunpack.c.l.b16 %v5249
    %v5854 = vunpack.c.h.b16 %v5249
    %v5855 = vunpack.c.l.b16 %v5250
    %v5856 = vunpack.c.l.b16 %v5251
    %v5857 = vunpack.c.h.b16 %v5251
    %v5858 = vunpack.c.l.b16 %v5252
    %v5859 = vunpack.c.h.b16 %v5252
    %v5860 = vunpack.c.l.b16 %v5253
    %v5861 = vunpack.c.h.b16 %v5253
    %v5862 = vunpack.c.l.b16 %v5254
    %v5863 = vunpack.c.l.b16 %v5255
    %v5864 = vunpack.c.h.b16 %v5255
    %v5865 = vunpack.c.l.b16 %v5256
    %v5866 = vunpack.c.h.b16 %v5256
    %v5867 = vunpack.c.l.b16 %v5257
    %v5868 = vunpack.c.h.b16 %v5257
    %v5869 = vunpack.c.l.b16 %v5258
    %v5870 = vunpack.c.l.b16 %v5259
    %v5871 = vunpack.c.h.b16 %v5259
    %v5872 = vunpack.c.l.b16 %v5260
    %v5873 = vunpack.c.h.b16 %v5260
    %v5874 = vunpack.c.l.b16 %v5261
    %v5875 = vunpack.c.h.b16 %v5261
    %v5876 = vunpack.c.l.b16 %v5262
    %v5877 = vunpack.c.l.b16 %v5263
    %v5878 = vunpack.c.h.b16 %v5263
    %v5879 = vunpack.c.l.b16 %v5264
    %v5880 = vunpack.c.h.b16 %v5264
    %v5881 = vunpack.c.l.b16 %v5265
    %v5882 = vunpack.c.h.b16 %v5265
    %v5883 = vunpack.c.l.b16 %v5266
    %v5884 = vunpack.c.l.b16 %v5267
    %v5885 = vunpack.c.h.b16 %v5267
    %v5886 = vunpack.c.l.b16 %v5268
    %v5887 = vunpack.c.h.b16 %v5268
    %v5888 = vunpack.c.l.b16 %v5269
    %v5889 = vunpack.c.h.b16 %v5269
    %v5890 = vunpack.c.l.b16 %v5270
    %v5891 = vunpack.c.l.b16 %v5271
    %v5892 = vunpack.c.h.b16 %v5271
    %v5893 = vunpack.c.l.b16 %v5272
    %v5894 = vunpack.c.h.b16 %v5272
    %v5895 = vunpack.c.l.b16 %v5273
    %v5896 = vunpack.c.h.b16 %v5273
    %v5897 = vunpack.c.l.b16 %v5274
    %v5898 = vunpack.c.l.b16 %v5275
    %v5899 = vunpack.c.h.b16 %v5275
    %v5900 = vunpack.c.l.b16 %v5276
    %v5901 = vunpack.c.h.b16 %v5276
    %v5902 = vunpack.c.l.b16 %v5277
    %v5903 = vunpack.c.h.b16 %v5277
    %v5904 = vunpack.c.l.b16 %v5278
    %v5905 = vunpack.c.l.b16 %v5279
    %v5906 = vunpack.c.h.b16 %v5279
    %v5907 = vunpack.c.l.b16 %v5280
    %v5908 = vunpack.c.h.b16 %v5280
    %v5909 = vunpack.c.l.b16 %v5281
    %v5910 = vunpack.c.h.b16 %v5281
    %v5911 = vunpack.c.l.b16 %v5282
    %v5912 = vunpack.c.l.b16 %v5283
    %v5913 = vunpack.c.h.b16 %v5283
    %v5914 = vunpack.c.l.b16 %v5284
    %v5915 = vunpack.c.h.b16 %v5284
    %v5916 = vunpack.c.l.b16 %v5285
    %v5917 = vunpack.c.h.b16 %v5285
    %v5918 = vunpack.c.l.b16 %v5286
    %v5919 = vunpack.c.l.b16 %v5287
    %v5920 = vunpack.c.h.b16 %v5287
    %v5921 = vunpack.c.l.b16 %v5288
    %v5922 = vunpack.c.h.b16 %v5288
    %v5923 = vunpack.c.l.b16 %v5289
    %v5924 = vunpack.c.h.b16 %v5289
    %v5925 = vunpack.c.l.b16 %v5290
    %v5926 = vunpack.c.l.b16 %v5291
    %v5927 = vunpack.c.h.b16 %v5291
    %v5928 = vunpack.c.l.b16 %v5292
    %v5929 = vunpack.c.h.b16 %v5292
    %v5930 = vunpack.c.l.b16 %v5293
    %v5931 = vunpack.c.h.b16 %v5293
    %v5932 = vunpack.c.l.b16 %v5294
    %v5933 = vunpack.c.l.b16 %v5295
    %v5934 = vunpack.c.h.b16 %v5295
    %v5935 = vunpack.c.l.b16 %v5296
    %v5936 = vunpack.c.h.b16 %v5296
    %v5937 = vunpack.c.l.b16 %v5297
    %v5938 = vunpack.c.h.b16 %v5297
    %v5939 = vunpack.c.l.b16 %v5298
    %v5940 = vunpack.c.l.b16 %v5299
    %v5941 = vunpack.c.h.b16 %v5299
    %v5942 = vunpack.c.l.b16 %v5300
    %v5943 = vunpack.c.h.b16 %v5300
    %v5944 = vunpack.c.l.b16 %v5301
    %v5945 = vunpack.c.h.b16 %v5301
    %v5946 = vunpack.c.l.b16 %v5302
    %v5947 = vunpack.c.l.b16 %v5303
    %v5948 = vunpack.c.h.b16 %v5303
    %v5949 = vunpack.c.l.b16 %v5304
    %v5950 = vunpack.c.h.b16 %v5304
    %v5951 = vunpack.c.l.b16 %v5305
    %v5952 = vunpack.c.h.b16 %v5305
    %v5953 = vunpack.c.l.b16 %v5306
    %v5954 = vunpack.c.l.b16 %v5307
    %v5955 = vunpack.c.h.b16 %v5307
    %v5956 = vunpack.c.l.b16 %v5308
    %v5957 = vunpack.c.h.b16 %v5308
    %v5958 = vunpack.c.l.b16 %v5309
    %v5959 = vunpack.c.h.b16 %v5309
    %v5960 = vunpack.c.l.b16 %v5310
    %v5961 = vunpack.c.l.b16 %v5311
    %v5962 = vunpack.c.h.b16 %v5311
    %v5963 = vunpack.c.l.b16 %v5312
    %v5964 = vunpack.c.h.b16 %v5312
    %v5965 = vunpack.c.l.b16 %v5313
    %v5966 = vunpack.c.h.b16 %v5313
    %v5967 = vunpack.c.l.b16 %v5314
    %v5968 = vunpack.c.l.b16 %v5315
    %v5969 = vunpack.c.h.b16 %v5315
    %v5970 = vunpack.c.l.b16 %v5316
    %v5971 = vunpack.c.h.b16 %v5316
    %v5972 = vunpack.c.l.b16 %v5317
    %v5973 = vunpack.c.h.b16 %v5317
    %v5974 = vunpack.c.l.b16 %v5318
    %v5975 = vunpack.c.l.b16 %v5319
    %v5976 = vunpack.c.h.b16 %v5319
    %v5977 = vunpack.c.l.b16 %v5320
    %v5978 = vunpack.c.h.b16 %v5320
    %v5979 = vunpack.c.l.b16 %v5321
    %v5980 = vunpack.c.h.b16 %v5321
    %v5981 = vunpack.c.l.b16 %v5322
    %v5982 = vunpack.c.l.b16 %v5323
    %v5983 = vunpack.c.h.b16 %v5323
    %v5984 = vunpack.c.l.b16 %v5324
    %v5985 = vunpack.c.h.b16 %v5324
    %v5986 = vunpack.c.l.b16 %v5325
    %v5987 = vunpack.c.h.b16 %v5325
    %v5988 = vunpack.c.l.b16 %v5326
    %v5989 = vunpack.c.l.b16 %v5327
    %v5990 = vunpack.c.h.b16 %v5327
    %v5991 = vunpack.c.l.b16 %v5328
    %v5992 = vunpack.c.h.b16 %v5328
    %v5993 = vunpack.c.l.b16 %v5329
    %v5994 = vunpack.c.h.b16 %v5329
    %v5995 = vunpack.c.l.b16 %v5330
    %v5996 = vunpack.c.l.b16 %v5331
    %v5997 = vunpack.c.h.b16 %v5331
    %v5998 = vunpack.c.l.b16 %v5332
    %v5999 = vunpack.c.h.b16 %v5332
    %v6000 = vunpack.c.l.b16 %v5333
    %v6001 = vunpack.c.h.b16 %v5333
    %v6002 = vunpack.c.l.b16 %v5334
    %v6003 = vunpack.c.l.b16 %v5335
    %v6004 = vunpack.c.h.b16 %v5335
    %v6005 = vunpack.c.l.b16 %v5336
    %v6006 = vunpack.c.h.b16 %v5336
    %v6007 = vunpack.c.l.b16 %v5337
    %v6008 = vunpack.c.h.b16 %v5337
    %v6009 = vunpack.c.l.b16 %v5338
    %v6010 = vunpack.c.l.b16 %v5339
    %v6011 = vunpack.c.h.b16 %v5339
    %v6012 = vunpack.c.l.b16 %v5340
    %v6013 = vunpack.c.h.b16 %v5340
    %v6014 = vunpack.c.l.b16 %v5341
    %v6015 = vunpack.c.h.b16 %v5341
    %v6016 = vunpack.c.l.b16 %v5342
    %v6017 = vunpack.c.l.b16 %v5343
    %v6018 = vunpack.c.h.b16 %v5343
    %v6019 = vunpack.c.l.b16 %v5344
    %v6020 = vunpack.c.h.b16 %v5344
    %v6021 = vunpack.c.l.b16 %v5345
    %v6022 = vunpack.c.h.b16 %v5345
    %v6023 = vunpack.c.l.b16 %v5346
    %v6024 = vunpack.c.l.b16 %v5347
    %v6025 = vunpack.c.h.b16 %v5347
    %v6026 = vunpack.c.l.b16 %v5348
    %v6027 = vunpack.c.h.b16 %v5348
    %v6028 = vunpack.c.l.b16 %v5349
    %v6029 = vunpack.c.h.b16 %v5349
    %v6030 = vunpack.c.l.b16 %v5350
    %v6031 = vunpack.c.l.b16 %v5351
    %v6032 = vunpack.c.h.b16 %v5351
    %v6033 = vunpack.c.l.b16 %v5352
    %v6034 = vunpack.c.h.b16 %v5352
    %v6035 = vunpack.c.l.b16 %v5353
    %v6036 = vunpack.c.h.b16 %v5353
    %v6037 = vunpack.c.l.b16 %v5354
    %v6038 = vunpack.c.l.b16 %v5355
    %v6039 = vunpack.c.h.b16 %v5355
    %v6040 = vunpack.c.l.b16 %v5356
    %v6041 = vunpack.c.h.b16 %v5356
    %v6042 = vunpack.c.l.b16 %v5357
    %v6043 = vunpack.c.h.b16 %v5357
    %v6044 = vunpack.c.l.b16 %v5358
    %v6045 = vunpack.c.l.b16 %v5359
    %v6046 = vunpack.c.h.b16 %v5359
    %v6047 = vunpack.c.l.b16 %v5360
    %v6048 = vunpack.c.h.b16 %v5360
    %v6049 = vunpack.c.l.b16 %v5361
    %v6050 = vunpack.c.h.b16 %v5361
    %v6051 = vunpack.c.l.b16 %v5362
    %v6052 = vunpack.c.l.b16 %v5363
    %v6053 = vunpack.c.h.b16 %v5363
    %v6054 = vunpack.c.l.b16 %v5364
    %v6055 = vunpack.c.h.b16 %v5364
    %v6056 = vunpack.c.l.b16 %v5365
    %v6057 = vunpack.c.h.b16 %v5365
    %v6058 = vunpack.c.l.b16 %v5366
    %v6059 = vunpack.c.l.b16 %v5367
    %v6060 = vunpack.c.h.b16 %v5367
    %v6061 = vunpack.c.l.b16 %v5368
    %v6062 = vunpack.c.h.b16 %v5368
    %v6063 = vunpack.c.l.b16 %v5369
    %v6064 = vunpack.c.h.b16 %v5369
    %v6065 = vunpack.c.l.b16 %v5370
    %v6066 = vunpack.c.l.b16 %v5371
    %v6067 = vunpack.c.h.b16 %v5371
    %v6068 = vunpack.c.l.b16 %v5372
    %v6069 = vunpack.c.h.b16 %v5372
    %v6070 = vunpack.c.l.b16 %v5373
    %v6071 = vunpack.c.h.b16 %v5373
    %v6072 = vunpack.c.l.b16 %v5374
    %v6073 = vunpack.c.l.b16 %v5375
    %v6074 = vunpack.c.h.b16 %v5375
    %v6075 = vunpack.c.l.b16 %v5376
    %v6076 = vunpack.c.h.b16 %v5376
    %v6077 = vunpack.c.l.b16 %v5377
    %v6078 = vunpack.c.h.b16 %v5377
    %v6079 = vunpack.c.l.b16 %v5378
    %v6080 = vunpack.c.l.b16 %v5379
    %v6081 = vunpack.c.h.b16 %v5379
    %v6082 = vunpack.c.l.b16 %v5380
    %v6083 = vunpack.c.h.b16 %v5380
    %v6084 = vunpack.c.l.b16 %v5381
    %v6085 = vunpack.c.h.b16 %v5381
    %v6086 = vunpack.c.l.b16 %v5382
    %v6087 = vunpack.c.l.b16 %v5383
    %v6088 = vunpack.c.h.b16 %v5383
    %v6089 = vunpack.c.l.b16 %v5384
    %v6090 = vunpack.c.h.b16 %v5384
    %v6091 = vunpack.c.l.b16 %v5385
    %v6092 = vunpack.c.h.b16 %v5385
    %v6093 = vunpack.c.l.b16 %v5386
    %v6094 = vunpack.c.l.b16 %v5387
    %v6095 = vunpack.c.h.b16 %v5387
    %v6096 = vunpack.c.l.b16 %v5388
    %v6097 = vunpack.c.h.b16 %v5388
    %v6098 = vunpack.c.l.b16 %v5389
    %v6099 = vunpack.c.h.b16 %v5389
    %v6100 = vunpack.c.l.b16 %v5390
    %v6101 = vunpack.c.l.b16 %v5391
    %v6102 = vunpack.c.h.b16 %v5391
    %v6103 = vunpack.c.l.b16 %v5392
    %v6104 = vunpack.c.h.b16 %v5392
    %v6105 = vunpack.c.l.b16 %v5393
    %v6106 = vunpack.c.h.b16 %v5393
    %v6107 = vunpack.c.l.b16 %v5394
    %v6108 = vunpack.c.l.b16 %v5395
    %v6109 = vunpack.c.h.b16 %v5395
    %v6110 = vunpack.c.l.b16 %v5396
    %v6111 = vunpack.c.h.b16 %v5396
    %v6112 = vunpack.c.l.b16 %v5397
    %v6113 = vunpack.c.h.b16 %v5397
    %v6114 = vunpack.c.l.b16 %v5398
    %v6115 = vunpack.c.l.b16 %v5399
    %v6116 = vunpack.c.h.b16 %v5399
    %v6117 = vunpack.c.l.b16 %v5400
    %v6118 = vunpack.c.h.b16 %v5400
    %v6119 = vunpack.c.l.b16 %v5401
    %v6120 = vunpack.c.h.b16 %v5401
    %v6121 = vunpack.c.l.b16 %v5402
    %v6122 = vunpack.c.l.b16 %v5403
    %v6123 = vunpack.c.h.b16 %v5403
    %v6124 = vunpack.c.l.b16 %v5404
    %v6125 = vunpack.c.h.b16 %v5404
    %v6126 = vunpack.c.l.b16 %v5405
    %v6127 = vunpack.c.h.b16 %v5405
    %v6128 = vunpack.c.l.b16 %v5406
    %v6129 = vunpack.c.l.b16 %v5407
    %v6130 = vunpack.c.h.b16 %v5407
    %v6131 = vunpack.c.l.b16 %v5408
    %v6132 = vunpack.c.h.b16 %v5408
    %v6133 = vunpack.c.l.b16 %v5409
    %v6134 = vunpack.c.h.b16 %v5409
    %v6135 = vunpack.c.l.b16 %v5410
    %v6136 = vunpack.c.l.b16 %v5411
    %v6137 = vunpack.c.h.b16 %v5411
    %v6138 = vunpack.c.l.b16 %v5412
    %v6139 = vunpack.c.h.b16 %v5412
    %v6140 = vunpack.c.l.b16 %v5413
    %v6141 = vunpack.c.h.b16 %v5413
    %v6142 = vunpack.c.l.b16 %v5414
    %v6143 = vunpack.c.l.b16 %v5415
    %v6144 = vunpack.c.h.b16 %v5415
    %v6145 = vunpack.c.l.b16 %v5416
    %v6146 = vunpack.c.h.b16 %v5416
    %v6147 = vunpack.c.l.b16 %v5417
    %v6148 = vunpack.c.h.b16 %v5417
    %v6149 = vunpack.c.l.b16 %v5418
    %v6150 = vunpack.c.l.b16 %v5419
    %v6151 = vunpack.c.h.b16 %v5419
    %v6152 = vunpack.c.l.b16 %v5420
    %v6153 = vunpack.c.h.b16 %v5420
    %v6154 = vunpack.c.l.b16 %v5421
    %v6155 = vunpack.c.h.b16 %v5421
    %v6156 = vunpack.c.l.b16 %v5422
    %v6157 = vunpack.c.l.b16 %v5423
    %v6158 = vunpack.c.h.b16 %v5423
    %v6159 = vunpack.c.l.b16 %v5424
    %v6160 = vunpack.c.h.b16 %v5424
    %v6161 = vunpack.c.l.b16 %v5425
    %v6162 = vunpack.c.h.b16 %v5425
    %v6163 = vunpack.c.l.b16 %v5426
    %v6164 = vunpack.c.l.b16 %v5427
    %v6165 = vunpack.c.h.b16 %v5427
    %v6166 = vunpack.c.l.b16 %v5428
    %v6167 = vunpack.c.h.b16 %v5428
    %v6168 = vunpack.c.l.b16 %v5429
    %v6169 = vunpack.c.h.b16 %v5429
    %v6170 = vunpack.c.l.b16 %v5430
    %v6171 = vpack.c.b16 %v5730, %v5723
    %v6172 = vpack.c.b16 %v5731, %v5724
    %v6173 = vpack.c.b16 %v5732, %v5725
    %v6174 = vpack.c.b16 %v5733, %v5726
    %v6175 = vpack.c.b16 %v5734, %v5727
    %v6176 = vpack.c.b16 %v5735, %v5728
    %v6177 = vpack.c.b16 %v5736, %v5729
    %v6178 = vpack.c.b16 %v5744, %v5737
    %v6179 = vpack.c.b16 %v5745, %v5738
    %v6180 = vpack.c.b16 %v5746, %v5739
    %v6181 = vpack.c.b16 %v5747, %v5740
    %v6182 = vpack.c.b16 %v5748, %v5741
    %v6183 = vpack.c.b16 %v5749, %v5742
    %v6184 = vpack.c.b16 %v5750, %v5743
    %v6185 = vpack.c.b16 %v5758, %v5751
    %v6186 = vpack.c.b16 %v5759, %v5752
    %v6187 = vpack.c.b16 %v5760, %v5753
    %v6188 = vpack.c.b16 %v5761, %v5754
    %v6189 = vpack.c.b16 %v5762, %v5755
    %v6190 = vpack.c.b16 %v5763, %v5756
    %v6191 = vpack.c.b16 %v5764, %v5757
    %v6192 = vpack.c.b16 %v5772, %v5765
    %v6193 = vpack.c.b16 %v5773, %v5766
    %v6194 = vpack.c.b16 %v5774, %v5767
    %v6195 = vpack.c.b16 %v5775, %v5768
    %v6196 = vpack.c.b16 %v5776, %v5769
    %v6197 = vpack.c.b16 %v5777, %v5770
    %v6198 = vpack.c.b16 %v5778, %v5771
    %v6199 = vpack.c.b16 %v5786, %v5779
    %v6200 = vpack.c.b16 %v5787, %v5780
    %v6201 = vpack.c.b16 %v5788, %v5781
    %v6202 = vpack.c.b16 %v5789, %v5782
    %v6203 = vpack.c.b16 %v5790, %v5783
    %v6204 = vpack.c.b16 %v5791, %v5784
    %v6205 = vpack.c.b16 %v5792, %v5785
    %v6206 = vpack.c.b16 %v5800, %v5793
    %v6207 = vpack.c.b16 %v5801, %v5794
    %v6208 = vpack.c.b16 %v5802, %v5795
    %v6209 = vpack.c.b16 %v5803, %v5796
    %v6210 = vpack.c.b16 %v5804, %v5797
    %v6211 = vpack.c.b16 %v5805, %v5798
    %v6212 = vpack.c.b16 %v5806, %v5799
    %v6213 = vpack.c.b16 %v5814, %v5807
    %v6214 = vpack.c.b16 %v5815, %v5808
    %v6215 = vpack.c.b16 %v5816, %v5809
    %v6216 = vpack.c.b16 %v5817, %v5810
    %v6217 = vpack.c.b16 %v5818, %v5811
    %v6218 = vpack.c.b16 %v5819, %v5812
    %v6219 = vpack.c.b16 %v5820, %v5813
    %v6220 = vpack.c.b16 %v5828, %v5821
    %v6221 = vpack.c.b16 %v5829, %v5822
    %v6222 = vpack.c.b16 %v5830, %v5823
    %v6223 = vpack.c.b16 %v5831, %v5824
    %v6224 = vpack.c.b16 %v5832, %v5825
    %v6225 = vpack.c.b16 %v5833, %v5826
    %v6226 = vpack.c.b16 %v5834, %v5827
    %v6227 = vpack.c.b16 %v5842, %v5835
    %v6228 = vpack.c.b16 %v5843, %v5836
    %v6229 = vpack.c.b16 %v5844, %v5837
    %v6230 = vpack.c.b16 %v5845, %v5838
    %v6231 = vpack.c.b16 %v5846, %v5839
    %v6232 = vpack.c.b16 %v5847, %v5840
    %v6233 = vpack.c.b16 %v5848, %v5841
    %v6234 = vpack.c.b16 %v5856, %v5849
    %v6235 = vpack.c.b16 %v5857, %v5850
    %v6236 = vpack.c.b16 %v5858, %v5851
    %v6237 = vpack.c.b16 %v5859, %v5852
    %v6238 = vpack.c.b16 %v5860, %v5853
    %v6239 = vpack.c.b16 %v5861, %v5854
    %v6240 = vpack.c.b16 %v5862, %v5855
    %v6241 = vpack.c.b16 %v5870, %v5863
    %v6242 = vpack.c.b16 %v5871, %v5864
    %v6243 = vpack.c.b16 %v5872, %v5865
    %v6244 = vpack.c.b16 %v5873, %v5866
    %v6245 = vpack.c.b16 %v5874, %v5867
    %v6246 = vpack.c.b16 %v5875, %v5868
    %v6247 = vpack.c.b16 %v5876, %v5869
    %v6248 = vpack.c.b16 %v5884, %v5877
    %v6249 = vpack.c.b16 %v5885, %v5878
    %v6250 = vpack.c.b16 %v5886, %v5879
    %v6251 = vpack.c.b16 %v5887, %v5880
    %v6252 = vpack.c.b16 %v5888, %v5881
    %v6253 = vpack.c.b16 %v5889, %v5882
    %v6254 = vpack.c.b16 %v5890, %v5883
    %v6255 = vpack.c.b16 %v5898, %v5891
    %v6256 = vpack.c.b16 %v5899, %v5892
    %v6257 = vpack.c.b16 %v5900, %v5893
    %v6258 = vpack.c.b16 %v5901, %v5894
    %v6259 = vpack.c.b16 %v5902, %v5895
    %v6260 = vpack.c.b16 %v5903, %v5896
    %v6261 = vpack.c.b16 %v5904, %v5897
    %v6262 = vpack.c.b16 %v5912, %v5905
    %v6263 = vpack.c.b16 %v5913, %v5906
    %v6264 = vpack.c.b16 %v5914, %v5907
    %v6265 = vpack.c.b16 %v5915, %v5908
    %v6266 = vpack.c.b16 %v5916, %v5909
    %v6267 = vpack.c.b16 %v5917, %v5910
    %v6268 = vpack.c.b16 %v5918, %v5911
    %v6269 = vpack.c.b16 %v5926, %v5919
    %v6270 = vpack.c.b16 %v5927, %v5920
    %v6271 = vpack.c.b16 %v5928, %v5921
    %v6272 = vpack.c.b16 %v5929, %v5922
    %v6273 = vpack.c.b16 %v5930, %v5923
    %v6274 = vpack.c.b16 %v5931, %v5924
    %v6275 = vpack.c.b16 %v5932, %v5925
    %v6276 = vpack.c.b16 %v5940, %v5933
    %v6277 = vpack.c.b16 %v5941, %v5934
    %v6278 = vpack.c.b16 %v5942, %v5935
    %v6279 = vpack.c.b16 %v5943, %v5936
    %v6280 = vpack.c.b16 %v5944, %v5937
    %v6281 = vpack.c.b16 %v5945, %v5938
    %v6282 = vpack.c.b16 %v5946, %v5939
    %v6283 = vpack.c.b16 %v5954, %v5947
    %v6284 = vpack.c.b16 %v5955, %v5948
    %v6285 = vpack.c.b16 %v5956, %v5949
    %v6286 = vpack.c.b16 %v5957, %v5950
    %v6287 = vpack.c.b16 %v5958, %v5951
    %v6288 = vpack.c.b16 %v5959, %v5952
    %v6289 = vpack.c.b16 %v5960, %v5953
    %v6290 = vpack.c.b16 %v5968, %v5961
    %v6291 = vpack.c.b16 %v5969, %v5962
    %v6292 = vpack.c.b16 %v5970, %v5963
    %v6293 = vpack.c.b16 %v5971, %v5964
    %v6294 = vpack.c.b16 %v5972, %v5965
    %v6295 = vpack.c.b16 %v5973, %v5966
    %v6296 = vpack.c.b16 %v5974, %v5967
    %v6297 = vpack.c.b16 %v5982, %v5975
    %v6298 = vpack.c.b16 %v5983, %v5976
    %v6299 = vpack.c.b16 %v5984, %v5977
    %v6300 = vpack.c.b16 %v5985, %v5978
    %v6301 = vpack.c.b16 %v5986, %v5979
    %v6302 = vpack.c.b16 %v5987, %v5980
    %v6303 = vpack.c.b16 %v5988, %v5981
    %v6304 = vpack.c.b16 %v5996, %v5989
    %v6305 = vpack.c.b16 %v5997, %v5990
    %v6306 = vpack.c.b16 %v5998, %v5991
    %v6307 = vpack.c.b16 %v5999, %v5992
    %v6308 = vpack.c.b16 %v6000, %v5993
    %v6309 = vpack.c.b16 %v6001, %v5994
    %v6310 = vpack.c.b16 %v6002, %v5995
    %v6311 = vpack.c.b16 %v6010, %v6003
    %v6312 = vpack.c.b16 %v6011, %v6004
    %v6313 = vpack.c.b16 %v6012, %v6005
    %v6314 = vpack.c.b16 %v6013, %v6006
    %v6315 = vpack.c.b16 %v6014, %v6007
    %v6316 = vpack.c.b16 %v6015, %v6008
    %v6317 = vpack.c.b16 %v6016, %v6009
    %v6318 = vpack.c.b16 %v6024, %v6017
    %v6319 = vpack.c.b16 %v6025, %v6018
    %v6320 = vpack.c.b16 %v6026, %v6019
    %v6321 = vpack.c.b16 %v6027, %v6020
    %v6322 = vpack.c.b16 %v6028, %v6021
    %v6323 = vpack.c.b16 %v6029, %v6022
    %v6324 = vpack.c.b16 %v6030, %v6023
    %v6325 = vpack.c.b16 %v6038, %v6031
    %v6326 = vpack.c.b16 %v6039, %v6032
    %v6327 = vpack.c.b16 %v6040, %v6033
    %v6328 = vpack.c.b16 %v6041, %v6034
    %v6329 = vpack.c.b16 %v6042, %v6035
    %v6330 = vpack.c.b16 %v6043, %v6036
    %v6331 = vpack.c.b16 %v6044, %v6037
    %v6332 = vpack.c.b16 %v6052, %v6045
    %v6333 = vpack.c.b16 %v6053, %v6046
    %v6334 = vpack.c.b16 %v6054, %v6047
    %v6335 = vpack.c.b16 %v6055, %v6048
    %v6336 = vpack.c.b16 %v6056, %v6049
    %v6337 = vpack.c.b16 %v6057, %v6050
    %v6338 = vpack.c.b16 %v6058, %v6051
    %v6339 = vpack.c.b16 %v6066, %v6059
    %v6340 = vpack.c.b16 %v6067, %v6060
    %v6341 = vpack.c.b16 %v6068, %v6061
    %v6342 = vpack.c.b16 %v6069, %v6062
    %v6343 = vpack.c.b16 %v6070, %v6063
    %v6344 = vpack.c.b16 %v6071, %v6064
    %v6345 = vpack.c.b16 %v6072, %v6065
    %v6346 = vpack.c.b16 %v6080, %v6073
    %v6347 = vpack.c.b16 %v6081, %v6074
    %v6348 = vpack.c.b16 %v6082, %v6075
    %v6349 = vpack.c.b16 %v6083, %v6076
    %v6350 = vpack.c.b16 %v6084, %v6077
    %v6351 = vpack.c.b16 %v6085, %v6078
    %v6352 = vpack.c.b16 %v6086, %v6079
    %v6353 = vpack.c.b16 %v6094, %v6087
    %v6354 = vpack.c.b16 %v6095, %v6088
    %v6355 = vpack.c.b16 %v6096, %v6089
    %v6356 = vpack.c.b16 %v6097, %v6090
    %v6357 = vpack.c.b16 %v6098, %v6091
    %v6358 = vpack.c.b16 %v6099, %v6092
    %v6359 = vpack.c.b16 %v6100, %v6093
    %v6360 = vpack.c.b16 %v6108, %v6101
    %v6361 = vpack.c.b16 %v6109, %v6102
    %v6362 = vpack.c.b16 %v6110, %v6103
    %v6363 = vpack.c.b16 %v6111, %v6104
    %v6364 = vpack.c.b16 %v6112, %v6105
    %v6365 = vpack.c.b16 %v6113, %v6106
    %v6366 = vpack.c.b16 %v6114, %v6107
    %v6367 = vpack.c.b16 %v6122, %v6115
    %v6368 = vpack.c.b16 %v6123, %v6116
    %v6369 = vpack.c.b16 %v6124, %v6117
    %v6370 = vpack.c.b16 %v6125, %v6118
    %v6371 = vpack.c.b16 %v6126, %v6119
    %v6372 = vpack.c.b16 %v6127, %v6120
    %v6373 = vpack.c.b16 %v6128, %v6121
    %v6374 = vpack.c.b16 %v6136, %v6129
    %v6375 = vpack.c.b16 %v6137, %v6130
    %v6376 = vpack.c.b16 %v6138, %v6131
    %v6377 = vpack.c.b16 %v6139, %v6132
    %v6378 = vpack.c.b16 %v6140, %v6133
    %v6379 = vpack.c.b16 %v6141, %v6134
    %v6380 = vpack.c.b16 %v6142, %v6135
    %v6381 = vpack.c.b16 %v6150, %v6143
    %v6382 = vpack.c.b16 %v6151, %v6144
    %v6383 = vpack.c.b16 %v6152, %v6145
    %v6384 = vpack.c.b16 %v6153, %v6146
    %v6385 = vpack.c.b16 %v6154, %v6147
    %v6386 = vpack.c.b16 %v6155, %v6148
    %v6387 = vpack.c.b16 %v6156, %v6149
    %v6388 = vpack.c.b16 %v6164, %v6157
    %v6389 = vpack.c.b16 %v6165, %v6158
    %v6390 = vpack.c.b16 %v6166, %v6159
    %v6391 = vpack.c.b16 %v6167, %v6160
    %v6392 = vpack.c.b16 %v6168, %v6161
    %v6393 = vpack.c.b16 %v6169, %v6162
    %v6394 = vpack.c.b16 %v6170, %v6163
    %6619 = vmatprep.subr.bf16.mxu0 %v6221
    %6620 = vmatpush1.bf16.msra.mxu0 %v6220
    %6621 = vmatprep.subr.bf16.mxu0 %v6214
    %6622 = vmatpush1.bf16.msra.mxu0 %v6213
    %6623 = vmatprep.subr.bf16.mxu0 %v6207
    %6624 = vmatpush1.bf16.msra.mxu0 %v6206
    %6625 = vmatprep.subr.bf16.mxu0 %v6200
    %6626 = vmatpush1.bf16.msra.mxu0 %v6199
    %6627 = vmatprep.subr.bf16.mxu0 %v6193
    %6628 = vmatpush1.bf16.msra.mxu0 %v6192
    %6629 = vmatprep.subr.bf16.mxu0 %v6186
    %6630 = vmatpush1.bf16.msra.mxu0 %v6185
    %6631 = vmatprep.subr.bf16.mxu0 %v6179
    %6632 = vmatpush1.bf16.msra.mxu0 %v6178
    %6633 = vmatprep.subr.bf16.mxu0 %v6172
    %6634 = vmatpush1.bf16.msra.mxu0 %v6171
    %6635 = vmatprep.subr.bf16.mxu0 %v6277
    %6636 = vmatpush2.bf16.msra.mxu0 %v6276
    %6637 = vmatprep.subr.bf16.mxu0 %v6270
    %6638 = vmatpush2.bf16.msra.mxu0 %v6269
    %6639 = vmatprep.subr.bf16.mxu0 %v6263
    %6640 = vmatpush2.bf16.msra.mxu0 %v6262
    %6641 = vmatprep.subr.bf16.mxu0 %v6256
    %6642 = vmatpush2.bf16.msra.mxu0 %v6255
    %6643 = vmatprep.subr.bf16.mxu0 %v6249
    %6644 = vmatpush2.bf16.msra.mxu0 %v6248
    %6645 = vmatprep.subr.bf16.mxu0 %v6242
    %6646 = vmatpush2.bf16.msra.mxu0 %v6241
    %6647 = vmatprep.subr.bf16.mxu0 %v6235
    %6648 = vmatpush2.bf16.msra.mxu0 %v6234
    %6649 = vmatprep.subr.bf16.mxu0 %v6228
    %6650 = vmatpush2.bf16.msra.mxu0 %v6227
    %6651 = vmatprep.mubr.bf16.mxu0 %v5171
    %6652 = vmatmul.mubr.bf16.gmra.mxu0 %v5170
    %v6653 = vpop.f32.mrf.mxu0
    %v6654 = vadd.f32 %v5435, %v6653
    %v6655 = vpop.f32.mrf.mxu0
    %v6656 = vadd.f32 %v5439, %v6655
    %v6657 = vpop.f32.mrf.mxu0
    %v6658 = vpop.f32.mrf.mxu0
    %6659 = vdwg.mxu0
    %6660 = vmatprep.subr.bf16.mxu0 %v6333
    %6661 = vmatpush1.bf16.msra.mxu0 %v6332
    %6662 = vmatprep.subr.bf16.mxu0 %v6326
    %6663 = vmatpush1.bf16.msra.mxu0 %v6325
    %6664 = vmatprep.subr.bf16.mxu0 %v6319
    %6665 = vmatpush1.bf16.msra.mxu0 %v6318
    %6666 = vmatprep.subr.bf16.mxu0 %v6312
    %6667 = vmatpush1.bf16.msra.mxu0 %v6311
    %6668 = vmatprep.subr.bf16.mxu0 %v6305
    %6669 = vmatpush1.bf16.msra.mxu0 %v6304
    %6670 = vmatprep.subr.bf16.mxu0 %v6298
    %6671 = vmatpush1.bf16.msra.mxu0 %v6297
    %6672 = vmatprep.subr.bf16.mxu0 %v6291
    %6673 = vmatpush1.bf16.msra.mxu0 %v6290
    %6674 = vmatprep.subr.bf16.mxu0 %v6284
    %6675 = vmatpush1.bf16.msra.mxu0 %v6283
    %6676 = vmatprep.subr.bf16.mxu0 %v6389
    %6677 = vmatpush2.bf16.msra.mxu0 %v6388
    %6678 = vmatprep.subr.bf16.mxu0 %v6382
    %6679 = vmatpush2.bf16.msra.mxu0 %v6381
    %6680 = vmatprep.subr.bf16.mxu0 %v6375
    %6681 = vmatpush2.bf16.msra.mxu0 %v6374
    %6682 = vmatprep.subr.bf16.mxu0 %v6368
    %6683 = vmatpush2.bf16.msra.mxu0 %v6367
    %6684 = vmatprep.subr.bf16.mxu0 %v6361
    %6685 = vmatpush2.bf16.msra.mxu0 %v6360
    %6686 = vmatprep.subr.bf16.mxu0 %v6354
    %6687 = vmatpush2.bf16.msra.mxu0 %v6353
    %6688 = vmatprep.subr.bf16.mxu0 %v6347
    %6689 = vmatpush2.bf16.msra.mxu0 %v6346
    %6690 = vmatprep.subr.bf16.mxu0 %v6340
    %6691 = vmatpush2.bf16.msra.mxu0 %v6339
    %6692 = vmatprep.mubr.bf16.mxu0 %v5173
    %6693 = vmatmul.mubr.bf16.gmra.mxu0 %v5172
    %v6694 = vpop.f32.mrf.mxu0
    %v6695 = vadd.f32 %v6654, %v6694
    %v6696 = vpop.f32.mrf.mxu0
    %v6697 = vadd.f32 %v6656, %v6696
    %v6698 = vpop.f32.mrf.mxu0
    %v6699 = vpop.f32.mrf.mxu0
    %6700 = vdwg.mxu0
    %6701 = vmatprep.subr.bf16.mxu0 %v6223
    %6702 = vmatpush1.bf16.msra.mxu0 %v6222
    %6703 = vmatprep.subr.bf16.mxu0 %v6216
    %6704 = vmatpush1.bf16.msra.mxu0 %v6215
    %6705 = vmatprep.subr.bf16.mxu0 %v6209
    %6706 = vmatpush1.bf16.msra.mxu0 %v6208
    %6707 = vmatprep.subr.bf16.mxu0 %v6202
    %6708 = vmatpush1.bf16.msra.mxu0 %v6201
    %6709 = vmatprep.subr.bf16.mxu0 %v6195
    %6710 = vmatpush1.bf16.msra.mxu0 %v6194
    %6711 = vmatprep.subr.bf16.mxu0 %v6188
    %6712 = vmatpush1.bf16.msra.mxu0 %v6187
    %6713 = vmatprep.subr.bf16.mxu0 %v6181
    %6714 = vmatpush1.bf16.msra.mxu0 %v6180
    %6715 = vmatprep.subr.bf16.mxu0 %v6174
    %6716 = vmatpush1.bf16.msra.mxu0 %v6173
    %6717 = vmatprep.subr.bf16.mxu0 %v6279
    %6718 = vmatpush2.bf16.msra.mxu0 %v6278
    %6719 = vmatprep.subr.bf16.mxu0 %v6272
    %6720 = vmatpush2.bf16.msra.mxu0 %v6271
    %6721 = vmatprep.subr.bf16.mxu0 %v6265
    %6722 = vmatpush2.bf16.msra.mxu0 %v6264
    %6723 = vmatprep.subr.bf16.mxu0 %v6258
    %6724 = vmatpush2.bf16.msra.mxu0 %v6257
    %6725 = vmatprep.subr.bf16.mxu0 %v6251
    %6726 = vmatpush2.bf16.msra.mxu0 %v6250
    %6727 = vmatprep.subr.bf16.mxu0 %v6244
    %6728 = vmatpush2.bf16.msra.mxu0 %v6243
    %6729 = vmatprep.subr.bf16.mxu0 %v6237
    %6730 = vmatpush2.bf16.msra.mxu0 %v6236
    %6731 = vmatprep.subr.bf16.mxu0 %v6230
    %6732 = vmatpush2.bf16.msra.mxu0 %v6229
    %6733 = vmatprep.mubr.bf16.mxu0 %v5171
    %6734 = vmatmul.mubr.bf16.gmra.mxu0 %v5170
    %v6735 = vpop.f32.mrf.mxu0
    %v6736 = vadd.f32 %v5443, %v6735
    %v6737 = vpop.f32.mrf.mxu0
    %v6738 = vadd.f32 %v5447, %v6737
    %v6739 = vpop.f32.mrf.mxu0
    %v6740 = vpop.f32.mrf.mxu0
    %6741 = vdwg.mxu0
    %6742 = vmatprep.subr.bf16.mxu0 %v6335
    %6743 = vmatpush1.bf16.msra.mxu0 %v6334
    %6744 = vmatprep.subr.bf16.mxu0 %v6328
    %6745 = vmatpush1.bf16.msra.mxu0 %v6327
    %6746 = vmatprep.subr.bf16.mxu0 %v6321
    %6747 = vmatpush1.bf16.msra.mxu0 %v6320
    %6748 = vmatprep.subr.bf16.mxu0 %v6314
    %6749 = vmatpush1.bf16.msra.mxu0 %v6313
    %6750 = vmatprep.subr.bf16.mxu0 %v6307
    %6751 = vmatpush1.bf16.msra.mxu0 %v6306
    %6752 = vmatprep.subr.bf16.mxu0 %v6300
    %6753 = vmatpush1.bf16.msra.mxu0 %v6299
    %6754 = vmatprep.subr.bf16.mxu0 %v6293
    %6755 = vmatpush1.bf16.msra.mxu0 %v6292
    %6756 = vmatprep.subr.bf16.mxu0 %v6286
    %6757 = vmatpush1.bf16.msra.mxu0 %v6285
    %6758 = vmatprep.subr.bf16.mxu0 %v6391
    %6759 = vmatpush2.bf16.msra.mxu0 %v6390
    %6760 = vmatprep.subr.bf16.mxu0 %v6384
    %6761 = vmatpush2.bf16.msra.mxu0 %v6383
    %6762 = vmatprep.subr.bf16.mxu0 %v6377
    %6763 = vmatpush2.bf16.msra.mxu0 %v6376
    %6764 = vmatprep.subr.bf16.mxu0 %v6370
    %6765 = vmatpush2.bf16.msra.mxu0 %v6369
    %6766 = vmatprep.subr.bf16.mxu0 %v6363
    %6767 = vmatpush2.bf16.msra.mxu0 %v6362
    %6768 = vmatprep.subr.bf16.mxu0 %v6356
    %6769 = vmatpush2.bf16.msra.mxu0 %v6355
    %6770 = vmatprep.subr.bf16.mxu0 %v6349
    %6771 = vmatpush2.bf16.msra.mxu0 %v6348
    %6772 = vmatprep.subr.bf16.mxu0 %v6342
    %6773 = vmatpush2.bf16.msra.mxu0 %v6341
    %6774 = vmatprep.mubr.bf16.mxu0 %v5173
    %6775 = vmatmul.mubr.bf16.gmra.mxu0 %v5172
    %v6776 = vpop.f32.mrf.mxu0
    %v6777 = vadd.f32 %v6736, %v6776
    %v6778 = vpop.f32.mrf.mxu0
    %v6779 = vadd.f32 %v6738, %v6778
    %v6780 = vpop.f32.mrf.mxu0
    %v6781 = vpop.f32.mrf.mxu0
    %6782 = vdwg.mxu0
    %6783 = vmatprep.subr.bf16.mxu0 %v6225
    %6784 = vmatpush1.bf16.msra.mxu0 %v6224
    %6785 = vmatprep.subr.bf16.mxu0 %v6218
    %6786 = vmatpush1.bf16.msra.mxu0 %v6217
    %6787 = vmatprep.subr.bf16.mxu0 %v6211
    %6788 = vmatpush1.bf16.msra.mxu0 %v6210
    %6789 = vmatprep.subr.bf16.mxu0 %v6204
    %6790 = vmatpush1.bf16.msra.mxu0 %v6203
    %6791 = vmatprep.subr.bf16.mxu0 %v6197
    %6792 = vmatpush1.bf16.msra.mxu0 %v6196
    %6793 = vmatprep.subr.bf16.mxu0 %v6190
    %6794 = vmatpush1.bf16.msra.mxu0 %v6189
    %6795 = vmatprep.subr.bf16.mxu0 %v6183
    %6796 = vmatpush1.bf16.msra.mxu0 %v6182
    %6797 = vmatprep.subr.bf16.mxu0 %v6176
    %6798 = vmatpush1.bf16.msra.mxu0 %v6175
    %6799 = vmatprep.subr.bf16.mxu0 %v6281
    %6800 = vmatpush2.bf16.msra.mxu0 %v6280
    %6801 = vmatprep.subr.bf16.mxu0 %v6274
    %6802 = vmatpush2.bf16.msra.mxu0 %v6273
    %6803 = vmatprep.subr.bf16.mxu0 %v6267
    %6804 = vmatpush2.bf16.msra.mxu0 %v6266
    %6805 = vmatprep.subr.bf16.mxu0 %v6260
    %6806 = vmatpush2.bf16.msra.mxu0 %v6259
    %6807 = vmatprep.subr.bf16.mxu0 %v6253
    %6808 = vmatpush2.bf16.msra.mxu0 %v6252
    %6809 = vmatprep.subr.bf16.mxu0 %v6246
    %6810 = vmatpush2.bf16.msra.mxu0 %v6245
    %6811 = vmatprep.subr.bf16.mxu0 %v6239
    %6812 = vmatpush2.bf16.msra.mxu0 %v6238
    %6813 = vmatprep.subr.bf16.mxu0 %v6232
    %6814 = vmatpush2.bf16.msra.mxu0 %v6231
    %6815 = vmatprep.mubr.bf16.mxu0 %v5171
    %6816 = vmatmul.mubr.bf16.gmra.mxu0 %v5170
    %v6817 = vpop.f32.mrf.mxu0
    %v6818 = vadd.f32 %v5451, %v6817
    %v6819 = vpop.f32.mrf.mxu0
    %v6820 = vadd.f32 %v5455, %v6819
    %v6821 = vpop.f32.mrf.mxu0
    %v6822 = vpop.f32.mrf.mxu0
    %6823 = vdwg.mxu0
    %6824 = vmatprep.subr.bf16.mxu0 %v6337
    %6825 = vmatpush1.bf16.msra.mxu0 %v6336
    %6826 = vmatprep.subr.bf16.mxu0 %v6330
    %6827 = vmatpush1.bf16.msra.mxu0 %v6329
    %6828 = vmatprep.subr.bf16.mxu0 %v6323
    %6829 = vmatpush1.bf16.msra.mxu0 %v6322
    %6830 = vmatprep.subr.bf16.mxu0 %v6316
    %6831 = vmatpush1.bf16.msra.mxu0 %v6315
    %6832 = vmatprep.subr.bf16.mxu0 %v6309
    %6833 = vmatpush1.bf16.msra.mxu0 %v6308
    %6834 = vmatprep.subr.bf16.mxu0 %v6302
    %6835 = vmatpush1.bf16.msra.mxu0 %v6301
    %6836 = vmatprep.subr.bf16.mxu0 %v6295
    %6837 = vmatpush1.bf16.msra.mxu0 %v6294
    %6838 = vmatprep.subr.bf16.mxu0 %v6288
    %6839 = vmatpush1.bf16.msra.mxu0 %v6287
    %6840 = vmatprep.subr.bf16.mxu0 %v6393
    %6841 = vmatpush2.bf16.msra.mxu0 %v6392
    %6842 = vmatprep.subr.bf16.mxu0 %v6386
    %6843 = vmatpush2.bf16.msra.mxu0 %v6385
    %6844 = vmatprep.subr.bf16.mxu0 %v6379
    %6845 = vmatpush2.bf16.msra.mxu0 %v6378
    %6846 = vmatprep.subr.bf16.mxu0 %v6372
    %6847 = vmatpush2.bf16.msra.mxu0 %v6371
    %6848 = vmatprep.subr.bf16.mxu0 %v6365
    %6849 = vmatpush2.bf16.msra.mxu0 %v6364
    %6850 = vmatprep.subr.bf16.mxu0 %v6358
    %6851 = vmatpush2.bf16.msra.mxu0 %v6357
    %6852 = vmatprep.subr.bf16.mxu0 %v6351
    %6853 = vmatpush2.bf16.msra.mxu0 %v6350
    %6854 = vmatprep.subr.bf16.mxu0 %v6344
    %6855 = vmatpush2.bf16.msra.mxu0 %v6343
    %6856 = vmatprep.mubr.bf16.mxu0 %v5173
    %6857 = vmatmul.mubr.bf16.gmra.mxu0 %v5172
    %v6858 = vpop.f32.mrf.mxu0
    %v6859 = vadd.f32 %v6818, %v6858
    %v6860 = vpop.f32.mrf.mxu0
    %v6861 = vadd.f32 %v6820, %v6860
    %v6862 = vpop.f32.mrf.mxu0
    %v6863 = vpop.f32.mrf.mxu0
    %6864 = vdwg.mxu0
    %6865 = vmatprep.subr.bf16.mxu0 0
    %6866 = vmatpush1.bf16.msra.mxu0 %v6226
    %6867 = vmatprep.subr.bf16.mxu0 0
    %6868 = vmatpush1.bf16.msra.mxu0 %v6219
    %6869 = vmatprep.subr.bf16.mxu0 0
    %6870 = vmatpush1.bf16.msra.mxu0 %v6212
    %6871 = vmatprep.subr.bf16.mxu0 0
    %6872 = vmatpush1.bf16.msra.mxu0 %v6205
    %6873 = vmatprep.subr.bf16.mxu0 0
    %6874 = vmatpush1.bf16.msra.mxu0 %v6198
    %6875 = vmatprep.subr.bf16.mxu0 0
    %6876 = vmatpush1.bf16.msra.mxu0 %v6191
    %6877 = vmatprep.subr.bf16.mxu0 0
    %6878 = vmatpush1.bf16.msra.mxu0 %v6184
    %6879 = vmatprep.subr.bf16.mxu0 0
    %6880 = vmatpush1.bf16.msra.mxu0 %v6177
    %6881 = vmatprep.subr.bf16.mxu0 0
    %6882 = vmatpush2.bf16.msra.mxu0 %v6282
    %6883 = vmatprep.subr.bf16.mxu0 0
    %6884 = vmatpush2.bf16.msra.mxu0 %v6275
    %6885 = vmatprep.subr.bf16.mxu0 0
    %6886 = vmatpush2.bf16.msra.mxu0 %v6268
    %6887 = vmatprep.subr.bf16.mxu0 0
    %6888 = vmatpush2.bf16.msra.mxu0 %v6261
    %6889 = vmatprep.subr.bf16.mxu0 0
    %6890 = vmatpush2.bf16.msra.mxu0 %v6254
    %6891 = vmatprep.subr.bf16.mxu0 0
    %6892 = vmatpush2.bf16.msra.mxu0 %v6247
    %6893 = vmatprep.subr.bf16.mxu0 0
    %6894 = vmatpush2.bf16.msra.mxu0 %v6240
    %6895 = vmatprep.subr.bf16.mxu0 0
    %6896 = vmatpush2.bf16.msra.mxu0 %v6233
    %6897 = vmatprep.mubr.bf16.mxu0 %v5171
    %6898 = vmatmul.mubr.bf16.gmra.mxu0 %v5170
    %v6899 = vpop.f32.mrf.mxu0
    %v6900 = vadd.f32 %v5459, %v6899
    %v6901 = vpop.f32.mrf.mxu0
    %v6902 = vpop.f32.mrf.mxu0
    %v6903 = vpop.f32.mrf.mxu0
    %6904 = vdwg.mxu0
    %6905 = vmatprep.subr.bf16.mxu0 0
    %6906 = vmatpush1.bf16.msra.mxu0 %v6338
    %6907 = vmatprep.subr.bf16.mxu0 0
    %6908 = vmatpush1.bf16.msra.mxu0 %v6331
    %6909 = vmatprep.subr.bf16.mxu0 0
    %6910 = vmatpush1.bf16.msra.mxu0 %v6324
    %6911 = vmatprep.subr.bf16.mxu0 0
    %6912 = vmatpush1.bf16.msra.mxu0 %v6317
    %6913 = vmatprep.subr.bf16.mxu0 0
    %6914 = vmatpush1.bf16.msra.mxu0 %v6310
    %6915 = vmatprep.subr.bf16.mxu0 0
    %6916 = vmatpush1.bf16.msra.mxu0 %v6303
    %6917 = vmatprep.subr.bf16.mxu0 0
    %6918 = vmatpush1.bf16.msra.mxu0 %v6296
    %6919 = vmatprep.subr.bf16.mxu0 0
    %6920 = vmatpush1.bf16.msra.mxu0 %v6289
    %6921 = vmatprep.subr.bf16.mxu0 0
    %6922 = vmatpush2.bf16.msra.mxu0 %v6394
    %6923 = vmatprep.subr.bf16.mxu0 0
    %6924 = vmatpush2.bf16.msra.mxu0 %v6387
    %6925 = vmatprep.subr.bf16.mxu0 0
    %6926 = vmatpush2.bf16.msra.mxu0 %v6380
    %6927 = vmatprep.subr.bf16.mxu0 0
    %6928 = vmatpush2.bf16.msra.mxu0 %v6373
    %6929 = vmatprep.subr.bf16.mxu0 0
    %6930 = vmatpush2.bf16.msra.mxu0 %v6366
    %6931 = vmatprep.subr.bf16.mxu0 0
    %6932 = vmatpush2.bf16.msra.mxu0 %v6359
    %6933 = vmatprep.subr.bf16.mxu0 0
    %6934 = vmatpush2.bf16.msra.mxu0 %v6352
    %6935 = vmatprep.subr.bf16.mxu0 0
    %6936 = vmatpush2.bf16.msra.mxu0 %v6345
    %6937 = vmatprep.mubr.bf16.mxu0 %v5173
    %6938 = vmatmul.mubr.bf16.gmra.mxu0 %v5172
    %v6939 = vpop.f32.mrf.mxu0
    %v6940 = vadd.f32 %v6900, %v6939
    %v6941 = vpop.f32.mrf.mxu0
    %v6942 = vpop.f32.mrf.mxu0
    %v6943 = vpop.f32.mrf.mxu0
    %6944 = vdwg.mxu0
    %v6945 = vxor.u32 %v6695, 2147483648
    %v6946 = vxor.u32 %v6697, 2147483648
    %v6947 = vxor.u32 %v6777, 2147483648
    %v6948 = vxor.u32 %v6779, 2147483648
    %v6949 = vxor.u32 %v6859, 2147483648
    %v6950 = vxor.u32 %v6861, 2147483648
    %v6951 = vxor.u32 %v6940, 2147483648
    %v6952 = vmul.f32 %v6945, 1.442695
    %v6953 = vpow.pop %v6952
    %v6954 = vmul.f32 %v6946, 1.442695
    %v6955 = vpow.pop %v6954
    %v6956 = vmul.f32 %v6947, 1.442695
    %v6957 = vpow.pop %v6956
    %v6958 = vmul.f32 %v6948, 1.442695
    %v6959 = vpow.pop %v6958
    %v6960 = vmul.f32 %v6949, 1.442695
    %v6961 = vpow.pop %v6960
    %v6962 = vmul.f32 %v6950, 1.442695
    %v6963 = vpow.pop %v6962
    %v6964 = vmul.f32 %v6951, 1.442695
    %v6965 = vpow.pop %v6964
    %v6966 = vadd.f32 %v6953, 1.0
    %v6967 = vadd.f32 %v6955, 1.0
    %v6968 = vadd.f32 %v6957, 1.0
    %v6969 = vadd.f32 %v6959, 1.0
    %v6970 = vadd.f32 %v6961, 1.0
    %v6971 = vadd.f32 %v6963, 1.0
    %v6972 = vadd.f32 %v6965, 1.0
    %v6973 = vrcp.pop %v6966
    %v6974 = vmul.f32 1.0, %v6973
    %v6975 = vrcp.pop %v6967
    %v6976 = vmul.f32 1.0, %v6975
    %v6977 = vrcp.pop %v6968
    %v6978 = vmul.f32 1.0, %v6977
    %v6979 = vrcp.pop %v6969
    %v6980 = vmul.f32 1.0, %v6979
    %v6981 = vrcp.pop %v6970
    %v6982 = vmul.f32 1.0, %v6981
    %v6983 = vrcp.pop %v6971
    %v6984 = vmul.f32 1.0, %v6983
    %v6985 = vrcp.pop %v6972
    %v6986 = vmul.f32 1.0, %v6985
    %v6987 = vpack.c.bf16 %v6974, %v6974
    %v6988 = vpack.c.bf16 %v6976, %v6976
    %v6989 = vpack.c.bf16 %v6978, %v6978
    %v6990 = vpack.c.bf16 %v6980, %v6980
    %v6991 = vpack.c.bf16 %v6982, %v6982
    %v6992 = vpack.c.bf16 %v6984, %v6984
    %v6993 = vpack.c.bf16 %v6986, %v6986
    %v7001 = vunpack.c.l.b16 %v6987
    %v7002 = vunpack.c.l.b16 %v6988
    %v7003 = vunpack.c.l.b16 %v6989
    %v7004 = vunpack.c.l.b16 %v6990
    %v7005 = vunpack.c.l.b16 %v6991
    %v7006 = vunpack.c.l.b16 %v6992
    %v7007 = vunpack.c.l.b16 %v6993
    %v7008 = vpack.c.b16 %v7002, %v7001
    %v7009 = vpack.c.b16 %v7004, %v7003
    %v7010 = vpack.c.b16 %v7006, %v7005
    %v7011 = vpack.c.b16 %v7007, %v7007
    %7016 = vst [vmem:[%s11] sm:$0xff] %v7008
    %7017 = vst [vmem:[%s11 + $0x8] sm:$0xff] %v7009
    %7018 = vst [vmem:[%s11 + $0x10] sm:$0xff] %v7010
    %7019 = vst [vmem:[%s11 + $0x18] sm:$0xf] %v7011
    %7020 = vst [vmem:[%s12] sm:$0xff] %v3550
    %7021 = vst [vmem:[%s12 + $0x8] sm:$0xff] %v3552
    // Predicated region
    $region74: #{vae_forward.1} parent=1 // pred_check
      _
    $region75: #{vae_forward.1} parent=1 // pred_check_branch
      %7023 = sbr.rel (0) target = $region77
    $region76: #{vae_forward.1} parent=1 // pred_region
      _
    $region77: #{vae_forward.1} parent=1 // pred_fallthru
      _
    // Predicated region
    $region78: #{vae_forward.1} parent=1 // pred_check
      _
    $region79: #{vae_forward.1} parent=1 // pred_check_branch
      %7025 = sbr.rel (0) target = $region81
    $region80: #{vae_forward.1} parent=1 // pred_region
      _
    $region81: #{vae_forward.1} parent=1 // pred_fallthru
      _
    // Predicated region
    $region82: #{vae_forward.1} parent=1 // pred_check
      _
    $region83: #{vae_forward.1} parent=1 // pred_check_branch
      %7027 = sbr.rel (0) target = $region85
    $region84: #{vae_forward.1} parent=1 // pred_region
      _
    $region85: #{vae_forward.1} parent=1 // pred_fallthru
      _
    // Predicated region
    $region86: #{vae_forward.1} parent=1 // pred_check
      _
    $region87: #{vae_forward.1} parent=1 // pred_check_branch
      %7029 = sbr.rel (0) target = $region89
    $region88: #{vae_forward.1} parent=1 // pred_region
      _
    $region89: #{vae_forward.1} parent=1 // pred_fallthru
      _
    %7030 = vsyncpa [#allocation3], 1
    %7031 = vsyncpa [#allocation5], 1
    %7032 = vsyncpa [#allocation8], 1
    %7033 = vsyncpa [#allocation11], 1

</llo_original>
